<compile_context>
chip_gen: v7x
topology: tpu7x:2x2x1
jax: 0.10.0
libtpu: 0.0.40
codegen_flags: <defaults>
</compile_context>

<pallas_src>
import functools

import jax
import jax.numpy as jnp
from jax.experimental import pallas as pl
from jax.experimental.pallas import tpu as pltpu

EPS = 1e-5
_LPAD = 8  # left-halo width of the padded-activation scratch (sublane aligned)


def _ceil_to(v, m):
    return (v + m - 1) // m * m


def _silu(a):
    return a * jax.nn.sigmoid(a)


def _fold_bn(gamma, beta, mean, var):
    scale = gamma * jax.lax.rsqrt(var + EPS)
    return scale, beta - mean * scale


# ----------------------------------------------------------------------------
# In-kernel helpers
# ----------------------------------------------------------------------------
def _zero_halo(pad_ref, S, C):
    """Zero the halo ring of the padded-activation scratch.

    Done once per grid step (the interior is fully overwritten per image, and
    the batch axis is "parallel", so we never rely on program_id == 0)."""
    Wp = pad_ref.shape[1]
    zrow = jnp.zeros((1, Wp, C), jnp.float32)
    pad_ref[0:1, :, :] = zrow                                   # top halo row
    pad_ref[S + 1:S + 2, :, :] = zrow                           # bottom halo row
    pad_ref[1:S + 1, 0:_LPAD, :] = jnp.zeros((S, _LPAD, C), jnp.float32)
    pad_ref[1:S + 1, _LPAD + S:Wp, :] = jnp.zeros(
        (S, Wp - _LPAD - S, C), jnp.float32)


def _conv_strip(pad_ref, col_ref, w_ref, r0, TS, S, C):
    """3x3 same-padded conv for output rows [r0, r0+TS) as ONE im2col matmul.

    pad_ref: (S+2, Wp, C) f32; image interior at rows 1..S, cols LPAD..LPAD+S-1.
    col_ref: (TS*S, 9*C) bf16 im2col scratch.
    w_ref:   (9*C, Cp) bf16, row = (di*3 + dj)*C + c_in, out-channels padded.
    Returns (TS*S, Cp) f32 (MXU, f32 accumulate, lane-dense result).
    """
    for di in range(3):
        for dj in range(3):
            t = di * 3 + dj
            win = pad_ref[r0 + di:r0 + di + TS,
                          _LPAD - 1 + dj:_LPAD - 1 + dj + S, :]   # (TS, S, C)
            col_ref[:, t * C:(t + 1) * C] = (
                win.reshape(TS * S, C).astype(col_ref.dtype))
    return jnp.dot(col_ref[...], w_ref[...], preferred_element_type=jnp.float32)


# ----------------------------------------------------------------------------
# Kernels
# ----------------------------------------------------------------------------
def _stage1_kernel(x_ref, s1_ref, t1_ref, w_ref, pos_ref,
                   h_ref, sum_ref, ssq_ref, pad_ref, col_ref,
                   *, S, TS, C, Bt):
    # x_ref: (Bt, C, S*S) f32 (lane-dense).  h_ref: (Bt, C, S*S) bf16 out.
    _zero_halo(pad_ref, S, C)
    scale = s1_ref[...]                                     # (1, C) folded BN1
    shift = t1_ref[...]
    psum = jnp.zeros((1, C), jnp.float32)
    pssq = jnp.zeros((1, C), jnp.float32)
    for b in range(Bt):
        x_chw = x_ref[b]                                    # (C, S*S) lane-dense load
        a = _silu(x_chw.T.reshape(S, S, C) * scale + shift)  # BN1 (folded) + SiLU
        pad_ref[1:S + 1, _LPAD:_LPAD + S, :] = a            # sublane-aligned write
        for r0 in range(0, S, TS):
            y = _conv_strip(pad_ref, col_ref, w_ref, r0, TS, S, C)   # (TS*S, Cp)
            h = y[:, :C] + pos_ref[r0 * S:(r0 + TS) * S, :]          # + pos. encoding
            # BN2 partial stats from the f32 value, BEFORE the bf16 cast.
            psum = psum + jnp.sum(h, axis=0, keepdims=True)
            pssq = pssq + jnp.sum(h * h, axis=0, keepdims=True)
            h_ref[b, :, r0 * S:(r0 + TS) * S] = h.T.astype(h_ref.dtype)
    sum_ref[0] = psum
    ssq_ref[0] = pssq


def _stage2_kernel(h_ref, x_ref, s2_ref, t2_ref, w_ref,
                   o_ref, pad_ref, col_ref, *, S, TS, C, Bt):
    # h_ref: (Bt, C, S*S) bf16; x_ref/o_ref: (Bt, C, S*S) f32 (o aliases x's HBM).
    _zero_halo(pad_ref, S, C)
    scale = s2_ref[...]                                     # (1, C) folded BN2
    shift = t2_ref[...]
    for b in range(Bt):
        hb = h_ref[b].astype(jnp.float32)                   # (C, S*S)
        a = _silu(hb.T.reshape(S, S, C) * scale + shift)    # BN2 (folded) + SiLU
        pad_ref[1:S + 1, _LPAD:_LPAD + S, :] = a
        for r0 in range(0, S, TS):
            y = _conv_strip(pad_ref, col_ref, w_ref, r0, TS, S, C)   # (TS*S, Cp)
            o_ref[b, :, r0 * S:(r0 + TS) * S] = (
                y[:, :C].T + x_ref[b, :, r0 * S:(r0 + TS) * S])      # residual skip


# ----------------------------------------------------------------------------
# Tiling / VMEM plan (generation aware)
# ----------------------------------------------------------------------------
def _tile_plan(N, C, S, Cp):
    """Pick batch tile Bt, conv row-strip height TS and the VMEM budget.

    v5e/v6e report 128 MiB VMEM -> 64 MiB budget (raised above the old 32 MiB
    cap); v7x reports 64 MiB -> 32 MiB budget and the strip tiling bounds the
    im2col scratch independently of S."""
    P2 = S * S
    try:
        cap = getattr(pltpu.get_tpu_info(), "vmem_capacity_bytes", None) or (128 << 20)
    except Exception:
        cap = 128 << 20
    budget = cap // 2

    col_budget = min(budget // 6, 8 << 20)
    TS = 1
    for d in range(1, S + 1):
        if S % d == 0 and d * S * 9 * C * 2 <= col_budget:
            TS = d

    Wp = _ceil_to(_LPAD + S + 1, 8)

    def footprint(bt):
        blocks = bt * C * P2 * (4 + 2 + 4)       # x(f32)+h1(bf16)+out(f32) per step
        consts = 2 * (9 * C * Cp * 2 + P2 * C * 4 + 8 * C * 4)
        scratch = (S + 2) * Wp * C * 4 + TS * S * 9 * C * 2
        return 2 * blocks + consts + scratch     # image blocks double-buffered

    Bt = 1
    for d in range(1, N + 1):
        if N % d:
            continue
        if N >= 2 and N // d < 2:                # keep >= 2 grid steps (2 TCs on v7x)
            continue
        if footprint(d) <= budget:
            Bt = d
    return Bt, TS, int(budget)


# ----------------------------------------------------------------------------
# Wrapper
# ----------------------------------------------------------------------------
@jax.jit
def residual_block(x_nchw, params):
    """x_nchw: (N, C, H, W) float32. Returns (N, C, H, W)."""
    g1, b1, w1, pw, pb, g2, b2, w2 = params
    N, C, H, W = x_nchw.shape
    assert H == W, "PositionalEncodingLayer (as written) requires H == W"
    S, P2 = H, H * W
    Cp = _ceil_to(C, 128)                        # lane-dense MXU output width
    Bt, TS, vmem_budget = _tile_plan(N, C, S, Cp)
    nb = N // Bt

    # NCHW with H,W flattened: free reshape, last dim (S*S) lane-dense.
    xr = x_nchw.reshape(N, C, P2).astype(jnp.float32)

    # ---------------- cheap XLA-side prep ----------------
    # BN1 batch statistics in a single fused pass (biased variance, clamped).
    cnt1 = jnp.float32(N * P2)
    s1 = jnp.sum(xr, axis=(0, 2))
    q1 = jnp.sum(xr * xr, axis=(0, 2))
    mean1 = (s1 / cnt1).reshape(1, C)
    var1 = jnp.maximum(q1 / cnt1 - jnp.square(s1 / cnt1), 0.0).reshape(1, C)
    scale1, shift1 = _fold_bn(g1.reshape(1, C), b1.reshape(1, C), mean1, var1)

    # Positional encoding table: Linear(2, C) over the (-1, 1) coord grid.
    lin = jnp.linspace(-1.0, 1.0, S, dtype=jnp.float32)
    pos = (lin[:, None, None] * pw[0].reshape(1, 1, C)
           + lin[None, :, None] * pw[1].reshape(1, 1, C)
           + pb.reshape(1, 1, C)).reshape(P2, C)

    # Conv weights -> im2col layout, out-channels zero-padded to Cp, bf16.
    w1k = jnp.pad(w1.reshape(9 * C, C), ((0, 0), (0, Cp - C))).astype(jnp.bfloat16)
    w2k = jnp.pad(w2.reshape(9 * C, C), ((0, 0), (0, Cp - C))).astype(jnp.bfloat16)

    # ---------------- pallas calls (grid over batch tiles) ----------------
    Wp = _ceil_to(_LPAD + S + 1, 8)
    blk = pl.BlockSpec((Bt, C, P2), lambda n: (n, 0, 0))
    vec = pl.BlockSpec((1, C), lambda n: (0, 0))
    wspec = pl.BlockSpec((9 * C, Cp), lambda n: (0, 0))
    pos_spec = pl.BlockSpec((P2, C), lambda n: (0, 0))
    stat_spec = pl.BlockSpec((1, 1, C), lambda n: (n, 0, 0))
    scratch = [pltpu.VMEM((S + 2, Wp, C), jnp.float32),
               pltpu.VMEM((TS * S, 9 * C), jnp.bfloat16)]
    cparams = pltpu.CompilerParams(
        dimension_semantics=("parallel",),
        vmem_limit_bytes=vmem_budget)

    kern1 = functools.partial(_stage1_kernel, S=S, TS=TS, C=C, Bt=Bt)
    h1, psum, pssq = pl.pallas_call(
        kern1,
        grid=(nb,),
        in_specs=[blk, vec, vec, wspec, pos_spec],
        out_specs=(blk, stat_spec, stat_spec),
        out_shape=(jax.ShapeDtypeStruct((N, C, P2), jnp.bfloat16),   # bf16 inter-stage
                   jax.ShapeDtypeStruct((nb, 1, C), jnp.float32),
                   jax.ShapeDtypeStruct((nb, 1, C), jnp.float32)),
        scratch_shapes=scratch,
        compiler_params=cparams,
    )(xr, scale1, shift1, w1k, pos)

    # Finish BN2 batch statistics from the f32 per-block partial sums.
    cnt2 = jnp.float32(N * P2)
    mean2 = jnp.sum(psum, axis=0) / cnt2                     # (1, C)
    var2 = jnp.maximum(jnp.sum(pssq, axis=0) / cnt2 - jnp.square(mean2), 0.0)
    scale2, shift2 = _fold_bn(g2.reshape(1, C), b2.reshape(1, C), mean2, var2)

    kern2 = functools.partial(_stage2_kernel, S=S, TS=TS, C=C, Bt=Bt)
    out = pl.pallas_call(
        kern2,
        grid=(nb,),
        in_specs=[blk, blk, vec, vec, wspec],
        out_specs=blk,
        out_shape=jax.ShapeDtypeStruct((N, C, P2), jnp.float32),
        scratch_shapes=scratch,
        input_output_aliases={1: 0},            # output reuses x's HBM buffer
        compiler_params=cparams,
    )(h1, xr, scale2, shift2, w2k)

    return out.reshape(N, C, H, W)


# ----------------------------------------------------------------------------
# Pure-JAX reference (mirrors the PyTorch forward)
# ----------------------------------------------------------------------------
def residual_block_reference(x_nchw, params, conv_dtype=jnp.float32,
                             h_dtype=jnp.float32):
    """conv_dtype=bf16 / h_dtype=bf16 mirrors the kernel's bf16 MXU operands
    and bf16 inter-stage store; float32 is the exact PyTorch-semantics path."""
    g1, b1, w1, pw, pb, g2, b2, w2 = params
    x = jnp.transpose(x_nchw, (0, 2, 3, 1)).astype(jnp.float32)
    S, C = x.shape[1], x.shape[3]

    def bn_silu(t, g, b):
        m = t.mean(axis=(0, 1, 2), keepdims=True)
        v = ((t - m) ** 2).mean(axis=(0, 1, 2), keepdims=True)
        a = (t - m) / jnp.sqrt(v + EPS) * g.reshape(1, 1, 1, C) + b.reshape(1, 1, 1, C)
        return a * jax.nn.sigmoid(a)

    def conv(t, w):
        return jax.lax.conv_general_dilated(
            t.astype(conv_dtype), w.astype(conv_dtype),
            window_strides=(1, 1), padding="SAME",
            dimension_numbers=("NHWC", "HWIO", "NHWC"),
            preferred_element_type=jnp.float32)

    lin = jnp.linspace(-1.0, 1.0, S, dtype=jnp.float32)
    pos = (lin[:, None, None] * pw[0].reshape(1, 1, C)
           + lin[None, :, None] * pw[1].reshape(1, 1, C)
           + pb.reshape(1, 1, C))

    h = conv(bn_silu(x, g1, b1), w1) + pos[None]
    h = h.astype(h_dtype).astype(jnp.float32)        # mirror bf16 inter-stage store
    y = conv(bn_silu(h, g2, b2), w2)
    return jnp.transpose(y + x, (0, 3, 1, 2))


if __name__ == "__main__":
    key = jax.random.PRNGKey(0)
    ks = jax.random.split(key, 9)
    N, C, S = 2, 4, 16

    x = jax.random.normal(ks[0], (N, C, S, S), jnp.float32)
    g1 = 1.0 + 0.1 * jax.random.normal(ks[1], (1, C), jnp.float32)
    b1 = 0.1 * jax.random.normal(ks[2], (1, C), jnp.float32)
    w1 = 0.2 * jax.random.normal(ks[3], (3, 3, C, C), jnp.float32)   # HWIO conv weight
    pw = 0.5 * jax.random.normal(ks[4], (2, C), jnp.float32)         # Linear(2, C).weight^T
    pb = 0.1 * jax.random.normal(ks[5], (1, C), jnp.float32)         # Linear(2, C).bias
    g2 = 1.0 + 0.1 * jax.random.normal(ks[6], (1, C), jnp.float32)
    b2 = 0.1 * jax.random.normal(ks[7], (1, C), jnp.float32)
    w2 = 0.2 * jax.random.normal(ks[8], (3, 3, C, C), jnp.float32)
    params = (g1, b1, w1, pw, pb, g2, b2, w2)

    out = jax.block_until_ready(residual_block(x, params))
    assert out.shape == (N, C, S, S)

    # Matched-precision check (bf16 conv operands + bf16 inter-stage h).
    ref_bf16 = residual_block_reference(x, params, conv_dtype=jnp.bfloat16,
                                        h_dtype=jnp.bfloat16)
    err_bf16 = float(jnp.max(jnp.abs(out - ref_bf16)))
    assert jnp.allclose(out, ref_bf16, atol=5e-2, rtol=5e-2), err_bf16

    # Loose sanity check against the exact f32 PyTorch-semantics forward.
    ref_f32 = residual_block_reference(x, params, conv_dtype=jnp.float32,
                                       h_dtype=jnp.float32)
    err_f32 = float(jnp.max(jnp.abs(out - ref_f32)))
    assert jnp.allclose(out, ref_f32, atol=1e-1, rtol=1e-1), err_f32

    print("KERNEL_OK")
</pallas_src>

<mosaic_0001>
module attributes {stable_mosaic.version = 11 : i64} {
  func.func @_stage1_kernel(%arg0: i32, %arg1: memref<1x4x256xf32, #tpu.memory_space<vmem>>, %arg2: memref<1x4xf32, #tpu.memory_space<vmem>>, %arg3: memref<1x4xf32, #tpu.memory_space<vmem>>, %arg4: memref<36x128xbf16, #tpu.memory_space<vmem>>, %arg5: memref<256x4xf32, #tpu.memory_space<vmem>>, %arg6: memref<1x4x256xbf16, #tpu.memory_space<vmem>>, %arg7: memref<1x1x4xf32, #tpu.memory_space<vmem>>, %arg8: memref<1x1x4xf32, #tpu.memory_space<vmem>>, %arg9: memref<18x32x4xf32, #tpu.memory_space<vmem>>, %arg10: memref<256x36xbf16, #tpu.memory_space<vmem>>) attributes {dimension_semantics = [#tpu.dimension_semantics<parallel>], iteration_bounds = array<i64: 2>, scalar_prefetch = 0 : i64, scratch_operands = 2 : i64, tpu.core_type = #tpu.core_type<tc>, window_params = [{transform_indices = @transform_0, window_bounds = array<i64: 1, 4, 256>}, {pipeline_mode = #tpu.pipeline_mode<synchronous>, transform_indices = @transform_1, window_bounds = array<i64: 1, 4>}, {pipeline_mode = #tpu.pipeline_mode<synchronous>, transform_indices = @transform_2, window_bounds = array<i64: 1, 4>}, {pipeline_mode = #tpu.pipeline_mode<synchronous>, transform_indices = @transform_3, window_bounds = array<i64: 36, 128>}, {pipeline_mode = #tpu.pipeline_mode<synchronous>, transform_indices = @transform_4, window_bounds = array<i64: 256, 4>}, {transform_indices = @transform_5, window_bounds = array<i64: 1, 4, 256>}, {transform_indices = @transform_6, window_bounds = array<i64: 1, 1, 4>}, {transform_indices = @transform_7, window_bounds = array<i64: 1, 1, 4>}]} {
    %cst = arith.constant 0.000000e+00 : f32
    %0 = vector.broadcast %cst : f32 to vector<1x32x4xf32>
    %c0 = arith.constant 0 : index
    %c0_0 = arith.constant 0 : index
    %c0_1 = arith.constant 0 : index
    %1 = vector.load %arg9[%c0, %c0_0, %c0_1] : memref<18x32x4xf32, #tpu.memory_space<vmem>>, vector<1x32x4xf32>
    tpu.vector_store %arg9[%c0, %c0_0, %c0_1], %0 {strides = array<i32>} : memref<18x32x4xf32, #tpu.memory_space<vmem>>, vector<1x32x4xf32>,
    %c17 = arith.constant 17 : index
    %c0_2 = arith.constant 0 : index
    %c0_3 = arith.constant 0 : index
    %2 = vector.load %arg9[%c17, %c0_2, %c0_3] : memref<18x32x4xf32, #tpu.memory_space<vmem>>, vector<1x32x4xf32>
    tpu.vector_store %arg9[%c17, %c0_2, %c0_3], %0 {strides = array<i32>} : memref<18x32x4xf32, #tpu.memory_space<vmem>>, vector<1x32x4xf32>,
    %cst_4 = arith.constant 0.000000e+00 : f32
    %3 = vector.broadcast %cst_4 : f32 to vector<16x8x4xf32>
    %c1 = arith.constant 1 : index
    %c0_5 = arith.constant 0 : index
    %c0_6 = arith.constant 0 : index
    %4 = vector.load %arg9[%c1, %c0_5, %c0_6] : memref<18x32x4xf32, #tpu.memory_space<vmem>>, vector<16x8x4xf32>
    tpu.vector_store %arg9[%c1, %c0_5, %c0_6], %3 {strides = array<i32>} : memref<18x32x4xf32, #tpu.memory_space<vmem>>, vector<16x8x4xf32>,
    %cst_7 = arith.constant 0.000000e+00 : f32
    %5 = vector.broadcast %cst_7 : f32 to vector<16x8x4xf32>
    %c1_8 = arith.constant 1 : index
    %c24 = arith.constant 24 : index
    %c0_9 = arith.constant 0 : index
    %6 = vector.load %arg9[%c1_8, %c24, %c0_9] : memref<18x32x4xf32, #tpu.memory_space<vmem>>, vector<16x8x4xf32>
    tpu.vector_store %arg9[%c1_8, %c24, %c0_9], %5 {strides = array<i32>} : memref<18x32x4xf32, #tpu.memory_space<vmem>>, vector<16x8x4xf32>,
    %c0_10 = arith.constant 0 : index
    %c0_11 = arith.constant 0 : index
    %7 = vector.load %arg2[%c0_10, %c0_11] : memref<1x4xf32, #tpu.memory_space<vmem>>, vector<1x4xf32>
    %c0_12 = arith.constant 0 : index
    %c0_13 = arith.constant 0 : index
    %8 = vector.load %arg3[%c0_12, %c0_13] : memref<1x4xf32, #tpu.memory_space<vmem>>, vector<1x4xf32>
    %cst_14 = arith.constant 0.000000e+00 : f32
    %9 = vector.broadcast %cst_14 : f32 to vector<1x4xf32>
    %cst_15 = arith.constant 0.000000e+00 : f32
    %10 = vector.broadcast %cst_15 : f32 to vector<1x4xf32>
    %c0_16 = arith.constant 0 : index
    %c0_17 = arith.constant 0 : index
    %c0_18 = arith.constant 0 : index
    %11 = vector.load %arg1[%c0_16, %c0_17, %c0_18] : memref<1x4x256xf32, #tpu.memory_space<vmem>>, vector<1x4x256xf32>
    %12 = vector.shape_cast %11 : vector<1x4x256xf32> to vector<4x256xf32>
    %13 = tpu.transpose %12, [1, 0] : vector<4x256xf32> -> vector<256x4xf32>
    %14 = vector.shape_cast %13 : vector<256x4xf32> to vector<16x16x4xf32>
    %15 = vector.shape_cast %7 : vector<1x4xf32> to vector<1x1x4xf32>
    %16 = vector.broadcast %15 : vector<1x1x4xf32> to vector<16x16x4xf32>
    %17 = arith.mulf %14, %16 : vector<16x16x4xf32>
    %18 = vector.shape_cast %8 : vector<1x4xf32> to vector<1x1x4xf32>
    %19 = vector.broadcast %18 : vector<1x1x4xf32> to vector<16x16x4xf32>
    %20 = arith.addf %17, %19 : vector<16x16x4xf32>
    %21 = arith.negf %20 : vector<16x16x4xf32>
    %22 = math.exp %21 : vector<16x16x4xf32>
    %cst_19 = arith.constant 1.000000e+00 : f32
    %23 = vector.broadcast %cst_19 : f32 to vector<16x16x4xf32>
    %24 = arith.addf %23, %22 : vector<16x16x4xf32>
    %25 = arith.divf %23, %24 : vector<16x16x4xf32>
    %26 = arith.mulf %20, %25 : vector<16x16x4xf32>
    %c1_20 = arith.constant 1 : index
    %c8 = arith.constant 8 : index
    %c0_21 = arith.constant 0 : index
    %27 = vector.load %arg9[%c1_20, %c8, %c0_21] : memref<18x32x4xf32, #tpu.memory_space<vmem>>, vector<16x16x4xf32>
    tpu.vector_store %arg9[%c1_20, %c8, %c0_21], %26 {strides = array<i32>} : memref<18x32x4xf32, #tpu.memory_space<vmem>>, vector<16x16x4xf32>,
    %c0_22 = arith.constant 0 : index
    %c7 = arith.constant 7 : index
    %c0_23 = arith.constant 0 : index
    %28 = vector.load %arg9[%c0_22, %c7, %c0_23] : memref<18x32x4xf32, #tpu.memory_space<vmem>>, vector<16x16x4xf32>
    %29 = vector.shape_cast %28 : vector<16x16x4xf32> to vector<256x4xf32>
    %30 = arith.truncf %29 : vector<256x4xf32> to vector<256x4xbf16>
    %c0_24 = arith.constant 0 : index
    %c0_25 = arith.constant 0 : index
    %31 = vector.load %arg10[%c0_24, %c0_25] : memref<256x36xbf16, #tpu.memory_space<vmem>>, vector<256x4xbf16>
    tpu.vector_store %arg10[%c0_24, %c0_25], %30 {strides = array<i32>} : memref<256x36xbf16, #tpu.memory_space<vmem>>, vector<256x4xbf16>,
    %c0_26 = arith.constant 0 : index
    %c8_27 = arith.constant 8 : index
    %c0_28 = arith.constant 0 : index
    %32 = vector.load %arg9[%c0_26, %c8_27, %c0_28] : memref<18x32x4xf32, #tpu.memory_space<vmem>>, vector<16x16x4xf32>
    %33 = vector.shape_cast %32 : vector<16x16x4xf32> to vector<256x4xf32>
    %34 = arith.truncf %33 : vector<256x4xf32> to vector<256x4xbf16>
    %c0_29 = arith.constant 0 : index
    %c4 = arith.constant 4 : index
    %35 = vector.load %arg10[%c0_29, %c4] : memref<256x36xbf16, #tpu.memory_space<vmem>>, vector<256x4xbf16>
    tpu.vector_store %arg10[%c0_29, %c4], %34 {strides = array<i32>} : memref<256x36xbf16, #tpu.memory_space<vmem>>, vector<256x4xbf16>,
    %c0_30 = arith.constant 0 : index
    %c9 = arith.constant 9 : index
    %c0_31 = arith.constant 0 : index
    %36 = vector.load %arg9[%c0_30, %c9, %c0_31] : memref<18x32x4xf32, #tpu.memory_space<vmem>>, vector<16x16x4xf32>
    %37 = vector.shape_cast %36 : vector<16x16x4xf32> to vector<256x4xf32>
    %38 = arith.truncf %37 : vector<256x4xf32> to vector<256x4xbf16>
    %c0_32 = arith.constant 0 : index
    %c8_33 = arith.constant 8 : index
    %39 = vector.load %arg10[%c0_32, %c8_33] : memref<256x36xbf16, #tpu.memory_space<vmem>>, vector<256x4xbf16>
    tpu.vector_store %arg10[%c0_32, %c8_33], %38 {strides = array<i32>} : memref<256x36xbf16, #tpu.memory_space<vmem>>, vector<256x4xbf16>,
    %c1_34 = arith.constant 1 : index
    %c7_35 = arith.constant 7 : index
    %c0_36 = arith.constant 0 : index
    %40 = vector.load %arg9[%c1_34, %c7_35, %c0_36] : memref<18x32x4xf32, #tpu.memory_space<vmem>>, vector<16x16x4xf32>
    %41 = vector.shape_cast %40 : vector<16x16x4xf32> to vector<256x4xf32>
    %42 = arith.truncf %41 : vector<256x4xf32> to vector<256x4xbf16>
    %c0_37 = arith.constant 0 : index
    %c12 = arith.constant 12 : index
    %43 = vector.load %arg10[%c0_37, %c12] : memref<256x36xbf16, #tpu.memory_space<vmem>>, vector<256x4xbf16>
    tpu.vector_store %arg10[%c0_37, %c12], %42 {strides = array<i32>} : memref<256x36xbf16, #tpu.memory_space<vmem>>, vector<256x4xbf16>,
    %c1_38 = arith.constant 1 : index
    %c8_39 = arith.constant 8 : index
    %c0_40 = arith.constant 0 : index
    %44 = vector.load %arg9[%c1_38, %c8_39, %c0_40] : memref<18x32x4xf32, #tpu.memory_space<vmem>>, vector<16x16x4xf32>
    %45 = vector.shape_cast %44 : vector<16x16x4xf32> to vector<256x4xf32>
    %46 = arith.truncf %45 : vector<256x4xf32> to vector<256x4xbf16>
    %c0_41 = arith.constant 0 : index
    %c16 = arith.constant 16 : index
    %47 = vector.load %arg10[%c0_41, %c16] : memref<256x36xbf16, #tpu.memory_space<vmem>>, vector<256x4xbf16>
    tpu.vector_store %arg10[%c0_41, %c16], %46 {strides = array<i32>} : memref<256x36xbf16, #tpu.memory_space<vmem>>, vector<256x4xbf16>,
    %c1_42 = arith.constant 1 : index
    %c9_43 = arith.constant 9 : index
    %c0_44 = arith.constant 0 : index
    %48 = vector.load %arg9[%c1_42, %c9_43, %c0_44] : memref<18x32x4xf32, #tpu.memory_space<vmem>>, vector<16x16x4xf32>
    %49 = vector.shape_cast %48 : vector<16x16x4xf32> to vector<256x4xf32>
    %50 = arith.truncf %49 : vector<256x4xf32> to vector<256x4xbf16>
    %c0_45 = arith.constant 0 : index
    %c20 = arith.constant 20 : index
    %51 = vector.load %arg10[%c0_45, %c20] : memref<256x36xbf16, #tpu.memory_space<vmem>>, vector<256x4xbf16>
    tpu.vector_store %arg10[%c0_45, %c20], %50 {strides = array<i32>} : memref<256x36xbf16, #tpu.memory_space<vmem>>, vector<256x4xbf16>,
    %c2 = arith.constant 2 : index
    %c7_46 = arith.constant 7 : index
    %c0_47 = arith.constant 0 : index
    %52 = vector.load %arg9[%c2, %c7_46, %c0_47] : memref<18x32x4xf32, #tpu.memory_space<vmem>>, vector<16x16x4xf32>
    %53 = vector.shape_cast %52 : vector<16x16x4xf32> to vector<256x4xf32>
    %54 = arith.truncf %53 : vector<256x4xf32> to vector<256x4xbf16>
    %c0_48 = arith.constant 0 : index
    %c24_49 = arith.constant 24 : index
    %55 = vector.load %arg10[%c0_48, %c24_49] : memref<256x36xbf16, #tpu.memory_space<vmem>>, vector<256x4xbf16>
    tpu.vector_store %arg10[%c0_48, %c24_49], %54 {strides = array<i32>} : memref<256x36xbf16, #tpu.memory_space<vmem>>, vector<256x4xbf16>,
    %c2_50 = arith.constant 2 : index
    %c8_51 = arith.constant 8 : index
    %c0_52 = arith.constant 0 : index
    %56 = vector.load %arg9[%c2_50, %c8_51, %c0_52] : memref<18x32x4xf32, #tpu.memory_space<vmem>>, vector<16x16x4xf32>
    %57 = vector.shape_cast %56 : vector<16x16x4xf32> to vector<256x4xf32>
    %58 = arith.truncf %57 : vector<256x4xf32> to vector<256x4xbf16>
    %c0_53 = arith.constant 0 : index
    %c28 = arith.constant 28 : index
    %59 = vector.load %arg10[%c0_53, %c28] : memref<256x36xbf16, #tpu.memory_space<vmem>>, vector<256x4xbf16>
    tpu.vector_store %arg10[%c0_53, %c28], %58 {strides = array<i32>} : memref<256x36xbf16, #tpu.memory_space<vmem>>, vector<256x4xbf16>,
    %c2_54 = arith.constant 2 : index
    %c9_55 = arith.constant 9 : index
    %c0_56 = arith.constant 0 : index
    %60 = vector.load %arg9[%c2_54, %c9_55, %c0_56] : memref<18x32x4xf32, #tpu.memory_space<vmem>>, vector<16x16x4xf32>
    %61 = vector.shape_cast %60 : vector<16x16x4xf32> to vector<256x4xf32>
    %62 = arith.truncf %61 : vector<256x4xf32> to vector<256x4xbf16>
    %c0_57 = arith.constant 0 : index
    %c32 = arith.constant 32 : index
    %63 = vector.load %arg10[%c0_57, %c32] : memref<256x36xbf16, #tpu.memory_space<vmem>>, vector<256x4xbf16>
    tpu.vector_store %arg10[%c0_57, %c32], %62 {strides = array<i32>} : memref<256x36xbf16, #tpu.memory_space<vmem>>, vector<256x4xbf16>,
    %c0_58 = arith.constant 0 : index
    %c0_59 = arith.constant 0 : index
    %64 = vector.load %arg10[%c0_58, %c0_59] : memref<256x36xbf16, #tpu.memory_space<vmem>>, vector<256x36xbf16>
    %c0_60 = arith.constant 0 : index
    %c0_61 = arith.constant 0 : index
    %65 = vector.load %arg4[%c0_60, %c0_61] : memref<36x128xbf16, #tpu.memory_space<vmem>>, vector<36x128xbf16>
    %cst_62 = arith.constant dense<0.000000e+00> : vector<256x128xf32>
    %66 = tpu.matmul %64, %65, %cst_62 {dimension_numbers = #tpu.dot_dimension_numbers<[1], [0], [0], [1], [0, 0, 1, 1], [], []>} : vector<256x36xbf16>, vector<36x128xbf16>, vector<256x128xf32> -> vector<256x128xf32>
    %67 = vector.extract_strided_slice %66 {offsets = [0, 0], sizes = [256, 4], strides = [1, 1]} : vector<256x128xf32> to vector<256x4xf32>
    %c0_63 = arith.constant 0 : index
    %c0_64 = arith.constant 0 : index
    %68 = vector.load %arg5[%c0_63, %c0_64] : memref<256x4xf32, #tpu.memory_space<vmem>>, vector<256x4xf32>
    %69 = arith.addf %67, %68 : vector<256x4xf32>
    %cst_65 = arith.constant dense<0.000000e+00> : vector<4xf32>
    %70 = vector.multi_reduction <add>, %69, %cst_65 [0] : vector<256x4xf32> to vector<4xf32>
    %71 = vector.shape_cast %70 : vector<4xf32> to vector<1x4xf32>
    %72 = arith.addf %9, %71 : vector<1x4xf32>
    %73 = arith.mulf %69, %69 : vector<256x4xf32>
    %cst_66 = arith.constant dense<0.000000e+00> : vector<4xf32>
    %74 = vector.multi_reduction <add>, %73, %cst_66 [0] : vector<256x4xf32> to vector<4xf32>
    %75 = vector.shape_cast %74 : vector<4xf32> to vector<1x4xf32>
    %76 = arith.addf %10, %75 : vector<1x4xf32>
    %77 = tpu.transpose %69, [1, 0] : vector<256x4xf32> -> vector<4x256xf32>
    %78 = arith.truncf %77 : vector<4x256xf32> to vector<4x256xbf16>
    %c0_67 = arith.constant 0 : index
    %c0_68 = arith.constant 0 : index
    %c0_69 = arith.constant 0 : index
    %79 = vector.load %arg6[%c0_67, %c0_68, %c0_69] : memref<1x4x256xbf16, #tpu.memory_space<vmem>>, vector<1x4x256xbf16>
    %80 = vector.shape_cast %79 : vector<1x4x256xbf16> to vector<4x256xbf16>
    %81 = vector.shape_cast %78 : vector<4x256xbf16> to vector<1x4x256xbf16>
    tpu.vector_store %arg6[%c0_67, %c0_68, %c0_69], %81 {strides = array<i32>} : memref<1x4x256xbf16, #tpu.memory_space<vmem>>, vector<1x4x256xbf16>,
    %c0_70 = arith.constant 0 : index
    %c0_71 = arith.constant 0 : index
    %c0_72 = arith.constant 0 : index
    %82 = vector.load %arg7[%c0_70, %c0_71, %c0_72] : memref<1x1x4xf32, #tpu.memory_space<vmem>>, vector<1x1x4xf32>
    %83 = vector.shape_cast %82 : vector<1x1x4xf32> to vector<1x4xf32>
    %84 = vector.shape_cast %72 : vector<1x4xf32> to vector<1x1x4xf32>
    tpu.vector_store %arg7[%c0_70, %c0_71, %c0_72], %84 {strides = array<i32>} : memref<1x1x4xf32, #tpu.memory_space<vmem>>, vector<1x1x4xf32>,
    %c0_73 = arith.constant 0 : index
    %c0_74 = arith.constant 0 : index
    %c0_75 = arith.constant 0 : index
    %85 = vector.load %arg8[%c0_73, %c0_74, %c0_75] : memref<1x1x4xf32, #tpu.memory_space<vmem>>, vector<1x1x4xf32>
    %86 = vector.shape_cast %85 : vector<1x1x4xf32> to vector<1x4xf32>
    %87 = vector.shape_cast %76 : vector<1x4xf32> to vector<1x1x4xf32>
    tpu.vector_store %arg8[%c0_73, %c0_74, %c0_75], %87 {strides = array<i32>} : memref<1x1x4xf32, #tpu.memory_space<vmem>>, vector<1x1x4xf32>,
    return
  }
  func.func @transform_0(%arg0: i32) -> (i32, i32, i32) {
    %c0_i32 = arith.constant 0 : i32
    %c0_i32_0 = arith.constant 0 : i32
    %c0_i32_1 = arith.constant 0 : i32
    return %arg0, %c0_i32, %c0_i32_0 : i32, i32, i32
  }
  func.func @transform_1(%arg0: i32) -> (i32, i32) {
    %c0_i32 = arith.constant 0 : i32
    %c0_i32_0 = arith.constant 0 : i32
    %c0_i32_1 = arith.constant 0 : i32
    return %c0_i32, %c0_i32_0 : i32, i32
  }
  func.func @transform_2(%arg0: i32) -> (i32, i32) {
    %c0_i32 = arith.constant 0 : i32
    %c0_i32_0 = arith.constant 0 : i32
    %c0_i32_1 = arith.constant 0 : i32
    return %c0_i32, %c0_i32_0 : i32, i32
  }
  func.func @transform_3(%arg0: i32) -> (i32, i32) {
    %c0_i32 = arith.constant 0 : i32
    %c0_i32_0 = arith.constant 0 : i32
    %c0_i32_1 = arith.constant 0 : i32
    return %c0_i32, %c0_i32_0 : i32, i32
  }
  func.func @transform_4(%arg0: i32) -> (i32, i32) {
    %c0_i32 = arith.constant 0 : i32
    %c0_i32_0 = arith.constant 0 : i32
    %c0_i32_1 = arith.constant 0 : i32
    return %c0_i32, %c0_i32_0 : i32, i32
  }
  func.func @transform_5(%arg0: i32) -> (i32, i32, i32) {
    %c0_i32 = arith.constant 0 : i32
    %c0_i32_0 = arith.constant 0 : i32
    %c0_i32_1 = arith.constant 0 : i32
    return %arg0, %c0_i32, %c0_i32_0 : i32, i32, i32
  }
  func.func @transform_6(%arg0: i32) -> (i32, i32, i32) {
    %c0_i32 = arith.constant 0 : i32
    %c0_i32_0 = arith.constant 0 : i32
    %c0_i32_1 = arith.constant 0 : i32
    return %arg0, %c0_i32, %c0_i32_0 : i32, i32, i32
  }
  func.func @transform_7(%arg0: i32) -> (i32, i32, i32) {
    %c0_i32 = arith.constant 0 : i32
    %c0_i32_0 = arith.constant 0 : i32
    %c0_i32_1 = arith.constant 0 : i32
    return %arg0, %c0_i32, %c0_i32_0 : i32, i32, i32
  }
}

module attributes {stable_mosaic.version = 11 : i64} {
  func.func @_stage2_kernel(%arg0: i32, %arg1: memref<1x4x256xbf16, #tpu.memory_space<vmem>>, %arg2: memref<1x4x256xf32, #tpu.memory_space<vmem>>, %arg3: memref<1x4xf32, #tpu.memory_space<vmem>>, %arg4: memref<1x4xf32, #tpu.memory_space<vmem>>, %arg5: memref<36x128xbf16, #tpu.memory_space<vmem>>, %arg6: memref<1x4x256xf32, #tpu.memory_space<vmem>>, %arg7: memref<18x32x4xf32, #tpu.memory_space<vmem>>, %arg8: memref<256x36xbf16, #tpu.memory_space<vmem>>) attributes {dimension_semantics = [#tpu.dimension_semantics<parallel>], iteration_bounds = array<i64: 2>, scalar_prefetch = 0 : i64, scratch_operands = 2 : i64, tpu.core_type = #tpu.core_type<tc>, window_params = [{transform_indices = @transform_0, window_bounds = array<i64: 1, 4, 256>}, {transform_indices = @transform_1, window_bounds = array<i64: 1, 4, 256>}, {pipeline_mode = #tpu.pipeline_mode<synchronous>, transform_indices = @transform_2, window_bounds = array<i64: 1, 4>}, {pipeline_mode = #tpu.pipeline_mode<synchronous>, transform_indices = @transform_3, window_bounds = array<i64: 1, 4>}, {pipeline_mode = #tpu.pipeline_mode<synchronous>, transform_indices = @transform_4, window_bounds = array<i64: 36, 128>}, {transform_indices = @transform_5, window_bounds = array<i64: 1, 4, 256>}]} {
    %cst = arith.constant 0.000000e+00 : f32
    %0 = vector.broadcast %cst : f32 to vector<1x32x4xf32>
    %c0 = arith.constant 0 : index
    %c0_0 = arith.constant 0 : index
    %c0_1 = arith.constant 0 : index
    %1 = vector.load %arg7[%c0, %c0_0, %c0_1] : memref<18x32x4xf32, #tpu.memory_space<vmem>>, vector<1x32x4xf32>
    tpu.vector_store %arg7[%c0, %c0_0, %c0_1], %0 {strides = array<i32>} : memref<18x32x4xf32, #tpu.memory_space<vmem>>, vector<1x32x4xf32>,
    %c17 = arith.constant 17 : index
    %c0_2 = arith.constant 0 : index
    %c0_3 = arith.constant 0 : index
    %2 = vector.load %arg7[%c17, %c0_2, %c0_3] : memref<18x32x4xf32, #tpu.memory_space<vmem>>, vector<1x32x4xf32>
    tpu.vector_store %arg7[%c17, %c0_2, %c0_3], %0 {strides = array<i32>} : memref<18x32x4xf32, #tpu.memory_space<vmem>>, vector<1x32x4xf32>,
    %cst_4 = arith.constant 0.000000e+00 : f32
    %3 = vector.broadcast %cst_4 : f32 to vector<16x8x4xf32>
    %c1 = arith.constant 1 : index
    %c0_5 = arith.constant 0 : index
    %c0_6 = arith.constant 0 : index
    %4 = vector.load %arg7[%c1, %c0_5, %c0_6] : memref<18x32x4xf32, #tpu.memory_space<vmem>>, vector<16x8x4xf32>
    tpu.vector_store %arg7[%c1, %c0_5, %c0_6], %3 {strides = array<i32>} : memref<18x32x4xf32, #tpu.memory_space<vmem>>, vector<16x8x4xf32>,
    %cst_7 = arith.constant 0.000000e+00 : f32
    %5 = vector.broadcast %cst_7 : f32 to vector<16x8x4xf32>
    %c1_8 = arith.constant 1 : index
    %c24 = arith.constant 24 : index
    %c0_9 = arith.constant 0 : index
    %6 = vector.load %arg7[%c1_8, %c24, %c0_9] : memref<18x32x4xf32, #tpu.memory_space<vmem>>, vector<16x8x4xf32>
    tpu.vector_store %arg7[%c1_8, %c24, %c0_9], %5 {strides = array<i32>} : memref<18x32x4xf32, #tpu.memory_space<vmem>>, vector<16x8x4xf32>,
    %c0_10 = arith.constant 0 : index
    %c0_11 = arith.constant 0 : index
    %7 = vector.load %arg3[%c0_10, %c0_11] : memref<1x4xf32, #tpu.memory_space<vmem>>, vector<1x4xf32>
    %c0_12 = arith.constant 0 : index
    %c0_13 = arith.constant 0 : index
    %8 = vector.load %arg4[%c0_12, %c0_13] : memref<1x4xf32, #tpu.memory_space<vmem>>, vector<1x4xf32>
    %c0_14 = arith.constant 0 : index
    %c0_15 = arith.constant 0 : index
    %c0_16 = arith.constant 0 : index
    %9 = vector.load %arg1[%c0_14, %c0_15, %c0_16] : memref<1x4x256xbf16, #tpu.memory_space<vmem>>, vector<1x4x256xbf16>
    %10 = vector.shape_cast %9 : vector<1x4x256xbf16> to vector<4x256xbf16>
    %11 = arith.extf %10 : vector<4x256xbf16> to vector<4x256xf32>
    %12 = tpu.transpose %11, [1, 0] : vector<4x256xf32> -> vector<256x4xf32>
    %13 = vector.shape_cast %12 : vector<256x4xf32> to vector<16x16x4xf32>
    %14 = vector.shape_cast %7 : vector<1x4xf32> to vector<1x1x4xf32>
    %15 = vector.broadcast %14 : vector<1x1x4xf32> to vector<16x16x4xf32>
    %16 = arith.mulf %13, %15 : vector<16x16x4xf32>
    %17 = vector.shape_cast %8 : vector<1x4xf32> to vector<1x1x4xf32>
    %18 = vector.broadcast %17 : vector<1x1x4xf32> to vector<16x16x4xf32>
    %19 = arith.addf %16, %18 : vector<16x16x4xf32>
    %20 = arith.negf %19 : vector<16x16x4xf32>
    %21 = math.exp %20 : vector<16x16x4xf32>
    %cst_17 = arith.constant 1.000000e+00 : f32
    %22 = vector.broadcast %cst_17 : f32 to vector<16x16x4xf32>
    %23 = arith.addf %22, %21 : vector<16x16x4xf32>
    %24 = arith.divf %22, %23 : vector<16x16x4xf32>
    %25 = arith.mulf %19, %24 : vector<16x16x4xf32>
    %c1_18 = arith.constant 1 : index
    %c8 = arith.constant 8 : index
    %c0_19 = arith.constant 0 : index
    %26 = vector.load %arg7[%c1_18, %c8, %c0_19] : memref<18x32x4xf32, #tpu.memory_space<vmem>>, vector<16x16x4xf32>
    tpu.vector_store %arg7[%c1_18, %c8, %c0_19], %25 {strides = array<i32>} : memref<18x32x4xf32, #tpu.memory_space<vmem>>, vector<16x16x4xf32>,
    %c0_20 = arith.constant 0 : index
    %c7 = arith.constant 7 : index
    %c0_21 = arith.constant 0 : index
    %27 = vector.load %arg7[%c0_20, %c7, %c0_21] : memref<18x32x4xf32, #tpu.memory_space<vmem>>, vector<16x16x4xf32>
    %28 = vector.shape_cast %27 : vector<16x16x4xf32> to vector<256x4xf32>
    %29 = arith.truncf %28 : vector<256x4xf32> to vector<256x4xbf16>
    %c0_22 = arith.constant 0 : index
    %c0_23 = arith.constant 0 : index
    %30 = vector.load %arg8[%c0_22, %c0_23] : memref<256x36xbf16, #tpu.memory_space<vmem>>, vector<256x4xbf16>
    tpu.vector_store %arg8[%c0_22, %c0_23], %29 {strides = array<i32>} : memref<256x36xbf16, #tpu.memory_space<vmem>>, vector<256x4xbf16>,
    %c0_24 = arith.constant 0 : index
    %c8_25 = arith.constant 8 : index
    %c0_26 = arith.constant 0 : index
    %31 = vector.load %arg7[%c0_24, %c8_25, %c0_26] : memref<18x32x4xf32, #tpu.memory_space<vmem>>, vector<16x16x4xf32>
    %32 = vector.shape_cast %31 : vector<16x16x4xf32> to vector<256x4xf32>
    %33 = arith.truncf %32 : vector<256x4xf32> to vector<256x4xbf16>
    %c0_27 = arith.constant 0 : index
    %c4 = arith.constant 4 : index
    %34 = vector.load %arg8[%c0_27, %c4] : memref<256x36xbf16, #tpu.memory_space<vmem>>, vector<256x4xbf16>
    tpu.vector_store %arg8[%c0_27, %c4], %33 {strides = array<i32>} : memref<256x36xbf16, #tpu.memory_space<vmem>>, vector<256x4xbf16>,
    %c0_28 = arith.constant 0 : index
    %c9 = arith.constant 9 : index
    %c0_29 = arith.constant 0 : index
    %35 = vector.load %arg7[%c0_28, %c9, %c0_29] : memref<18x32x4xf32, #tpu.memory_space<vmem>>, vector<16x16x4xf32>
    %36 = vector.shape_cast %35 : vector<16x16x4xf32> to vector<256x4xf32>
    %37 = arith.truncf %36 : vector<256x4xf32> to vector<256x4xbf16>
    %c0_30 = arith.constant 0 : index
    %c8_31 = arith.constant 8 : index
    %38 = vector.load %arg8[%c0_30, %c8_31] : memref<256x36xbf16, #tpu.memory_space<vmem>>, vector<256x4xbf16>
    tpu.vector_store %arg8[%c0_30, %c8_31], %37 {strides = array<i32>} : memref<256x36xbf16, #tpu.memory_space<vmem>>, vector<256x4xbf16>,
    %c1_32 = arith.constant 1 : index
    %c7_33 = arith.constant 7 : index
    %c0_34 = arith.constant 0 : index
    %39 = vector.load %arg7[%c1_32, %c7_33, %c0_34] : memref<18x32x4xf32, #tpu.memory_space<vmem>>, vector<16x16x4xf32>
    %40 = vector.shape_cast %39 : vector<16x16x4xf32> to vector<256x4xf32>
    %41 = arith.truncf %40 : vector<256x4xf32> to vector<256x4xbf16>
    %c0_35 = arith.constant 0 : index
    %c12 = arith.constant 12 : index
    %42 = vector.load %arg8[%c0_35, %c12] : memref<256x36xbf16, #tpu.memory_space<vmem>>, vector<256x4xbf16>
    tpu.vector_store %arg8[%c0_35, %c12], %41 {strides = array<i32>} : memref<256x36xbf16, #tpu.memory_space<vmem>>, vector<256x4xbf16>,
    %c1_36 = arith.constant 1 : index
    %c8_37 = arith.constant 8 : index
    %c0_38 = arith.constant 0 : index
    %43 = vector.load %arg7[%c1_36, %c8_37, %c0_38] : memref<18x32x4xf32, #tpu.memory_space<vmem>>, vector<16x16x4xf32>
    %44 = vector.shape_cast %43 : vector<16x16x4xf32> to vector<256x4xf32>
    %45 = arith.truncf %44 : vector<256x4xf32> to vector<256x4xbf16>
    %c0_39 = arith.constant 0 : index
    %c16 = arith.constant 16 : index
    %46 = vector.load %arg8[%c0_39, %c16] : memref<256x36xbf16, #tpu.memory_space<vmem>>, vector<256x4xbf16>
    tpu.vector_store %arg8[%c0_39, %c16], %45 {strides = array<i32>} : memref<256x36xbf16, #tpu.memory_space<vmem>>, vector<256x4xbf16>,
    %c1_40 = arith.constant 1 : index
    %c9_41 = arith.constant 9 : index
    %c0_42 = arith.constant 0 : index
    %47 = vector.load %arg7[%c1_40, %c9_41, %c0_42] : memref<18x32x4xf32, #tpu.memory_space<vmem>>, vector<16x16x4xf32>
    %48 = vector.shape_cast %47 : vector<16x16x4xf32> to vector<256x4xf32>
    %49 = arith.truncf %48 : vector<256x4xf32> to vector<256x4xbf16>
    %c0_43 = arith.constant 0 : index
    %c20 = arith.constant 20 : index
    %50 = vector.load %arg8[%c0_43, %c20] : memref<256x36xbf16, #tpu.memory_space<vmem>>, vector<256x4xbf16>
    tpu.vector_store %arg8[%c0_43, %c20], %49 {strides = array<i32>} : memref<256x36xbf16, #tpu.memory_space<vmem>>, vector<256x4xbf16>,
    %c2 = arith.constant 2 : index
    %c7_44 = arith.constant 7 : index
    %c0_45 = arith.constant 0 : index
    %51 = vector.load %arg7[%c2, %c7_44, %c0_45] : memref<18x32x4xf32, #tpu.memory_space<vmem>>, vector<16x16x4xf32>
    %52 = vector.shape_cast %51 : vector<16x16x4xf32> to vector<256x4xf32>
    %53 = arith.truncf %52 : vector<256x4xf32> to vector<256x4xbf16>
    %c0_46 = arith.constant 0 : index
    %c24_47 = arith.constant 24 : index
    %54 = vector.load %arg8[%c0_46, %c24_47] : memref<256x36xbf16, #tpu.memory_space<vmem>>, vector<256x4xbf16>
    tpu.vector_store %arg8[%c0_46, %c24_47], %53 {strides = array<i32>} : memref<256x36xbf16, #tpu.memory_space<vmem>>, vector<256x4xbf16>,
    %c2_48 = arith.constant 2 : index
    %c8_49 = arith.constant 8 : index
    %c0_50 = arith.constant 0 : index
    %55 = vector.load %arg7[%c2_48, %c8_49, %c0_50] : memref<18x32x4xf32, #tpu.memory_space<vmem>>, vector<16x16x4xf32>
    %56 = vector.shape_cast %55 : vector<16x16x4xf32> to vector<256x4xf32>
    %57 = arith.truncf %56 : vector<256x4xf32> to vector<256x4xbf16>
    %c0_51 = arith.constant 0 : index
    %c28 = arith.constant 28 : index
    %58 = vector.load %arg8[%c0_51, %c28] : memref<256x36xbf16, #tpu.memory_space<vmem>>, vector<256x4xbf16>
    tpu.vector_store %arg8[%c0_51, %c28], %57 {strides = array<i32>} : memref<256x36xbf16, #tpu.memory_space<vmem>>, vector<256x4xbf16>,
    %c2_52 = arith.constant 2 : index
    %c9_53 = arith.constant 9 : index
    %c0_54 = arith.constant 0 : index
    %59 = vector.load %arg7[%c2_52, %c9_53, %c0_54] : memref<18x32x4xf32, #tpu.memory_space<vmem>>, vector<16x16x4xf32>
    %60 = vector.shape_cast %59 : vector<16x16x4xf32> to vector<256x4xf32>
    %61 = arith.truncf %60 : vector<256x4xf32> to vector<256x4xbf16>
    %c0_55 = arith.constant 0 : index
    %c32 = arith.constant 32 : index
    %62 = vector.load %arg8[%c0_55, %c32] : memref<256x36xbf16, #tpu.memory_space<vmem>>, vector<256x4xbf16>
    tpu.vector_store %arg8[%c0_55, %c32], %61 {strides = array<i32>} : memref<256x36xbf16, #tpu.memory_space<vmem>>, vector<256x4xbf16>,
    %c0_56 = arith.constant 0 : index
    %c0_57 = arith.constant 0 : index
    %63 = vector.load %arg8[%c0_56, %c0_57] : memref<256x36xbf16, #tpu.memory_space<vmem>>, vector<256x36xbf16>
    %c0_58 = arith.constant 0 : index
    %c0_59 = arith.constant 0 : index
    %64 = vector.load %arg5[%c0_58, %c0_59] : memref<36x128xbf16, #tpu.memory_space<vmem>>, vector<36x128xbf16>
    %cst_60 = arith.constant dense<0.000000e+00> : vector<256x128xf32>
    %65 = tpu.matmul %63, %64, %cst_60 {dimension_numbers = #tpu.dot_dimension_numbers<[1], [0], [0], [1], [0, 0, 1, 1], [], []>} : vector<256x36xbf16>, vector<36x128xbf16>, vector<256x128xf32> -> vector<256x128xf32>
    %66 = vector.extract_strided_slice %65 {offsets = [0, 0], sizes = [256, 4], strides = [1, 1]} : vector<256x128xf32> to vector<256x4xf32>
    %67 = tpu.transpose %66, [1, 0] : vector<256x4xf32> -> vector<4x256xf32>
    %c0_61 = arith.constant 0 : index
    %c0_62 = arith.constant 0 : index
    %c0_63 = arith.constant 0 : index
    %68 = vector.load %arg2[%c0_61, %c0_62, %c0_63] : memref<1x4x256xf32, #tpu.memory_space<vmem>>, vector<1x4x256xf32>
    %69 = vector.shape_cast %68 : vector<1x4x256xf32> to vector<4x256xf32>
    %70 = arith.addf %67, %69 : vector<4x256xf32>
    %c0_64 = arith.constant 0 : index
    %c0_65 = arith.constant 0 : index
    %c0_66 = arith.constant 0 : index
    %71 = vector.load %arg6[%c0_64, %c0_65, %c0_66] : memref<1x4x256xf32, #tpu.memory_space<vmem>>, vector<1x4x256xf32>
    %72 = vector.shape_cast %71 : vector<1x4x256xf32> to vector<4x256xf32>
    %73 = vector.shape_cast %70 : vector<4x256xf32> to vector<1x4x256xf32>
    tpu.vector_store %arg6[%c0_64, %c0_65, %c0_66], %73 {strides = array<i32>} : memref<1x4x256xf32, #tpu.memory_space<vmem>>, vector<1x4x256xf32>,
    return
  }
  func.func @transform_0(%arg0: i32) -> (i32, i32, i32) {
    %c0_i32 = arith.constant 0 : i32
    %c0_i32_0 = arith.constant 0 : i32
    %c0_i32_1 = arith.constant 0 : i32
    return %arg0, %c0_i32, %c0_i32_0 : i32, i32, i32
  }
  func.func @transform_1(%arg0: i32) -> (i32, i32, i32) {
    %c0_i32 = arith.constant 0 : i32
    %c0_i32_0 = arith.constant 0 : i32
    %c0_i32_1 = arith.constant 0 : i32
    return %arg0, %c0_i32, %c0_i32_0 : i32, i32, i32
  }
  func.func @transform_2(%arg0: i32) -> (i32, i32) {
    %c0_i32 = arith.constant 0 : i32
    %c0_i32_0 = arith.constant 0 : i32
    %c0_i32_1 = arith.constant 0 : i32
    return %c0_i32, %c0_i32_0 : i32, i32
  }
  func.func @transform_3(%arg0: i32) -> (i32, i32) {
    %c0_i32 = arith.constant 0 : i32
    %c0_i32_0 = arith.constant 0 : i32
    %c0_i32_1 = arith.constant 0 : i32
    return %c0_i32, %c0_i32_0 : i32, i32
  }
  func.func @transform_4(%arg0: i32) -> (i32, i32) {
    %c0_i32 = arith.constant 0 : i32
    %c0_i32_0 = arith.constant 0 : i32
    %c0_i32_1 = arith.constant 0 : i32
    return %c0_i32, %c0_i32_0 : i32, i32
  }
  func.func @transform_5(%arg0: i32) -> (i32, i32, i32) {
    %c0_i32 = arith.constant 0 : i32
    %c0_i32_0 = arith.constant 0 : i32
    %c0_i32_1 = arith.constant 0 : i32
    return %arg0, %c0_i32, %c0_i32_0 : i32, i32, i32
  }
}

</mosaic_0001>

<llo_original>
// kernel: residual_block.3
$region0: #{residual_block.3}
  #allocation0 [shape = 'u32[]', space=smem, size = 0x4, offset = 0x4, fixed_abs, tag = 'smem constant byte address 0x4 - core index']
  #allocation1 [shape = 'u32[144,128]{1,0:T(1,128)}', space=vmem, size = 0x12000, scoped, tag = 'internal scratch']
  #allocation2 [shape = 'f32[18,32,4]{2,1,0:T(8,128)}', space=vmem, size = 0x48000, scoped, tag = 'scratch operand']
  #allocation3 [shape = 'bf16[256,36]{1,0:T(16,128)(2,1)}', space=vmem, size = 0x10000, scoped, tag = 'scratch operand']
  %s0 = inlined_call_operand.hbm [shape: bf16[2,4,256], index: 0, kind: input, shape index: {}]
  %s1 = inlined_call_operand.hbm [shape: f32[2,4,256], index: 1, kind: input, shape index: {}, may-alias: {1,5}]
  %s2 = inlined_call_operand.hbm [shape: f32[1,4], index: 2, kind: input, shape index: {}]
  %s3 = inlined_call_operand.hbm [shape: f32[1,4], index: 3, kind: input, shape index: {}]
  %s4 = inlined_call_operand.hbm [shape: bf16[36,128], index: 4, kind: input, shape index: {}]
  %s5 = inlined_call_operand.hbm [shape: f32[2,4,256], index: 5, kind: output, shape index: {}, may-alias: {1,5}]
  %s6 = sld [smem:[#allocation0]]
  $region73: #{residual_block.3} parent=0
    _
  %s8 = ssub.s32 1, %s6
  %s9 = scalar_select 0, %s8, %s6
  $region1: #{residual_block.3} parent=0
    #allocation4 [shape = 'u8[4096]{0}', space=vmem, size = 0x1000, scoped, tag = 'input window, operand 0']
    #allocation5 [shape = 's32[2]{0}', space=sflag, size = 0x8, scoped, tag = 'scoped memory for residual_block.3']
    #allocation6 [shape = 's32[2]{0}', space=sflag, size = 0x8, scoped, tag = 'scoped memory for residual_block.3']
    #allocation7 [shape = 'u8[8192]{0}', space=vmem, size = 0x2000, scoped, tag = 'input window, operand 1']
    #allocation8 [shape = 's32[2]{0}', space=sflag, size = 0x8, scoped, tag = 'scoped memory for residual_block.3']
    #allocation9 [shape = 'u8[512]{0}', space=vmem, size = 0x400, scoped, tag = 'input window, operand 2, single buffered']
    #allocation10 [shape = 'u8[512]{0}', space=vmem, size = 0x400, scoped, tag = 'input window, operand 3, single buffered']
    #allocation11 [shape = 's32[1]{0}', space=sflag, size = 0x4, scoped, tag = 'scoped memory for residual_block.3']
    #allocation12 [shape = 'u8[10240]{0}', space=vmem, size = 0x2800, scoped, tag = 'input window, operand 4, single buffered']
    #allocation13 [shape = 'u8[8192]{0}', space=vmem, size = 0x2000, scoped, tag = 'output window, operand 0']
    %10 = vsyncpa [#allocation5], 0
    %s11 = scalar_lea.sflag [#allocation5], 1
    %12 = vsyncpa %s11, 0
    %13 = vsyncpa [#allocation8], 0
    %s14 = scalar_lea.sflag [#allocation8], 1
    %15 = vsyncpa %s14, 0
    %16 = vsyncpa [#allocation11], 0
    %17 = vsyncpa [#allocation6], 0
    %s18 = scalar_lea.sflag [#allocation6], 1
    %19 = vsyncpa %s18, 0
    loop: start=0, step=1, limit=4
    $region2: #{residual_block.3} parent=1 // loop_pre_header
      _
    $region3: #{residual_block.3} parent=1 // loop_header
      %s21 = sphi 0, %s25
      %p22 = scmp.ge.s32.totalorder %s21, 4
      %s31 = sphi 0, %s33
      %s34 = sphi 0, %s31
      %s35 = sphi 0, %s34
      %s51 = sphi 0, %s35
      %s57 = sphi 0, %s59
      %s60 = sphi 0, %s57
      %s61 = sphi 0, %s60
      %s77 = sphi 0, %s61
      %s81 = sphi 0, %s81
      %s83 = sphi 0, %s81
      %s84 = sphi 0, %s83
      %s98 = sphi 0, %s84
      %s102 = sphi 0, %s102
      %s104 = sphi 0, %s102
      %s105 = sphi 0, %s104
      %s119 = sphi 0, %s105
      %s123 = sphi 0, %s123
      %s125 = sphi 0, %s123
      %s126 = sphi 0, %s125
      %s140 = sphi 0, %s126
      %s146 = sphi 0, %s148
      %s149 = sphi 0, %s146
      %s150 = sphi 0, %s149
      %s166 = sphi 0, %s150
    $region4: #{residual_block.3} parent=1 // loop_header_branch
      %24 = sbr.rel (%p22) target = $region8
    $region5: #{residual_block.3} parent=1 // loop_body
      %s26 = ssub.s32 %s21, 1
      %s27 = ssub.s32 %s21, 2
      %s28 = sadd.s32 %s21, 1
      %s29 = ssub.s32 %s21, %s28
      %p30 = scmp.eq.s32.totalorder %s29, 0
      %s32 = sadd.s32 %s31, 1
      %s33 = scalar_select %p30, %s31, %s32
      %p36 = pneg %p30
      %p37 = scmp.eq.s32.totalorder %s21, 1
      %p38 = por %p36, %p37
      %p39 = scmp.ne.s32.totalorder %s31, %s34
      %p40 = scmp.eq.s32.totalorder %s21, 0
      %p41 = por %p39, %p40
      %p42 = scmp.ne.s32.totalorder %s31, %s34
      %p43 = scmp.eq.s32.totalorder %s26, 1
      %p44 = por %p42, %p43
      %p45 = scmp.ne.s32.totalorder %s34, %s35
      %p46 = scmp.eq.s32.totalorder %s26, 0
      %p47 = por %p45, %p46
      %p48 = scmp.ne.s32.totalorder %s34, %s35
      %p49 = scmp.eq.s32.totalorder %s27, 1
      %p50 = por %p48, %p49
      %p52 = scmp.ne.s32.totalorder %s35, %s51
      %p53 = scmp.eq.s32.totalorder %s27, 0
      %p54 = por %p52, %p53
      %s55 = ssub.s32 %s21, %s28
      %p56 = scmp.eq.s32.totalorder %s55, 0
      %s58 = sadd.s32 %s57, 1
      %s59 = scalar_select %p56, %s57, %s58
      %p62 = pneg %p56
      %p63 = scmp.eq.s32.totalorder %s21, 1
      %p64 = por %p62, %p63
      %p65 = scmp.ne.s32.totalorder %s57, %s60
      %p66 = scmp.eq.s32.totalorder %s21, 0
      %p67 = por %p65, %p66
      %p68 = scmp.ne.s32.totalorder %s57, %s60
      %p69 = scmp.eq.s32.totalorder %s26, 1
      %p70 = por %p68, %p69
      %p71 = scmp.ne.s32.totalorder %s60, %s61
      %p72 = scmp.eq.s32.totalorder %s26, 0
      %p73 = por %p71, %p72
      %p74 = scmp.ne.s32.totalorder %s60, %s61
      %p75 = scmp.eq.s32.totalorder %s27, 1
      %p76 = por %p74, %p75
      %p78 = scmp.ne.s32.totalorder %s61, %s77
      %p79 = scmp.eq.s32.totalorder %s27, 0
      %p80 = por %p78, %p79
      %s82 = sadd.s32 %s81, 1
      %p85 = scmp.eq.s32.totalorder %s21, 1
      %p86 = scmp.ne.s32.totalorder %s81, %s83
      %p87 = scmp.eq.s32.totalorder %s21, 0
      %p88 = por %p86, %p87
      %p89 = scmp.ne.s32.totalorder %s81, %s83
      %p90 = scmp.eq.s32.totalorder %s26, 1
      %p91 = por %p89, %p90
      %p92 = scmp.ne.s32.totalorder %s83, %s84
      %p93 = scmp.eq.s32.totalorder %s26, 0
      %p94 = por %p92, %p93
      %p95 = scmp.ne.s32.totalorder %s83, %s84
      %p96 = scmp.eq.s32.totalorder %s27, 1
      %p97 = por %p95, %p96
      %p99 = scmp.ne.s32.totalorder %s84, %s98
      %p100 = scmp.eq.s32.totalorder %s27, 0
      %p101 = por %p99, %p100
      %s103 = sadd.s32 %s102, 1
      %p106 = scmp.eq.s32.totalorder %s21, 1
      %p107 = scmp.ne.s32.totalorder %s102, %s104
      %p108 = scmp.eq.s32.totalorder %s21, 0
      %p109 = por %p107, %p108
      %p110 = scmp.ne.s32.totalorder %s102, %s104
      %p111 = scmp.eq.s32.totalorder %s26, 1
      %p112 = por %p110, %p111
      %p113 = scmp.ne.s32.totalorder %s104, %s105
      %p114 = scmp.eq.s32.totalorder %s26, 0
      %p115 = por %p113, %p114
      %p116 = scmp.ne.s32.totalorder %s104, %s105
      %p117 = scmp.eq.s32.totalorder %s27, 1
      %p118 = por %p116, %p117
      %p120 = scmp.ne.s32.totalorder %s105, %s119
      %p121 = scmp.eq.s32.totalorder %s27, 0
      %p122 = por %p120, %p121
      %s124 = sadd.s32 %s123, 1
      %p127 = scmp.eq.s32.totalorder %s21, 1
      %p128 = scmp.ne.s32.totalorder %s123, %s125
      %p129 = scmp.eq.s32.totalorder %s21, 0
      %p130 = por %p128, %p129
      %p131 = scmp.ne.s32.totalorder %s123, %s125
      %p132 = scmp.eq.s32.totalorder %s26, 1
      %p133 = por %p131, %p132
      %p134 = scmp.ne.s32.totalorder %s125, %s126
      %p135 = scmp.eq.s32.totalorder %s26, 0
      %p136 = por %p134, %p135
      %p137 = scmp.ne.s32.totalorder %s125, %s126
      %p138 = scmp.eq.s32.totalorder %s27, 1
      %p139 = por %p137, %p138
      %p141 = scmp.ne.s32.totalorder %s126, %s140
      %p142 = scmp.eq.s32.totalorder %s27, 0
      %p143 = por %p141, %p142
      %s144 = ssub.s32 %s21, %s28
      %p145 = scmp.eq.s32.totalorder %s144, 0
      %s147 = sadd.s32 %s146, 1
      %s148 = scalar_select %p145, %s146, %s147
      %p151 = pneg %p145
      %p152 = scmp.eq.s32.totalorder %s21, 1
      %p153 = por %p151, %p152
      %p154 = scmp.ne.s32.totalorder %s146, %s149
      %p155 = scmp.eq.s32.totalorder %s21, 0
      %p156 = por %p154, %p155
      %p157 = scmp.ne.s32.totalorder %s146, %s149
      %p158 = scmp.eq.s32.totalorder %s26, 1
      %p159 = por %p157, %p158
      %p160 = scmp.ne.s32.totalorder %s149, %s150
      %p161 = scmp.eq.s32.totalorder %s26, 0
      %p162 = por %p160, %p161
      %p163 = scmp.ne.s32.totalorder %s149, %s150
      %p164 = scmp.eq.s32.totalorder %s27, 1
      %p165 = por %p163, %p164
      %p167 = scmp.ne.s32.totalorder %s150, %s166
      %p168 = scmp.eq.s32.totalorder %s27, 0
      %p169 = por %p167, %p168
      %p170 = scmp.le.s32.totalorder 1, %s21
      %p171 = scmp.lt.s32.totalorder %s21, 3
      %p172 = pnand %p170, %p171
      %p173 = pneg %p172
      // Predicated region
      $region9: #{residual_block.3} parent=5 // pred_check
        _
      $region10: #{residual_block.3} parent=5 // pred_check_branch
        %175 = sbr.rel (%p172) target = $region12
      $region11: #{residual_block.3} parent=5 // pred_region
        %s176 = ssub.s32 %s21, 1
        // Predicated region
        $region13: #{residual_block.3} parent=11 // pred_check
          %p177 = pneg %p94
        $region14: #{residual_block.3} parent=11 // pred_check_branch
          %179 = sbr.rel (%p177) target = $region16
        $region15: #{residual_block.3} parent=11 // pred_region
          %s181 = ssub.s32 16, 16
          %182 = vsyncadd [#allocation8], %s181
          %s184 = sshll.u32 [#allocation9], 4
          %s185 = int_to_ptr.vmem [resolvable:$true] %s184
          %187 = dma.hbm_to_vmem [thread:$0]  %s2, 16, %s185, [#allocation8]
        $region16: #{residual_block.3} parent=11 // pred_fallthru
          _
        // Predicated region
        $region17: #{residual_block.3} parent=11 // pred_check
          %p188 = pneg %p115
        $region18: #{residual_block.3} parent=11 // pred_check_branch
          %190 = sbr.rel (%p188) target = $region20
        $region19: #{residual_block.3} parent=11 // pred_region
          %s192 = ssub.s32 16, 16
          %193 = vsyncadd [#allocation11], %s192
          %s195 = sshll.u32 [#allocation10], 4
          %s196 = int_to_ptr.vmem [resolvable:$true] %s195
          %198 = dma.hbm_to_vmem [thread:$0]  %s3, 16, %s196, [#allocation11]
        $region20: #{residual_block.3} parent=11 // pred_fallthru
          _
        // Predicated region
        $region21: #{residual_block.3} parent=11 // pred_check
          %p199 = pneg %p136
        $region22: #{residual_block.3} parent=11 // pred_check_branch
          %201 = sbr.rel (%p199) target = $region24
        $region23: #{residual_block.3} parent=11 // pred_region
          %s203 = ssub.s32 320, 320
          %204 = vsyncadd [#allocation11], %s203
          %s205 = sshll.u32 [#allocation12], 4
          %s206 = int_to_ptr.vmem [resolvable:$true] %s205
          %211 = dma.hbm_to_vmem [thread:$0]  %s4, 320, %s206, [#allocation11], 64, 64, 4
        $region24: #{residual_block.3} parent=11 // pred_fallthru
          _
      $region12: #{residual_block.3} parent=5 // pred_fallthru
        _
      %p212 = scmp.lt.s32.totalorder %s21, 2
      // Predicated region
      $region25: #{residual_block.3} parent=5 // pred_check
        %p213 = pneg %p212
      $region26: #{residual_block.3} parent=5 // pred_check_branch
        %215 = sbr.rel (%p213) target = $region28
      $region27: #{residual_block.3} parent=5 // pred_region
        // Predicated region
        $region29: #{residual_block.3} parent=27 // pred_check
          %p216 = pneg %p41
        $region30: #{residual_block.3} parent=27 // pred_check_branch
          %218 = sbr.rel (%p216) target = $region32
        $region31: #{residual_block.3} parent=27 // pred_region
          %s219 = sand.u32 %s31, 1
          %s220 = scalar_lea.sflag [#allocation5], %s219
          %s221 = sand.u32 %s31, 1
          %s222 = smul.addr %s221, 4
          %s223 = scalar_lea.vmem [#allocation4], %s222
          %s225 = ssub.s32 64, 64
          %226 = vsyncadd %s220, %s225
          %s227 = smul.addr %s21, 2
          %s228 = smul.addr %s227, 32
          %s229 = scalar_lea.hbm %s0, %s228
          %s231 = sshll.u32 %s223, 4
          %s232 = int_to_ptr.vmem [resolvable:$true] %s231
          %234 = dma.hbm_to_vmem [thread:$0]  %s229, 64, %s232, %s220
        $region32: #{residual_block.3} parent=27 // pred_fallthru
          _
        // Predicated region
        $region33: #{residual_block.3} parent=27 // pred_check
          %p235 = pneg %p67
        $region34: #{residual_block.3} parent=27 // pred_check_branch
          %237 = sbr.rel (%p235) target = $region36
        $region35: #{residual_block.3} parent=27 // pred_region
          %s238 = sand.u32 %s21, 1
          %s239 = scalar_lea.sflag [#allocation8], %s238
          %s240 = sand.u32 %s57, 1
          %s241 = smul.addr %s240, 8
          %s242 = scalar_lea.vmem [#allocation7], %s241
          %s244 = ssub.s32 128, 128
          %245 = vsyncadd %s239, %s244
          %s246 = smul.addr %s21, 2
          %s247 = smul.addr %s246, 64
          %s248 = scalar_lea.hbm %s1, %s247
          %s250 = sshll.u32 %s242, 4
          %s251 = int_to_ptr.vmem [resolvable:$true] %s250
          %253 = dma.hbm_to_vmem [thread:$0]  %s248, 128, %s251, %s239
        $region36: #{residual_block.3} parent=27 // pred_fallthru
          _
      $region28: #{residual_block.3} parent=5 // pred_fallthru
        _
      %p254 = scmp.le.s32.totalorder 1, %s21
      %p255 = scmp.lt.s32.totalorder %s21, 3
      %p256 = pnand %p254, %p255
      %p257 = pneg %p256
      // Predicated region
      $region37: #{residual_block.3} parent=5 // pred_check
        _
      $region38: #{residual_block.3} parent=5 // pred_check_branch
        %259 = sbr.rel (%p256) target = $region40
      $region39: #{residual_block.3} parent=5 // pred_region
        %s260 = ssub.s32 %s21, 1
        %s261 = sand.u32 %s34, 1
        %s262 = scalar_lea.sflag [#allocation5], %s261
        %s263 = sand.u32 %s34, 1
        %s264 = smul.addr %s263, 4
        %s265 = scalar_lea.vmem [#allocation4], %s264
        // Predicated region
        $region41: #{residual_block.3} parent=39 // pred_check
          %p266 = pneg %p47
        $region42: #{residual_block.3} parent=39 // pred_check_branch
          %268 = sbr.rel (%p266) target = $region44
        $region43: #{residual_block.3} parent=39 // pred_region
          %269 = dma.done %s262, 64
        $region44: #{residual_block.3} parent=39 // pred_fallthru
          _
        %s270 = sand.u32 %s26, 1
        %s271 = scalar_lea.sflag [#allocation8], %s270
        %s272 = sand.u32 %s60, 1
        %s273 = smul.addr %s272, 8
        %s274 = scalar_lea.vmem [#allocation7], %s273
        // Predicated region
        $region45: #{residual_block.3} parent=39 // pred_check
          %p275 = pneg %p73
        $region46: #{residual_block.3} parent=39 // pred_check_branch
          %277 = sbr.rel (%p275) target = $region48
        $region47: #{residual_block.3} parent=39 // pred_region
          %278 = dma.done %s271, 128
        $region48: #{residual_block.3} parent=39 // pred_fallthru
          _
        // Predicated region
        $region49: #{residual_block.3} parent=39 // pred_check
          %p279 = pneg %p94
        $region50: #{residual_block.3} parent=39 // pred_check_branch
          %281 = sbr.rel (%p279) target = $region52
        $region51: #{residual_block.3} parent=39 // pred_region
          %282 = dma.done [#allocation8], 16
        $region52: #{residual_block.3} parent=39 // pred_fallthru
          _
        // Predicated region
        $region53: #{residual_block.3} parent=39 // pred_check
          %p283 = pneg %p115
        $region54: #{residual_block.3} parent=39 // pred_check_branch
          %285 = sbr.rel (%p283) target = $region56
        $region55: #{residual_block.3} parent=39 // pred_region
          %286 = dma.done [#allocation11], 16
        $region56: #{residual_block.3} parent=39 // pred_fallthru
          _
        // Predicated region
        $region57: #{residual_block.3} parent=39 // pred_check
          %p287 = pneg %p136
        $region58: #{residual_block.3} parent=39 // pred_check_branch
          %289 = sbr.rel (%p287) target = $region60
        $region59: #{residual_block.3} parent=39 // pred_region
          %290 = dma.done [#allocation11], 320
        $region60: #{residual_block.3} parent=39 // pred_fallthru
          _
        %s291 = sand.u32 %s34, 1
        %s292 = scalar_lea.sflag [#allocation5], %s291
        %s293 = sand.u32 %s34, 1
        %s294 = smul.addr %s293, 4
        %s295 = scalar_lea.vmem [#allocation4], %s294
        %p296 = pneg %p47
        %p297 = pneg %p44
        %s298 = sand.u32 %s26, 1
        %s299 = scalar_lea.sflag [#allocation8], %s298
        %s300 = sand.u32 %s60, 1
        %s301 = smul.addr %s300, 8
        %s302 = scalar_lea.vmem [#allocation7], %s301
        %p303 = pneg %p73
        %p304 = pneg %p70
        %p305 = pneg %p94
        %p306 = pneg %p91
        %p307 = pneg %p115
        %p308 = pneg %p112
        %p309 = pneg %p136
        %p310 = pneg %p133
        %p311 = pneg %p162
        %p312 = pneg %p159
        %s313 = sand.u32 %s149, 1
        %s314 = scalar_lea.sflag [#allocation6], %s313
        %s315 = sand.u32 %s149, 1
        %s316 = smul.addr %s315, 8
        %s317 = scalar_lea.vmem [#allocation13], %s316
        %vm319 = vcmask 31744
        %320 = vst.msk [vmem:[#allocation2] sm:$0xff] %vm319, 0.0
        %321 = vst.msk [vmem:[#allocation2 + $0x8] sm:$0xff] %vm319, 0.0
        %322 = vst.msk [vmem:[#allocation2 + $0x10] sm:$0xff] %vm319, 0.0
        %323 = vst.msk [vmem:[#allocation2 + $0x18] sm:$0xff] %vm319, 0.0
        %s324 = scalar_lea.vmem [#allocation2], 544
        %325 = vst.msk [vmem:[%s324] sm:$0xff] %vm319, 0.0
        %326 = vst.msk [vmem:[%s324 + $0x8] sm:$0xff] %vm319, 0.0
        %327 = vst.msk [vmem:[%s324 + $0x10] sm:$0xff] %vm319, 0.0
        %328 = vst.msk [vmem:[%s324 + $0x18] sm:$0xff] %vm319, 0.0
        %s329 = scalar_lea.vmem [#allocation2], 32
        %330 = vst.msk [vmem:[%s329] sm:$0xff] %vm319, 0.0
        %331 = vst.msk [vmem:[%s329 + $0x20] sm:$0xff] %vm319, 0.0
        %332 = vst.msk [vmem:[%s329 + $0x40] sm:$0xff] %vm319, 0.0
        %333 = vst.msk [vmem:[%s329 + $0x60] sm:$0xff] %vm319, 0.0
        %334 = vst.msk [vmem:[%s329 + $0x80] sm:$0xff] %vm319, 0.0
        %335 = vst.msk [vmem:[%s329 + $0xa0] sm:$0xff] %vm319, 0.0
        %336 = vst.msk [vmem:[%s329 + $0xc0] sm:$0xff] %vm319, 0.0
        %337 = vst.msk [vmem:[%s329 + $0xe0] sm:$0xff] %vm319, 0.0
        %338 = vst.msk [vmem:[%s329 + $0x100] sm:$0xff] %vm319, 0.0
        %339 = vst.msk [vmem:[%s329 + $0x120] sm:$0xff] %vm319, 0.0
        %340 = vst.msk [vmem:[%s329 + $0x140] sm:$0xff] %vm319, 0.0
        %341 = vst.msk [vmem:[%s329 + $0x160] sm:$0xff] %vm319, 0.0
        %342 = vst.msk [vmem:[%s329 + $0x180] sm:$0xff] %vm319, 0.0
        %343 = vst.msk [vmem:[%s329 + $0x1a0] sm:$0xff] %vm319, 0.0
        %344 = vst.msk [vmem:[%s329 + $0x1c0] sm:$0xff] %vm319, 0.0
        %345 = vst.msk [vmem:[%s329 + $0x1e0] sm:$0xff] %vm319, 0.0
        %346 = vst.msk [vmem:[%s329 + $0x18] sm:$0xff] %vm319, 0.0
        %347 = vst.msk [vmem:[%s329 + $0x38] sm:$0xff] %vm319, 0.0
        %348 = vst.msk [vmem:[%s329 + $0x58] sm:$0xff] %vm319, 0.0
        %349 = vst.msk [vmem:[%s329 + $0x78] sm:$0xff] %vm319, 0.0
        %350 = vst.msk [vmem:[%s329 + $0x98] sm:$0xff] %vm319, 0.0
        %351 = vst.msk [vmem:[%s329 + $0xb8] sm:$0xff] %vm319, 0.0
        %352 = vst.msk [vmem:[%s329 + $0xd8] sm:$0xff] %vm319, 0.0
        %353 = vst.msk [vmem:[%s329 + $0xf8] sm:$0xff] %vm319, 0.0
        %354 = vst.msk [vmem:[%s329 + $0x118] sm:$0xff] %vm319, 0.0
        %355 = vst.msk [vmem:[%s329 + $0x138] sm:$0xff] %vm319, 0.0
        %356 = vst.msk [vmem:[%s329 + $0x158] sm:$0xff] %vm319, 0.0
        %357 = vst.msk [vmem:[%s329 + $0x178] sm:$0xff] %vm319, 0.0
        %358 = vst.msk [vmem:[%s329 + $0x198] sm:$0xff] %vm319, 0.0
        %359 = vst.msk [vmem:[%s329 + $0x1b8] sm:$0xff] %vm319, 0.0
        %360 = vst.msk [vmem:[%s329 + $0x1d8] sm:$0xff] %vm319, 0.0
        %361 = vst.msk [vmem:[%s329 + $0x1f8] sm:$0xff] %vm319, 0.0
        %v362 = vld [vmem:[#allocation9] sm:$0x1]
        %v363 = vld [vmem:[#allocation10] sm:$0x1]
        %v364 = vld [vmem:[%s265] sm:$0xf]
        %v365 = vunpack.c.l.bf16 %v364
        %v367 = vcombine.high %v365, %v365
        %369 = vxpose.xlu0.b32.start [1/16] %v365, 128
        %370 = vxpose.xlu0.b32.cont [2/16] 0.0, 128
        %371 = vxpose.xlu0.b32.cont [3/16] 0.0, 128
        %372 = vxpose.xlu0.b32.cont [4/16] 0.0, 128
        %373 = vxpose.xlu0.b32.cont [5/16] 0.0, 128
        %374 = vxpose.xlu0.b32.cont [6/16] 0.0, 128
        %375 = vxpose.xlu0.b32.cont [7/16] 0.0, 128
        %376 = vxpose.xlu0.b32.cont [8/16] 0.0, 128
        %377 = vxpose.xlu0.b32.cont [9/16] 0.0, 128
        %378 = vxpose.xlu0.b32.cont [10/16] 0.0, 128
        %379 = vxpose.xlu0.b32.cont [11/16] 0.0, 128
        %380 = vxpose.xlu0.b32.cont [12/16] 0.0, 128
        %381 = vxpose.xlu0.b32.cont [13/16] 0.0, 128
        %382 = vxpose.xlu0.b32.cont [14/16] 0.0, 128
        %383 = vxpose.xlu0.b32.cont [15/16] 0.0, 128
        %384 = vxpose.xlu0.b32.end [16/16] 0.0, 128
        %v385 = vpop.trf.xlu0
        %v386 = vpop.trf.xlu0
        %v387 = vpop.trf.xlu0
        %v388 = vpop.trf.xlu0
        %v389 = vpop.trf.xlu0
        %v390 = vpop.trf.xlu0
        %v391 = vpop.trf.xlu0
        %v392 = vpop.trf.xlu0
        %v393 = vpop.trf.xlu0
        %v394 = vpop.trf.xlu0
        %v395 = vpop.trf.xlu0
        %v396 = vpop.trf.xlu0
        %v397 = vpop.trf.xlu0
        %v398 = vpop.trf.xlu0
        %v399 = vpop.trf.xlu0
        %v400 = vpop.trf.xlu0
        %401 = vxpose.xlu0.b32.start [1/16] %v367, 128
        %402 = vxpose.xlu0.b32.cont [2/16] 0.0, 128
        %403 = vxpose.xlu0.b32.cont [3/16] 0.0, 128
        %404 = vxpose.xlu0.b32.cont [4/16] 0.0, 128
        %405 = vxpose.xlu0.b32.cont [5/16] 0.0, 128
        %406 = vxpose.xlu0.b32.cont [6/16] 0.0, 128
        %407 = vxpose.xlu0.b32.cont [7/16] 0.0, 128
        %408 = vxpose.xlu0.b32.cont [8/16] 0.0, 128
        %409 = vxpose.xlu0.b32.cont [9/16] 0.0, 128
        %410 = vxpose.xlu0.b32.cont [10/16] 0.0, 128
        %411 = vxpose.xlu0.b32.cont [11/16] 0.0, 128
        %412 = vxpose.xlu0.b32.cont [12/16] 0.0, 128
        %413 = vxpose.xlu0.b32.cont [13/16] 0.0, 128
        %414 = vxpose.xlu0.b32.cont [14/16] 0.0, 128
        %415 = vxpose.xlu0.b32.cont [15/16] 0.0, 128
        %416 = vxpose.xlu0.b32.end [16/16] 0.0, 128
        %v417 = vpop.trf.xlu0
        %v418 = vpop.trf.xlu0
        %v419 = vpop.trf.xlu0
        %v420 = vpop.trf.xlu0
        %v421 = vpop.trf.xlu0
        %v422 = vpop.trf.xlu0
        %v423 = vpop.trf.xlu0
        %v424 = vpop.trf.xlu0
        %v425 = vpop.trf.xlu0
        %v426 = vpop.trf.xlu0
        %v427 = vpop.trf.xlu0
        %v428 = vpop.trf.xlu0
        %v429 = vpop.trf.xlu0
        %v430 = vpop.trf.xlu0
        %v431 = vpop.trf.xlu0
        %v432 = vpop.trf.xlu0
        %v434 = vlaneseq
        %v435 = vshrl.u32 %v434, 7
        %v436 = vsub.s32 0, %v435
        %v437 = vrot.slane %v362, %v436
        %v439 = vmul.f32 %v385, %v437
        %v440 = vmul.f32 %v386, %v437
        %v441 = vmul.f32 %v387, %v437
        %v442 = vmul.f32 %v388, %v437
        %v443 = vmul.f32 %v389, %v437
        %v444 = vmul.f32 %v390, %v437
        %v445 = vmul.f32 %v391, %v437
        %v446 = vmul.f32 %v392, %v437
        %v447 = vmul.f32 %v393, %v437
        %v448 = vmul.f32 %v394, %v437
        %v449 = vmul.f32 %v395, %v437
        %v450 = vmul.f32 %v396, %v437
        %v451 = vmul.f32 %v397, %v437
        %v452 = vmul.f32 %v398, %v437
        %v453 = vmul.f32 %v399, %v437
        %v454 = vmul.f32 %v400, %v437
        %v455 = vmul.f32 %v417, %v437
        %v456 = vmul.f32 %v418, %v437
        %v457 = vmul.f32 %v419, %v437
        %v458 = vmul.f32 %v420, %v437
        %v459 = vmul.f32 %v421, %v437
        %v460 = vmul.f32 %v422, %v437
        %v461 = vmul.f32 %v423, %v437
        %v462 = vmul.f32 %v424, %v437
        %v463 = vmul.f32 %v425, %v437
        %v464 = vmul.f32 %v426, %v437
        %v465 = vmul.f32 %v427, %v437
        %v466 = vmul.f32 %v428, %v437
        %v467 = vmul.f32 %v429, %v437
        %v468 = vmul.f32 %v430, %v437
        %v469 = vmul.f32 %v431, %v437
        %v470 = vmul.f32 %v432, %v437
        %v472 = vlaneseq
        %v473 = vshrl.u32 %v472, 7
        %v474 = vsub.s32 0, %v473
        %v475 = vrot.slane %v363, %v474
        %v477 = vadd.f32 %v439, %v475
        %v478 = vadd.f32 %v440, %v475
        %v479 = vadd.f32 %v441, %v475
        %v480 = vadd.f32 %v442, %v475
        %v481 = vadd.f32 %v443, %v475
        %v482 = vadd.f32 %v444, %v475
        %v483 = vadd.f32 %v445, %v475
        %v484 = vadd.f32 %v446, %v475
        %v485 = vadd.f32 %v447, %v475
        %v486 = vadd.f32 %v448, %v475
        %v487 = vadd.f32 %v449, %v475
        %v488 = vadd.f32 %v450, %v475
        %v489 = vadd.f32 %v451, %v475
        %v490 = vadd.f32 %v452, %v475
        %v491 = vadd.f32 %v453, %v475
        %v492 = vadd.f32 %v454, %v475
        %v493 = vadd.f32 %v455, %v475
        %v494 = vadd.f32 %v456, %v475
        %v495 = vadd.f32 %v457, %v475
        %v496 = vadd.f32 %v458, %v475
        %v497 = vadd.f32 %v459, %v475
        %v498 = vadd.f32 %v460, %v475
        %v499 = vadd.f32 %v461, %v475
        %v500 = vadd.f32 %v462, %v475
        %v501 = vadd.f32 %v463, %v475
        %v502 = vadd.f32 %v464, %v475
        %v503 = vadd.f32 %v465, %v475
        %v504 = vadd.f32 %v466, %v475
        %v505 = vadd.f32 %v467, %v475
        %v506 = vadd.f32 %v468, %v475
        %v507 = vadd.f32 %v469, %v475
        %v508 = vadd.f32 %v470, %v475
        %v509 = vxor.u32 %v477, 2147483648
        %v510 = vxor.u32 %v478, 2147483648
        %v511 = vxor.u32 %v479, 2147483648
        %v512 = vxor.u32 %v480, 2147483648
        %v513 = vxor.u32 %v481, 2147483648
        %v514 = vxor.u32 %v482, 2147483648
        %v515 = vxor.u32 %v483, 2147483648
        %v516 = vxor.u32 %v484, 2147483648
        %v517 = vxor.u32 %v485, 2147483648
        %v518 = vxor.u32 %v486, 2147483648
        %v519 = vxor.u32 %v487, 2147483648
        %v520 = vxor.u32 %v488, 2147483648
        %v521 = vxor.u32 %v489, 2147483648
        %v522 = vxor.u32 %v490, 2147483648
        %v523 = vxor.u32 %v491, 2147483648
        %v524 = vxor.u32 %v492, 2147483648
        %v525 = vxor.u32 %v493, 2147483648
        %v526 = vxor.u32 %v494, 2147483648
        %v527 = vxor.u32 %v495, 2147483648
        %v528 = vxor.u32 %v496, 2147483648
        %v529 = vxor.u32 %v497, 2147483648
        %v530 = vxor.u32 %v498, 2147483648
        %v531 = vxor.u32 %v499, 2147483648
        %v532 = vxor.u32 %v500, 2147483648
        %v533 = vxor.u32 %v501, 2147483648
        %v534 = vxor.u32 %v502, 2147483648
        %v535 = vxor.u32 %v503, 2147483648
        %v536 = vxor.u32 %v504, 2147483648
        %v537 = vxor.u32 %v505, 2147483648
        %v538 = vxor.u32 %v506, 2147483648
        %v539 = vxor.u32 %v507, 2147483648
        %v540 = vxor.u32 %v508, 2147483648
        %v541 = vmul.f32 %v509, 1.442695
        %v542 = vpow.pop %v541
        %v543 = vmul.f32 %v510, 1.442695
        %v544 = vpow.pop %v543
        %v545 = vmul.f32 %v511, 1.442695
        %v546 = vpow.pop %v545
        %v547 = vmul.f32 %v512, 1.442695
        %v548 = vpow.pop %v547
        %v549 = vmul.f32 %v513, 1.442695
        %v550 = vpow.pop %v549
        %v551 = vmul.f32 %v514, 1.442695
        %v552 = vpow.pop %v551
        %v553 = vmul.f32 %v515, 1.442695
        %v554 = vpow.pop %v553
        %v555 = vmul.f32 %v516, 1.442695
        %v556 = vpow.pop %v555
        %v557 = vmul.f32 %v517, 1.442695
        %v558 = vpow.pop %v557
        %v559 = vmul.f32 %v518, 1.442695
        %v560 = vpow.pop %v559
        %v561 = vmul.f32 %v519, 1.442695
        %v562 = vpow.pop %v561
        %v563 = vmul.f32 %v520, 1.442695
        %v564 = vpow.pop %v563
        %v565 = vmul.f32 %v521, 1.442695
        %v566 = vpow.pop %v565
        %v567 = vmul.f32 %v522, 1.442695
        %v568 = vpow.pop %v567
        %v569 = vmul.f32 %v523, 1.442695
        %v570 = vpow.pop %v569
        %v571 = vmul.f32 %v524, 1.442695
        %v572 = vpow.pop %v571
        %v573 = vmul.f32 %v525, 1.442695
        %v574 = vpow.pop %v573
        %v575 = vmul.f32 %v526, 1.442695
        %v576 = vpow.pop %v575
        %v577 = vmul.f32 %v527, 1.442695
        %v578 = vpow.pop %v577
        %v579 = vmul.f32 %v528, 1.442695
        %v580 = vpow.pop %v579
        %v581 = vmul.f32 %v529, 1.442695
        %v582 = vpow.pop %v581
        %v583 = vmul.f32 %v530, 1.442695
        %v584 = vpow.pop %v583
        %v585 = vmul.f32 %v531, 1.442695
        %v586 = vpow.pop %v585
        %v587 = vmul.f32 %v532, 1.442695
        %v588 = vpow.pop %v587
        %v589 = vmul.f32 %v533, 1.442695
        %v590 = vpow.pop %v589
        %v591 = vmul.f32 %v534, 1.442695
        %v592 = vpow.pop %v591
        %v593 = vmul.f32 %v535, 1.442695
        %v594 = vpow.pop %v593
        %v595 = vmul.f32 %v536, 1.442695
        %v596 = vpow.pop %v595
        %v597 = vmul.f32 %v537, 1.442695
        %v598 = vpow.pop %v597
        %v599 = vmul.f32 %v538, 1.442695
        %v600 = vpow.pop %v599
        %v601 = vmul.f32 %v539, 1.442695
        %v602 = vpow.pop %v601
        %v603 = vmul.f32 %v540, 1.442695
        %v604 = vpow.pop %v603
        %v605 = vadd.f32 %v542, 1.0
        %v606 = vadd.f32 %v544, 1.0
        %v607 = vadd.f32 %v546, 1.0
        %v608 = vadd.f32 %v548, 1.0
        %v609 = vadd.f32 %v550, 1.0
        %v610 = vadd.f32 %v552, 1.0
        %v611 = vadd.f32 %v554, 1.0
        %v612 = vadd.f32 %v556, 1.0
        %v613 = vadd.f32 %v558, 1.0
        %v614 = vadd.f32 %v560, 1.0
        %v615 = vadd.f32 %v562, 1.0
        %v616 = vadd.f32 %v564, 1.0
        %v617 = vadd.f32 %v566, 1.0
        %v618 = vadd.f32 %v568, 1.0
        %v619 = vadd.f32 %v570, 1.0
        %v620 = vadd.f32 %v572, 1.0
        %v621 = vadd.f32 %v574, 1.0
        %v622 = vadd.f32 %v576, 1.0
        %v623 = vadd.f32 %v578, 1.0
        %v624 = vadd.f32 %v580, 1.0
        %v625 = vadd.f32 %v582, 1.0
        %v626 = vadd.f32 %v584, 1.0
        %v627 = vadd.f32 %v586, 1.0
        %v628 = vadd.f32 %v588, 1.0
        %v629 = vadd.f32 %v590, 1.0
        %v630 = vadd.f32 %v592, 1.0
        %v631 = vadd.f32 %v594, 1.0
        %v632 = vadd.f32 %v596, 1.0
        %v633 = vadd.f32 %v598, 1.0
        %v634 = vadd.f32 %v600, 1.0
        %v635 = vadd.f32 %v602, 1.0
        %v636 = vadd.f32 %v604, 1.0
        %v637 = vrcp.pop %v605
        %v638 = vmul.f32 1.0, %v637
        %v639 = vrcp.pop %v606
        %v640 = vmul.f32 1.0, %v639
        %v641 = vrcp.pop %v607
        %v642 = vmul.f32 1.0, %v641
        %v643 = vrcp.pop %v608
        %v644 = vmul.f32 1.0, %v643
        %v645 = vrcp.pop %v609
        %v646 = vmul.f32 1.0, %v645
        %v647 = vrcp.pop %v610
        %v648 = vmul.f32 1.0, %v647
        %v649 = vrcp.pop %v611
        %v650 = vmul.f32 1.0, %v649
        %v651 = vrcp.pop %v612
        %v652 = vmul.f32 1.0, %v651
        %v653 = vrcp.pop %v613
        %v654 = vmul.f32 1.0, %v653
        %v655 = vrcp.pop %v614
        %v656 = vmul.f32 1.0, %v655
        %v657 = vrcp.pop %v615
        %v658 = vmul.f32 1.0, %v657
        %v659 = vrcp.pop %v616
        %v660 = vmul.f32 1.0, %v659
        %v661 = vrcp.pop %v617
        %v662 = vmul.f32 1.0, %v661
        %v663 = vrcp.pop %v618
        %v664 = vmul.f32 1.0, %v663
        %v665 = vrcp.pop %v619
        %v666 = vmul.f32 1.0, %v665
        %v667 = vrcp.pop %v620
        %v668 = vmul.f32 1.0, %v667
        %v669 = vrcp.pop %v621
        %v670 = vmul.f32 1.0, %v669
        %v671 = vrcp.pop %v622
        %v672 = vmul.f32 1.0, %v671
        %v673 = vrcp.pop %v623
        %v674 = vmul.f32 1.0, %v673
        %v675 = vrcp.pop %v624
        %v676 = vmul.f32 1.0, %v675
        %v677 = vrcp.pop %v625
        %v678 = vmul.f32 1.0, %v677
        %v679 = vrcp.pop %v626
        %v680 = vmul.f32 1.0, %v679
        %v681 = vrcp.pop %v627
        %v682 = vmul.f32 1.0, %v681
        %v683 = vrcp.pop %v628
        %v684 = vmul.f32 1.0, %v683
        %v685 = vrcp.pop %v629
        %v686 = vmul.f32 1.0, %v685
        %v687 = vrcp.pop %v630
        %v688 = vmul.f32 1.0, %v687
        %v689 = vrcp.pop %v631
        %v690 = vmul.f32 1.0, %v689
        %v691 = vrcp.pop %v632
        %v692 = vmul.f32 1.0, %v691
        %v693 = vrcp.pop %v633
        %v694 = vmul.f32 1.0, %v693
        %v695 = vrcp.pop %v634
        %v696 = vmul.f32 1.0, %v695
        %v697 = vrcp.pop %v635
        %v698 = vmul.f32 1.0, %v697
        %v699 = vrcp.pop %v636
        %v700 = vmul.f32 1.0, %v699
        %v701 = vmul.f32 %v477, %v638
        %v702 = vmul.f32 %v478, %v640
        %v703 = vmul.f32 %v479, %v642
        %v704 = vmul.f32 %v480, %v644
        %v705 = vmul.f32 %v481, %v646
        %v706 = vmul.f32 %v482, %v648
        %v707 = vmul.f32 %v483, %v650
        %v708 = vmul.f32 %v484, %v652
        %v709 = vmul.f32 %v485, %v654
        %v710 = vmul.f32 %v486, %v656
        %v711 = vmul.f32 %v487, %v658
        %v712 = vmul.f32 %v488, %v660
        %v713 = vmul.f32 %v489, %v662
        %v714 = vmul.f32 %v490, %v664
        %v715 = vmul.f32 %v491, %v666
        %v716 = vmul.f32 %v492, %v668
        %v717 = vmul.f32 %v493, %v670
        %v718 = vmul.f32 %v494, %v672
        %v719 = vmul.f32 %v495, %v674
        %v720 = vmul.f32 %v496, %v676
        %v721 = vmul.f32 %v497, %v678
        %v722 = vmul.f32 %v498, %v680
        %v723 = vmul.f32 %v499, %v682
        %v724 = vmul.f32 %v500, %v684
        %v725 = vmul.f32 %v501, %v686
        %v726 = vmul.f32 %v502, %v688
        %v727 = vmul.f32 %v503, %v690
        %v728 = vmul.f32 %v504, %v692
        %v729 = vmul.f32 %v505, %v694
        %v730 = vmul.f32 %v506, %v696
        %v731 = vmul.f32 %v507, %v698
        %v732 = vmul.f32 %v508, %v700
        %733 = vst.msk [vmem:[%s329 + $0x8] sm:$0xff] %vm319, %v701
        %734 = vst.msk [vmem:[%s329 + $0x10] sm:$0xff] %vm319, %v702
        %735 = vst.msk [vmem:[%s329 + $0x28] sm:$0xff] %vm319, %v703
        %736 = vst.msk [vmem:[%s329 + $0x30] sm:$0xff] %vm319, %v704
        %737 = vst.msk [vmem:[%s329 + $0x48] sm:$0xff] %vm319, %v705
        %738 = vst.msk [vmem:[%s329 + $0x50] sm:$0xff] %vm319, %v706
        %739 = vst.msk [vmem:[%s329 + $0x68] sm:$0xff] %vm319, %v707
        %740 = vst.msk [vmem:[%s329 + $0x70] sm:$0xff] %vm319, %v708
        %741 = vst.msk [vmem:[%s329 + $0x88] sm:$0xff] %vm319, %v709
        %742 = vst.msk [vmem:[%s329 + $0x90] sm:$0xff] %vm319, %v710
        %743 = vst.msk [vmem:[%s329 + $0xa8] sm:$0xff] %vm319, %v711
        %744 = vst.msk [vmem:[%s329 + $0xb0] sm:$0xff] %vm319, %v712
        %745 = vst.msk [vmem:[%s329 + $0xc8] sm:$0xff] %vm319, %v713
        %746 = vst.msk [vmem:[%s329 + $0xd0] sm:$0xff] %vm319, %v714
        %747 = vst.msk [vmem:[%s329 + $0xe8] sm:$0xff] %vm319, %v715
        %748 = vst.msk [vmem:[%s329 + $0xf0] sm:$0xff] %vm319, %v716
        %749 = vst.msk [vmem:[%s329 + $0x108] sm:$0xff] %vm319, %v717
        %750 = vst.msk [vmem:[%s329 + $0x110] sm:$0xff] %vm319, %v718
        %751 = vst.msk [vmem:[%s329 + $0x128] sm:$0xff] %vm319, %v719
        %752 = vst.msk [vmem:[%s329 + $0x130] sm:$0xff] %vm319, %v720
        %753 = vst.msk [vmem:[%s329 + $0x148] sm:$0xff] %vm319, %v721
        %754 = vst.msk [vmem:[%s329 + $0x150] sm:$0xff] %vm319, %v722
        %755 = vst.msk [vmem:[%s329 + $0x168] sm:$0xff] %vm319, %v723
        %756 = vst.msk [vmem:[%s329 + $0x170] sm:$0xff] %vm319, %v724
        %757 = vst.msk [vmem:[%s329 + $0x188] sm:$0xff] %vm319, %v725
        %758 = vst.msk [vmem:[%s329 + $0x190] sm:$0xff] %vm319, %v726
        %759 = vst.msk [vmem:[%s329 + $0x1a8] sm:$0xff] %vm319, %v727
        %760 = vst.msk [vmem:[%s329 + $0x1b0] sm:$0xff] %vm319, %v728
        %761 = vst.msk [vmem:[%s329 + $0x1c8] sm:$0xff] %vm319, %v729
        %762 = vst.msk [vmem:[%s329 + $0x1d0] sm:$0xff] %vm319, %v730
        %763 = vst.msk [vmem:[%s329 + $0x1e8] sm:$0xff] %vm319, %v731
        %764 = vst.msk [vmem:[%s329 + $0x1f0] sm:$0xff] %vm319, %v732
        %v765 = vld [vmem:[#allocation2 + $0x7] sm:$0xff]
        %v766 = vld [vmem:[#allocation2 + $0xf] sm:$0xff]
        %v767 = vld [vmem:[#allocation2 + $0x27] sm:$0xff]
        %v768 = vld [vmem:[#allocation2 + $0x2f] sm:$0xff]
        %v769 = vld [vmem:[#allocation2 + $0x47] sm:$0xff]
        %v770 = vld [vmem:[#allocation2 + $0x4f] sm:$0xff]
        %v771 = vld [vmem:[#allocation2 + $0x67] sm:$0xff]
        %v772 = vld [vmem:[#allocation2 + $0x6f] sm:$0xff]
        %v773 = vld [vmem:[#allocation2 + $0x87] sm:$0xff]
        %v774 = vld [vmem:[#allocation2 + $0x8f] sm:$0xff]
        %v775 = vld [vmem:[#allocation2 + $0xa7] sm:$0xff]
        %v776 = vld [vmem:[#allocation2 + $0xaf] sm:$0xff]
        %v777 = vld [vmem:[#allocation2 + $0xc7] sm:$0xff]
        %v778 = vld [vmem:[#allocation2 + $0xcf] sm:$0xff]
        %v779 = vld [vmem:[#allocation2 + $0xe7] sm:$0xff]
        %v780 = vld [vmem:[#allocation2 + $0xef] sm:$0xff]
        %v781 = vld [vmem:[#allocation2 + $0x107] sm:$0xff]
        %v782 = vld [vmem:[#allocation2 + $0x10f] sm:$0xff]
        %v783 = vld [vmem:[#allocation2 + $0x127] sm:$0xff]
        %v784 = vld [vmem:[#allocation2 + $0x12f] sm:$0xff]
        %v785 = vld [vmem:[#allocation2 + $0x147] sm:$0xff]
        %v786 = vld [vmem:[#allocation2 + $0x14f] sm:$0xff]
        %v787 = vld [vmem:[#allocation2 + $0x167] sm:$0xff]
        %v788 = vld [vmem:[#allocation2 + $0x16f] sm:$0xff]
        %v789 = vld [vmem:[#allocation2 + $0x187] sm:$0xff]
        %v790 = vld [vmem:[#allocation2 + $0x18f] sm:$0xff]
        %v791 = vld [vmem:[#allocation2 + $0x1a7] sm:$0xff]
        %v792 = vld [vmem:[#allocation2 + $0x1af] sm:$0xff]
        %v793 = vld [vmem:[#allocation2 + $0x1c7] sm:$0xff]
        %v794 = vld [vmem:[#allocation2 + $0x1cf] sm:$0xff]
        %v795 = vld [vmem:[#allocation2 + $0x1e7] sm:$0xff]
        %v796 = vld [vmem:[#allocation2 + $0x1ef] sm:$0xff]
        %v797 = vpack.c.bf16 %v766, %v765
        %v798 = vpack.c.bf16 %v768, %v767
        %v799 = vpack.c.bf16 %v770, %v769
        %v800 = vpack.c.bf16 %v772, %v771
        %v801 = vpack.c.bf16 %v774, %v773
        %v802 = vpack.c.bf16 %v776, %v775
        %v803 = vpack.c.bf16 %v778, %v777
        %v804 = vpack.c.bf16 %v780, %v779
        %v805 = vpack.c.bf16 %v782, %v781
        %v806 = vpack.c.bf16 %v784, %v783
        %v807 = vpack.c.bf16 %v786, %v785
        %v808 = vpack.c.bf16 %v788, %v787
        %v809 = vpack.c.bf16 %v790, %v789
        %v810 = vpack.c.bf16 %v792, %v791
        %v811 = vpack.c.bf16 %v794, %v793
        %v812 = vpack.c.bf16 %v796, %v795
        %813 = vst.msk [vmem:[#allocation3] sm:$0xff] %vm319, %v797
        %814 = vst.msk [vmem:[#allocation3 + $0x8] sm:$0xff] %vm319, %v798
        %815 = vst.msk [vmem:[#allocation3 + $0x10] sm:$0xff] %vm319, %v799
        %816 = vst.msk [vmem:[#allocation3 + $0x18] sm:$0xff] %vm319, %v800
        %817 = vst.msk [vmem:[#allocation3 + $0x20] sm:$0xff] %vm319, %v801
        %818 = vst.msk [vmem:[#allocation3 + $0x28] sm:$0xff] %vm319, %v802
        %819 = vst.msk [vmem:[#allocation3 + $0x30] sm:$0xff] %vm319, %v803
        %820 = vst.msk [vmem:[#allocation3 + $0x38] sm:$0xff] %vm319, %v804
        %821 = vst.msk [vmem:[#allocation3 + $0x40] sm:$0xff] %vm319, %v805
        %822 = vst.msk [vmem:[#allocation3 + $0x48] sm:$0xff] %vm319, %v806
        %823 = vst.msk [vmem:[#allocation3 + $0x50] sm:$0xff] %vm319, %v807
        %824 = vst.msk [vmem:[#allocation3 + $0x58] sm:$0xff] %vm319, %v808
        %825 = vst.msk [vmem:[#allocation3 + $0x60] sm:$0xff] %vm319, %v809
        %826 = vst.msk [vmem:[#allocation3 + $0x68] sm:$0xff] %vm319, %v810
        %827 = vst.msk [vmem:[#allocation3 + $0x70] sm:$0xff] %vm319, %v811
        %828 = vst.msk [vmem:[#allocation3 + $0x78] sm:$0xff] %vm319, %v812
        %v829 = vld [vmem:[#allocation2 + $0x8] sm:$0xff]
        %v830 = vld [vmem:[#allocation2 + $0x10] sm:$0xff]
        %v831 = vld [vmem:[#allocation2 + $0x28] sm:$0xff]
        %v832 = vld [vmem:[#allocation2 + $0x30] sm:$0xff]
        %v833 = vld [vmem:[#allocation2 + $0x48] sm:$0xff]
        %v834 = vld [vmem:[#allocation2 + $0x50] sm:$0xff]
        %v835 = vld [vmem:[#allocation2 + $0x68] sm:$0xff]
        %v836 = vld [vmem:[#allocation2 + $0x70] sm:$0xff]
        %v837 = vld [vmem:[#allocation2 + $0x88] sm:$0xff]
        %v838 = vld [vmem:[#allocation2 + $0x90] sm:$0xff]
        %v839 = vld [vmem:[#allocation2 + $0xa8] sm:$0xff]
        %v840 = vld [vmem:[#allocation2 + $0xb0] sm:$0xff]
        %v841 = vld [vmem:[#allocation2 + $0xc8] sm:$0xff]
        %v842 = vld [vmem:[#allocation2 + $0xd0] sm:$0xff]
        %v843 = vld [vmem:[#allocation2 + $0xe8] sm:$0xff]
        %v844 = vld [vmem:[#allocation2 + $0xf0] sm:$0xff]
        %v845 = vld [vmem:[#allocation2 + $0x108] sm:$0xff]
        %v846 = vld [vmem:[#allocation2 + $0x110] sm:$0xff]
        %v847 = vld [vmem:[#allocation2 + $0x128] sm:$0xff]
        %v848 = vld [vmem:[#allocation2 + $0x130] sm:$0xff]
        %v849 = vld [vmem:[#allocation2 + $0x148] sm:$0xff]
        %v850 = vld [vmem:[#allocation2 + $0x150] sm:$0xff]
        %v851 = vld [vmem:[#allocation2 + $0x168] sm:$0xff]
        %v852 = vld [vmem:[#allocation2 + $0x170] sm:$0xff]
        %v853 = vld [vmem:[#allocation2 + $0x188] sm:$0xff]
        %v854 = vld [vmem:[#allocation2 + $0x190] sm:$0xff]
        %v855 = vld [vmem:[#allocation2 + $0x1a8] sm:$0xff]
        %v856 = vld [vmem:[#allocation2 + $0x1b0] sm:$0xff]
        %v857 = vld [vmem:[#allocation2 + $0x1c8] sm:$0xff]
        %v858 = vld [vmem:[#allocation2 + $0x1d0] sm:$0xff]
        %v859 = vld [vmem:[#allocation2 + $0x1e8] sm:$0xff]
        %v860 = vld [vmem:[#allocation2 + $0x1f0] sm:$0xff]
        %v861 = vpack.c.bf16 %v830, %v829
        %v862 = vpack.c.bf16 %v832, %v831
        %v863 = vpack.c.bf16 %v834, %v833
        %v864 = vpack.c.bf16 %v836, %v835
        %v865 = vpack.c.bf16 %v838, %v837
        %v866 = vpack.c.bf16 %v840, %v839
        %v867 = vpack.c.bf16 %v842, %v841
        %v868 = vpack.c.bf16 %v844, %v843
        %v869 = vpack.c.bf16 %v846, %v845
        %v870 = vpack.c.bf16 %v848, %v847
        %v871 = vpack.c.bf16 %v850, %v849
        %v872 = vpack.c.bf16 %v852, %v851
        %v873 = vpack.c.bf16 %v854, %v853
        %v874 = vpack.c.bf16 %v856, %v855
        %v875 = vpack.c.bf16 %v858, %v857
        %v876 = vpack.c.bf16 %v860, %v859
        %893 = vrot.lane.b32.xlu0 %v861, 4
        %v894 = vpop.permute.xlu0 %893
        %895 = vrot.lane.b32.xlu0 %v862, 4
        %v896 = vpop.permute.xlu0 %895
        %897 = vrot.lane.b32.xlu0 %v863, 4
        %v898 = vpop.permute.xlu0 %897
        %899 = vrot.lane.b32.xlu0 %v864, 4
        %v900 = vpop.permute.xlu0 %899
        %901 = vrot.lane.b32.xlu0 %v865, 4
        %v902 = vpop.permute.xlu0 %901
        %903 = vrot.lane.b32.xlu0 %v866, 4
        %v904 = vpop.permute.xlu0 %903
        %905 = vrot.lane.b32.xlu0 %v867, 4
        %v906 = vpop.permute.xlu0 %905
        %907 = vrot.lane.b32.xlu0 %v868, 4
        %v908 = vpop.permute.xlu0 %907
        %909 = vrot.lane.b32.xlu0 %v869, 4
        %v910 = vpop.permute.xlu0 %909
        %911 = vrot.lane.b32.xlu0 %v870, 4
        %v912 = vpop.permute.xlu0 %911
        %913 = vrot.lane.b32.xlu0 %v871, 4
        %v914 = vpop.permute.xlu0 %913
        %915 = vrot.lane.b32.xlu0 %v872, 4
        %v916 = vpop.permute.xlu0 %915
        %917 = vrot.lane.b32.xlu0 %v873, 4
        %v918 = vpop.permute.xlu0 %917
        %919 = vrot.lane.b32.xlu0 %v874, 4
        %v920 = vpop.permute.xlu0 %919
        %921 = vrot.lane.b32.xlu0 %v875, 4
        %v922 = vpop.permute.xlu0 %921
        %923 = vrot.lane.b32.xlu0 %v876, 4
        %v924 = vpop.permute.xlu0 %923
        %vm941 = vcmask 64544
        %942 = vst.msk [vmem:[#allocation3] sm:$0xff] %vm941, %v894
        %943 = vst.msk [vmem:[#allocation3 + $0x8] sm:$0xff] %vm941, %v896
        %944 = vst.msk [vmem:[#allocation3 + $0x10] sm:$0xff] %vm941, %v898
        %945 = vst.msk [vmem:[#allocation3 + $0x18] sm:$0xff] %vm941, %v900
        %946 = vst.msk [vmem:[#allocation3 + $0x20] sm:$0xff] %vm941, %v902
        %947 = vst.msk [vmem:[#allocation3 + $0x28] sm:$0xff] %vm941, %v904
        %948 = vst.msk [vmem:[#allocation3 + $0x30] sm:$0xff] %vm941, %v906
        %949 = vst.msk [vmem:[#allocation3 + $0x38] sm:$0xff] %vm941, %v908
        %950 = vst.msk [vmem:[#allocation3 + $0x40] sm:$0xff] %vm941, %v910
        %951 = vst.msk [vmem:[#allocation3 + $0x48] sm:$0xff] %vm941, %v912
        %952 = vst.msk [vmem:[#allocation3 + $0x50] sm:$0xff] %vm941, %v914
        %953 = vst.msk [vmem:[#allocation3 + $0x58] sm:$0xff] %vm941, %v916
        %954 = vst.msk [vmem:[#allocation3 + $0x60] sm:$0xff] %vm941, %v918
        %955 = vst.msk [vmem:[#allocation3 + $0x68] sm:$0xff] %vm941, %v920
        %956 = vst.msk [vmem:[#allocation3 + $0x70] sm:$0xff] %vm941, %v922
        %957 = vst.msk [vmem:[#allocation3 + $0x78] sm:$0xff] %vm941, %v924
        %v958 = vld [vmem:[#allocation2 + $0x9] sm:$0xff]
        %v959 = vld [vmem:[#allocation2 + $0x11] sm:$0xff]
        %v960 = vld [vmem:[#allocation2 + $0x29] sm:$0xff]
        %v961 = vld [vmem:[#allocation2 + $0x31] sm:$0xff]
        %v962 = vld [vmem:[#allocation2 + $0x49] sm:$0xff]
        %v963 = vld [vmem:[#allocation2 + $0x51] sm:$0xff]
        %v964 = vld [vmem:[#allocation2 + $0x69] sm:$0xff]
        %v965 = vld [vmem:[#allocation2 + $0x71] sm:$0xff]
        %v966 = vld [vmem:[#allocation2 + $0x89] sm:$0xff]
        %v967 = vld [vmem:[#allocation2 + $0x91] sm:$0xff]
        %v968 = vld [vmem:[#allocation2 + $0xa9] sm:$0xff]
        %v969 = vld [vmem:[#allocation2 + $0xb1] sm:$0xff]
        %v970 = vld [vmem:[#allocation2 + $0xc9] sm:$0xff]
        %v971 = vld [vmem:[#allocation2 + $0xd1] sm:$0xff]
        %v972 = vld [vmem:[#allocation2 + $0xe9] sm:$0xff]
        %v973 = vld [vmem:[#allocation2 + $0xf1] sm:$0xff]
        %v974 = vld [vmem:[#allocation2 + $0x109] sm:$0xff]
        %v975 = vld [vmem:[#allocation2 + $0x111] sm:$0xff]
        %v976 = vld [vmem:[#allocation2 + $0x129] sm:$0xff]
        %v977 = vld [vmem:[#allocation2 + $0x131] sm:$0xff]
        %v978 = vld [vmem:[#allocation2 + $0x149] sm:$0xff]
        %v979 = vld [vmem:[#allocation2 + $0x151] sm:$0xff]
        %v980 = vld [vmem:[#allocation2 + $0x169] sm:$0xff]
        %v981 = vld [vmem:[#allocation2 + $0x171] sm:$0xff]
        %v982 = vld [vmem:[#allocation2 + $0x189] sm:$0xff]
        %v983 = vld [vmem:[#allocation2 + $0x191] sm:$0xff]
        %v984 = vld [vmem:[#allocation2 + $0x1a9] sm:$0xff]
        %v985 = vld [vmem:[#allocation2 + $0x1b1] sm:$0xff]
        %v986 = vld [vmem:[#allocation2 + $0x1c9] sm:$0xff]
        %v987 = vld [vmem:[#allocation2 + $0x1d1] sm:$0xff]
        %v988 = vld [vmem:[#allocation2 + $0x1e9] sm:$0xff]
        %v989 = vld [vmem:[#allocation2 + $0x1f1] sm:$0xff]
        %v990 = vpack.c.bf16 %v959, %v958
        %v991 = vpack.c.bf16 %v961, %v960
        %v992 = vpack.c.bf16 %v963, %v962
        %v993 = vpack.c.bf16 %v965, %v964
        %v994 = vpack.c.bf16 %v967, %v966
        %v995 = vpack.c.bf16 %v969, %v968
        %v996 = vpack.c.bf16 %v971, %v970
        %v997 = vpack.c.bf16 %v973, %v972
        %v998 = vpack.c.bf16 %v975, %v974
        %v999 = vpack.c.bf16 %v977, %v976
        %v1000 = vpack.c.bf16 %v979, %v978
        %v1001 = vpack.c.bf16 %v981, %v980
        %v1002 = vpack.c.bf16 %v983, %v982
        %v1003 = vpack.c.bf16 %v985, %v984
        %v1004 = vpack.c.bf16 %v987, %v986
        %v1005 = vpack.c.bf16 %v989, %v988
        %1022 = vrot.lane.b32.xlu0 %v990, 8
        %v1023 = vpop.permute.xlu0 %1022
        %1024 = vrot.lane.b32.xlu0 %v991, 8
        %v1025 = vpop.permute.xlu0 %1024
        %1026 = vrot.lane.b32.xlu0 %v992, 8
        %v1027 = vpop.permute.xlu0 %1026
        %1028 = vrot.lane.b32.xlu0 %v993, 8
        %v1029 = vpop.permute.xlu0 %1028
        %1030 = vrot.lane.b32.xlu0 %v994, 8
        %v1031 = vpop.permute.xlu0 %1030
        %1032 = vrot.lane.b32.xlu0 %v995, 8
        %v1033 = vpop.permute.xlu0 %1032
        %1034 = vrot.lane.b32.xlu0 %v996, 8
        %v1035 = vpop.permute.xlu0 %1034
        %1036 = vrot.lane.b32.xlu0 %v997, 8
        %v1037 = vpop.permute.xlu0 %1036
        %1038 = vrot.lane.b32.xlu0 %v998, 8
        %v1039 = vpop.permute.xlu0 %1038
        %1040 = vrot.lane.b32.xlu0 %v999, 8
        %v1041 = vpop.permute.xlu0 %1040
        %1042 = vrot.lane.b32.xlu0 %v1000, 8
        %v1043 = vpop.permute.xlu0 %1042
        %1044 = vrot.lane.b32.xlu0 %v1001, 8
        %v1045 = vpop.permute.xlu0 %1044
        %1046 = vrot.lane.b32.xlu0 %v1002, 8
        %v1047 = vpop.permute.xlu0 %1046
        %1048 = vrot.lane.b32.xlu0 %v1003, 8
        %v1049 = vpop.permute.xlu0 %1048
        %1050 = vrot.lane.b32.xlu0 %v1004, 8
        %v1051 = vpop.permute.xlu0 %1050
        %1052 = vrot.lane.b32.xlu0 %v1005, 8
        %v1053 = vpop.permute.xlu0 %1052
        %vm1070 = vcmask 97344
        %1071 = vst.msk [vmem:[#allocation3] sm:$0xff] %vm1070, %v1023
        %1072 = vst.msk [vmem:[#allocation3 + $0x8] sm:$0xff] %vm1070, %v1025
        %1073 = vst.msk [vmem:[#allocation3 + $0x10] sm:$0xff] %vm1070, %v1027
        %1074 = vst.msk [vmem:[#allocation3 + $0x18] sm:$0xff] %vm1070, %v1029
        %1075 = vst.msk [vmem:[#allocation3 + $0x20] sm:$0xff] %vm1070, %v1031
        %1076 = vst.msk [vmem:[#allocation3 + $0x28] sm:$0xff] %vm1070, %v1033
        %1077 = vst.msk [vmem:[#allocation3 + $0x30] sm:$0xff] %vm1070, %v1035
        %1078 = vst.msk [vmem:[#allocation3 + $0x38] sm:$0xff] %vm1070, %v1037
        %1079 = vst.msk [vmem:[#allocation3 + $0x40] sm:$0xff] %vm1070, %v1039
        %1080 = vst.msk [vmem:[#allocation3 + $0x48] sm:$0xff] %vm1070, %v1041
        %1081 = vst.msk [vmem:[#allocation3 + $0x50] sm:$0xff] %vm1070, %v1043
        %1082 = vst.msk [vmem:[#allocation3 + $0x58] sm:$0xff] %vm1070, %v1045
        %1083 = vst.msk [vmem:[#allocation3 + $0x60] sm:$0xff] %vm1070, %v1047
        %1084 = vst.msk [vmem:[#allocation3 + $0x68] sm:$0xff] %vm1070, %v1049
        %1085 = vst.msk [vmem:[#allocation3 + $0x70] sm:$0xff] %vm1070, %v1051
        %1086 = vst.msk [vmem:[#allocation3 + $0x78] sm:$0xff] %vm1070, %v1053
        %v1087 = vld [vmem:[%s329 + $0x7] sm:$0xff]
        %v1088 = vld [vmem:[%s329 + $0xf] sm:$0xff]
        %v1089 = vld [vmem:[%s329 + $0x27] sm:$0xff]
        %v1090 = vld [vmem:[%s329 + $0x2f] sm:$0xff]
        %v1091 = vld [vmem:[%s329 + $0x47] sm:$0xff]
        %v1092 = vld [vmem:[%s329 + $0x4f] sm:$0xff]
        %v1093 = vld [vmem:[%s329 + $0x67] sm:$0xff]
        %v1094 = vld [vmem:[%s329 + $0x6f] sm:$0xff]
        %v1095 = vld [vmem:[%s329 + $0x87] sm:$0xff]
        %v1096 = vld [vmem:[%s329 + $0x8f] sm:$0xff]
        %v1097 = vld [vmem:[%s329 + $0xa7] sm:$0xff]
        %v1098 = vld [vmem:[%s329 + $0xaf] sm:$0xff]
        %v1099 = vld [vmem:[%s329 + $0xc7] sm:$0xff]
        %v1100 = vld [vmem:[%s329 + $0xcf] sm:$0xff]
        %v1101 = vld [vmem:[%s329 + $0xe7] sm:$0xff]
        %v1102 = vld [vmem:[%s329 + $0xef] sm:$0xff]
        %v1103 = vld [vmem:[%s329 + $0x107] sm:$0xff]
        %v1104 = vld [vmem:[%s329 + $0x10f] sm:$0xff]
        %v1105 = vld [vmem:[%s329 + $0x127] sm:$0xff]
        %v1106 = vld [vmem:[%s329 + $0x12f] sm:$0xff]
        %v1107 = vld [vmem:[%s329 + $0x147] sm:$0xff]
        %v1108 = vld [vmem:[%s329 + $0x14f] sm:$0xff]
        %v1109 = vld [vmem:[%s329 + $0x167] sm:$0xff]
        %v1110 = vld [vmem:[%s329 + $0x16f] sm:$0xff]
        %v1111 = vld [vmem:[%s329 + $0x187] sm:$0xff]
        %v1112 = vld [vmem:[%s329 + $0x18f] sm:$0xff]
        %v1113 = vld [vmem:[%s329 + $0x1a7] sm:$0xff]
        %v1114 = vld [vmem:[%s329 + $0x1af] sm:$0xff]
        %v1115 = vld [vmem:[%s329 + $0x1c7] sm:$0xff]
        %v1116 = vld [vmem:[%s329 + $0x1cf] sm:$0xff]
        %v1117 = vld [vmem:[%s329 + $0x1e7] sm:$0xff]
        %v1118 = vld [vmem:[%s329 + $0x1ef] sm:$0xff]
        %v1119 = vpack.c.bf16 %v1088, %v1087
        %v1120 = vpack.c.bf16 %v1090, %v1089
        %v1121 = vpack.c.bf16 %v1092, %v1091
        %v1122 = vpack.c.bf16 %v1094, %v1093
        %v1123 = vpack.c.bf16 %v1096, %v1095
        %v1124 = vpack.c.bf16 %v1098, %v1097
        %v1125 = vpack.c.bf16 %v1100, %v1099
        %v1126 = vpack.c.bf16 %v1102, %v1101
        %v1127 = vpack.c.bf16 %v1104, %v1103
        %v1128 = vpack.c.bf16 %v1106, %v1105
        %v1129 = vpack.c.bf16 %v1108, %v1107
        %v1130 = vpack.c.bf16 %v1110, %v1109
        %v1131 = vpack.c.bf16 %v1112, %v1111
        %v1132 = vpack.c.bf16 %v1114, %v1113
        %v1133 = vpack.c.bf16 %v1116, %v1115
        %v1134 = vpack.c.bf16 %v1118, %v1117
        %1151 = vrot.lane.b32.xlu0 %v1119, 12
        %v1152 = vpop.permute.xlu0 %1151
        %1153 = vrot.lane.b32.xlu0 %v1120, 12
        %v1154 = vpop.permute.xlu0 %1153
        %1155 = vrot.lane.b32.xlu0 %v1121, 12
        %v1156 = vpop.permute.xlu0 %1155
        %1157 = vrot.lane.b32.xlu0 %v1122, 12
        %v1158 = vpop.permute.xlu0 %1157
        %1159 = vrot.lane.b32.xlu0 %v1123, 12
        %v1160 = vpop.permute.xlu0 %1159
        %1161 = vrot.lane.b32.xlu0 %v1124, 12
        %v1162 = vpop.permute.xlu0 %1161
        %1163 = vrot.lane.b32.xlu0 %v1125, 12
        %v1164 = vpop.permute.xlu0 %1163
        %1165 = vrot.lane.b32.xlu0 %v1126, 12
        %v1166 = vpop.permute.xlu0 %1165
        %1167 = vrot.lane.b32.xlu0 %v1127, 12
        %v1168 = vpop.permute.xlu0 %1167
        %1169 = vrot.lane.b32.xlu0 %v1128, 12
        %v1170 = vpop.permute.xlu0 %1169
        %1171 = vrot.lane.b32.xlu0 %v1129, 12
        %v1172 = vpop.permute.xlu0 %1171
        %1173 = vrot.lane.b32.xlu0 %v1130, 12
        %v1174 = vpop.permute.xlu0 %1173
        %1175 = vrot.lane.b32.xlu0 %v1131, 12
        %v1176 = vpop.permute.xlu0 %1175
        %1177 = vrot.lane.b32.xlu0 %v1132, 12
        %v1178 = vpop.permute.xlu0 %1177
        %1179 = vrot.lane.b32.xlu0 %v1133, 12
        %v1180 = vpop.permute.xlu0 %1179
        %1181 = vrot.lane.b32.xlu0 %v1134, 12
        %v1182 = vpop.permute.xlu0 %1181
        %vm1199 = vcmask 130144
        %1200 = vst.msk [vmem:[#allocation3] sm:$0xff] %vm1199, %v1152
        %1201 = vst.msk [vmem:[#allocation3 + $0x8] sm:$0xff] %vm1199, %v1154
        %1202 = vst.msk [vmem:[#allocation3 + $0x10] sm:$0xff] %vm1199, %v1156
        %1203 = vst.msk [vmem:[#allocation3 + $0x18] sm:$0xff] %vm1199, %v1158
        %1204 = vst.msk [vmem:[#allocation3 + $0x20] sm:$0xff] %vm1199, %v1160
        %1205 = vst.msk [vmem:[#allocation3 + $0x28] sm:$0xff] %vm1199, %v1162
        %1206 = vst.msk [vmem:[#allocation3 + $0x30] sm:$0xff] %vm1199, %v1164
        %1207 = vst.msk [vmem:[#allocation3 + $0x38] sm:$0xff] %vm1199, %v1166
        %1208 = vst.msk [vmem:[#allocation3 + $0x40] sm:$0xff] %vm1199, %v1168
        %1209 = vst.msk [vmem:[#allocation3 + $0x48] sm:$0xff] %vm1199, %v1170
        %1210 = vst.msk [vmem:[#allocation3 + $0x50] sm:$0xff] %vm1199, %v1172
        %1211 = vst.msk [vmem:[#allocation3 + $0x58] sm:$0xff] %vm1199, %v1174
        %1212 = vst.msk [vmem:[#allocation3 + $0x60] sm:$0xff] %vm1199, %v1176
        %1213 = vst.msk [vmem:[#allocation3 + $0x68] sm:$0xff] %vm1199, %v1178
        %1214 = vst.msk [vmem:[#allocation3 + $0x70] sm:$0xff] %vm1199, %v1180
        %1215 = vst.msk [vmem:[#allocation3 + $0x78] sm:$0xff] %vm1199, %v1182
        %v1216 = vld [vmem:[%s329 + $0x8] sm:$0xff]
        %v1217 = vld [vmem:[%s329 + $0x10] sm:$0xff]
        %v1218 = vld [vmem:[%s329 + $0x28] sm:$0xff]
        %v1219 = vld [vmem:[%s329 + $0x30] sm:$0xff]
        %v1220 = vld [vmem:[%s329 + $0x48] sm:$0xff]
        %v1221 = vld [vmem:[%s329 + $0x50] sm:$0xff]
        %v1222 = vld [vmem:[%s329 + $0x68] sm:$0xff]
        %v1223 = vld [vmem:[%s329 + $0x70] sm:$0xff]
        %v1224 = vld [vmem:[%s329 + $0x88] sm:$0xff]
        %v1225 = vld [vmem:[%s329 + $0x90] sm:$0xff]
        %v1226 = vld [vmem:[%s329 + $0xa8] sm:$0xff]
        %v1227 = vld [vmem:[%s329 + $0xb0] sm:$0xff]
        %v1228 = vld [vmem:[%s329 + $0xc8] sm:$0xff]
        %v1229 = vld [vmem:[%s329 + $0xd0] sm:$0xff]
        %v1230 = vld [vmem:[%s329 + $0xe8] sm:$0xff]
        %v1231 = vld [vmem:[%s329 + $0xf0] sm:$0xff]
        %v1232 = vld [vmem:[%s329 + $0x108] sm:$0xff]
        %v1233 = vld [vmem:[%s329 + $0x110] sm:$0xff]
        %v1234 = vld [vmem:[%s329 + $0x128] sm:$0xff]
        %v1235 = vld [vmem:[%s329 + $0x130] sm:$0xff]
        %v1236 = vld [vmem:[%s329 + $0x148] sm:$0xff]
        %v1237 = vld [vmem:[%s329 + $0x150] sm:$0xff]
        %v1238 = vld [vmem:[%s329 + $0x168] sm:$0xff]
        %v1239 = vld [vmem:[%s329 + $0x170] sm:$0xff]
        %v1240 = vld [vmem:[%s329 + $0x188] sm:$0xff]
        %v1241 = vld [vmem:[%s329 + $0x190] sm:$0xff]
        %v1242 = vld [vmem:[%s329 + $0x1a8] sm:$0xff]
        %v1243 = vld [vmem:[%s329 + $0x1b0] sm:$0xff]
        %v1244 = vld [vmem:[%s329 + $0x1c8] sm:$0xff]
        %v1245 = vld [vmem:[%s329 + $0x1d0] sm:$0xff]
        %v1246 = vld [vmem:[%s329 + $0x1e8] sm:$0xff]
        %v1247 = vld [vmem:[%s329 + $0x1f0] sm:$0xff]
        %v1248 = vpack.c.bf16 %v1217, %v1216
        %v1249 = vpack.c.bf16 %v1219, %v1218
        %v1250 = vpack.c.bf16 %v1221, %v1220
        %v1251 = vpack.c.bf16 %v1223, %v1222
        %v1252 = vpack.c.bf16 %v1225, %v1224
        %v1253 = vpack.c.bf16 %v1227, %v1226
        %v1254 = vpack.c.bf16 %v1229, %v1228
        %v1255 = vpack.c.bf16 %v1231, %v1230
        %v1256 = vpack.c.bf16 %v1233, %v1232
        %v1257 = vpack.c.bf16 %v1235, %v1234
        %v1258 = vpack.c.bf16 %v1237, %v1236
        %v1259 = vpack.c.bf16 %v1239, %v1238
        %v1260 = vpack.c.bf16 %v1241, %v1240
        %v1261 = vpack.c.bf16 %v1243, %v1242
        %v1262 = vpack.c.bf16 %v1245, %v1244
        %v1263 = vpack.c.bf16 %v1247, %v1246
        %1280 = vrot.lane.b32.xlu0 %v1248, 16
        %v1281 = vpop.permute.xlu0 %1280
        %1282 = vrot.lane.b32.xlu0 %v1249, 16
        %v1283 = vpop.permute.xlu0 %1282
        %1284 = vrot.lane.b32.xlu0 %v1250, 16
        %v1285 = vpop.permute.xlu0 %1284
        %1286 = vrot.lane.b32.xlu0 %v1251, 16
        %v1287 = vpop.permute.xlu0 %1286
        %1288 = vrot.lane.b32.xlu0 %v1252, 16
        %v1289 = vpop.permute.xlu0 %1288
        %1290 = vrot.lane.b32.xlu0 %v1253, 16
        %v1291 = vpop.permute.xlu0 %1290
        %1292 = vrot.lane.b32.xlu0 %v1254, 16
        %v1293 = vpop.permute.xlu0 %1292
        %1294 = vrot.lane.b32.xlu0 %v1255, 16
        %v1295 = vpop.permute.xlu0 %1294
        %1296 = vrot.lane.b32.xlu0 %v1256, 16
        %v1297 = vpop.permute.xlu0 %1296
        %1298 = vrot.lane.b32.xlu0 %v1257, 16
        %v1299 = vpop.permute.xlu0 %1298
        %1300 = vrot.lane.b32.xlu0 %v1258, 16
        %v1301 = vpop.permute.xlu0 %1300
        %1302 = vrot.lane.b32.xlu0 %v1259, 16
        %v1303 = vpop.permute.xlu0 %1302
        %1304 = vrot.lane.b32.xlu0 %v1260, 16
        %v1305 = vpop.permute.xlu0 %1304
        %1306 = vrot.lane.b32.xlu0 %v1261, 16
        %v1307 = vpop.permute.xlu0 %1306
        %1308 = vrot.lane.b32.xlu0 %v1262, 16
        %v1309 = vpop.permute.xlu0 %1308
        %1310 = vrot.lane.b32.xlu0 %v1263, 16
        %v1311 = vpop.permute.xlu0 %1310
        %vm1328 = vcmask 162944
        %1329 = vst.msk [vmem:[#allocation3] sm:$0xff] %vm1328, %v1281
        %1330 = vst.msk [vmem:[#allocation3 + $0x8] sm:$0xff] %vm1328, %v1283
        %1331 = vst.msk [vmem:[#allocation3 + $0x10] sm:$0xff] %vm1328, %v1285
        %1332 = vst.msk [vmem:[#allocation3 + $0x18] sm:$0xff] %vm1328, %v1287
        %1333 = vst.msk [vmem:[#allocation3 + $0x20] sm:$0xff] %vm1328, %v1289
        %1334 = vst.msk [vmem:[#allocation3 + $0x28] sm:$0xff] %vm1328, %v1291
        %1335 = vst.msk [vmem:[#allocation3 + $0x30] sm:$0xff] %vm1328, %v1293
        %1336 = vst.msk [vmem:[#allocation3 + $0x38] sm:$0xff] %vm1328, %v1295
        %1337 = vst.msk [vmem:[#allocation3 + $0x40] sm:$0xff] %vm1328, %v1297
        %1338 = vst.msk [vmem:[#allocation3 + $0x48] sm:$0xff] %vm1328, %v1299
        %1339 = vst.msk [vmem:[#allocation3 + $0x50] sm:$0xff] %vm1328, %v1301
        %1340 = vst.msk [vmem:[#allocation3 + $0x58] sm:$0xff] %vm1328, %v1303
        %1341 = vst.msk [vmem:[#allocation3 + $0x60] sm:$0xff] %vm1328, %v1305
        %1342 = vst.msk [vmem:[#allocation3 + $0x68] sm:$0xff] %vm1328, %v1307
        %1343 = vst.msk [vmem:[#allocation3 + $0x70] sm:$0xff] %vm1328, %v1309
        %1344 = vst.msk [vmem:[#allocation3 + $0x78] sm:$0xff] %vm1328, %v1311
        %v1345 = vld [vmem:[%s329 + $0x9] sm:$0xff]
        %v1346 = vld [vmem:[%s329 + $0x11] sm:$0xff]
        %v1347 = vld [vmem:[%s329 + $0x29] sm:$0xff]
        %v1348 = vld [vmem:[%s329 + $0x31] sm:$0xff]
        %v1349 = vld [vmem:[%s329 + $0x49] sm:$0xff]
        %v1350 = vld [vmem:[%s329 + $0x51] sm:$0xff]
        %v1351 = vld [vmem:[%s329 + $0x69] sm:$0xff]
        %v1352 = vld [vmem:[%s329 + $0x71] sm:$0xff]
        %v1353 = vld [vmem:[%s329 + $0x89] sm:$0xff]
        %v1354 = vld [vmem:[%s329 + $0x91] sm:$0xff]
        %v1355 = vld [vmem:[%s329 + $0xa9] sm:$0xff]
        %v1356 = vld [vmem:[%s329 + $0xb1] sm:$0xff]
        %v1357 = vld [vmem:[%s329 + $0xc9] sm:$0xff]
        %v1358 = vld [vmem:[%s329 + $0xd1] sm:$0xff]
        %v1359 = vld [vmem:[%s329 + $0xe9] sm:$0xff]
        %v1360 = vld [vmem:[%s329 + $0xf1] sm:$0xff]
        %v1361 = vld [vmem:[%s329 + $0x109] sm:$0xff]
        %v1362 = vld [vmem:[%s329 + $0x111] sm:$0xff]
        %v1363 = vld [vmem:[%s329 + $0x129] sm:$0xff]
        %v1364 = vld [vmem:[%s329 + $0x131] sm:$0xff]
        %v1365 = vld [vmem:[%s329 + $0x149] sm:$0xff]
        %v1366 = vld [vmem:[%s329 + $0x151] sm:$0xff]
        %v1367 = vld [vmem:[%s329 + $0x169] sm:$0xff]
        %v1368 = vld [vmem:[%s329 + $0x171] sm:$0xff]
        %v1369 = vld [vmem:[%s329 + $0x189] sm:$0xff]
        %v1370 = vld [vmem:[%s329 + $0x191] sm:$0xff]
        %v1371 = vld [vmem:[%s329 + $0x1a9] sm:$0xff]
        %v1372 = vld [vmem:[%s329 + $0x1b1] sm:$0xff]
        %v1373 = vld [vmem:[%s329 + $0x1c9] sm:$0xff]
        %v1374 = vld [vmem:[%s329 + $0x1d1] sm:$0xff]
        %v1375 = vld [vmem:[%s329 + $0x1e9] sm:$0xff]
        %v1376 = vld [vmem:[%s329 + $0x1f1] sm:$0xff]
        %v1377 = vpack.c.bf16 %v1346, %v1345
        %v1378 = vpack.c.bf16 %v1348, %v1347
        %v1379 = vpack.c.bf16 %v1350, %v1349
        %v1380 = vpack.c.bf16 %v1352, %v1351
        %v1381 = vpack.c.bf16 %v1354, %v1353
        %v1382 = vpack.c.bf16 %v1356, %v1355
        %v1383 = vpack.c.bf16 %v1358, %v1357
        %v1384 = vpack.c.bf16 %v1360, %v1359
        %v1385 = vpack.c.bf16 %v1362, %v1361
        %v1386 = vpack.c.bf16 %v1364, %v1363
        %v1387 = vpack.c.bf16 %v1366, %v1365
        %v1388 = vpack.c.bf16 %v1368, %v1367
        %v1389 = vpack.c.bf16 %v1370, %v1369
        %v1390 = vpack.c.bf16 %v1372, %v1371
        %v1391 = vpack.c.bf16 %v1374, %v1373
        %v1392 = vpack.c.bf16 %v1376, %v1375
        %1409 = vrot.lane.b32.xlu0 %v1377, 20
        %v1410 = vpop.permute.xlu0 %1409
        %1411 = vrot.lane.b32.xlu0 %v1378, 20
        %v1412 = vpop.permute.xlu0 %1411
        %1413 = vrot.lane.b32.xlu0 %v1379, 20
        %v1414 = vpop.permute.xlu0 %1413
        %1415 = vrot.lane.b32.xlu0 %v1380, 20
        %v1416 = vpop.permute.xlu0 %1415
        %1417 = vrot.lane.b32.xlu0 %v1381, 20
        %v1418 = vpop.permute.xlu0 %1417
        %1419 = vrot.lane.b32.xlu0 %v1382, 20
        %v1420 = vpop.permute.xlu0 %1419
        %1421 = vrot.lane.b32.xlu0 %v1383, 20
        %v1422 = vpop.permute.xlu0 %1421
        %1423 = vrot.lane.b32.xlu0 %v1384, 20
        %v1424 = vpop.permute.xlu0 %1423
        %1425 = vrot.lane.b32.xlu0 %v1385, 20
        %v1426 = vpop.permute.xlu0 %1425
        %1427 = vrot.lane.b32.xlu0 %v1386, 20
        %v1428 = vpop.permute.xlu0 %1427
        %1429 = vrot.lane.b32.xlu0 %v1387, 20
        %v1430 = vpop.permute.xlu0 %1429
        %1431 = vrot.lane.b32.xlu0 %v1388, 20
        %v1432 = vpop.permute.xlu0 %1431
        %1433 = vrot.lane.b32.xlu0 %v1389, 20
        %v1434 = vpop.permute.xlu0 %1433
        %1435 = vrot.lane.b32.xlu0 %v1390, 20
        %v1436 = vpop.permute.xlu0 %1435
        %1437 = vrot.lane.b32.xlu0 %v1391, 20
        %v1438 = vpop.permute.xlu0 %1437
        %1439 = vrot.lane.b32.xlu0 %v1392, 20
        %v1440 = vpop.permute.xlu0 %1439
        %vm1457 = vcmask 195744
        %1458 = vst.msk [vmem:[#allocation3] sm:$0xff] %vm1457, %v1410
        %1459 = vst.msk [vmem:[#allocation3 + $0x8] sm:$0xff] %vm1457, %v1412
        %1460 = vst.msk [vmem:[#allocation3 + $0x10] sm:$0xff] %vm1457, %v1414
        %1461 = vst.msk [vmem:[#allocation3 + $0x18] sm:$0xff] %vm1457, %v1416
        %1462 = vst.msk [vmem:[#allocation3 + $0x20] sm:$0xff] %vm1457, %v1418
        %1463 = vst.msk [vmem:[#allocation3 + $0x28] sm:$0xff] %vm1457, %v1420
        %1464 = vst.msk [vmem:[#allocation3 + $0x30] sm:$0xff] %vm1457, %v1422
        %1465 = vst.msk [vmem:[#allocation3 + $0x38] sm:$0xff] %vm1457, %v1424
        %1466 = vst.msk [vmem:[#allocation3 + $0x40] sm:$0xff] %vm1457, %v1426
        %1467 = vst.msk [vmem:[#allocation3 + $0x48] sm:$0xff] %vm1457, %v1428
        %1468 = vst.msk [vmem:[#allocation3 + $0x50] sm:$0xff] %vm1457, %v1430
        %1469 = vst.msk [vmem:[#allocation3 + $0x58] sm:$0xff] %vm1457, %v1432
        %1470 = vst.msk [vmem:[#allocation3 + $0x60] sm:$0xff] %vm1457, %v1434
        %1471 = vst.msk [vmem:[#allocation3 + $0x68] sm:$0xff] %vm1457, %v1436
        %1472 = vst.msk [vmem:[#allocation3 + $0x70] sm:$0xff] %vm1457, %v1438
        %1473 = vst.msk [vmem:[#allocation3 + $0x78] sm:$0xff] %vm1457, %v1440
        %s1474 = scalar_lea.vmem [#allocation2], 64
        %v1475 = vld [vmem:[%s1474 + $0x7] sm:$0xff]
        %v1476 = vld [vmem:[%s1474 + $0xf] sm:$0xff]
        %v1477 = vld [vmem:[%s1474 + $0x27] sm:$0xff]
        %v1478 = vld [vmem:[%s1474 + $0x2f] sm:$0xff]
        %v1479 = vld [vmem:[%s1474 + $0x47] sm:$0xff]
        %v1480 = vld [vmem:[%s1474 + $0x4f] sm:$0xff]
        %v1481 = vld [vmem:[%s1474 + $0x67] sm:$0xff]
        %v1482 = vld [vmem:[%s1474 + $0x6f] sm:$0xff]
        %v1483 = vld [vmem:[%s1474 + $0x87] sm:$0xff]
        %v1484 = vld [vmem:[%s1474 + $0x8f] sm:$0xff]
        %v1485 = vld [vmem:[%s1474 + $0xa7] sm:$0xff]
        %v1486 = vld [vmem:[%s1474 + $0xaf] sm:$0xff]
        %v1487 = vld [vmem:[%s1474 + $0xc7] sm:$0xff]
        %v1488 = vld [vmem:[%s1474 + $0xcf] sm:$0xff]
        %v1489 = vld [vmem:[%s1474 + $0xe7] sm:$0xff]
        %v1490 = vld [vmem:[%s1474 + $0xef] sm:$0xff]
        %v1491 = vld [vmem:[%s1474 + $0x107] sm:$0xff]
        %v1492 = vld [vmem:[%s1474 + $0x10f] sm:$0xff]
        %v1493 = vld [vmem:[%s1474 + $0x127] sm:$0xff]
        %v1494 = vld [vmem:[%s1474 + $0x12f] sm:$0xff]
        %v1495 = vld [vmem:[%s1474 + $0x147] sm:$0xff]
        %v1496 = vld [vmem:[%s1474 + $0x14f] sm:$0xff]
        %v1497 = vld [vmem:[%s1474 + $0x167] sm:$0xff]
        %v1498 = vld [vmem:[%s1474 + $0x16f] sm:$0xff]
        %v1499 = vld [vmem:[%s1474 + $0x187] sm:$0xff]
        %v1500 = vld [vmem:[%s1474 + $0x18f] sm:$0xff]
        %v1501 = vld [vmem:[%s1474 + $0x1a7] sm:$0xff]
        %v1502 = vld [vmem:[%s1474 + $0x1af] sm:$0xff]
        %v1503 = vld [vmem:[%s1474 + $0x1c7] sm:$0xff]
        %v1504 = vld [vmem:[%s1474 + $0x1cf] sm:$0xff]
        %v1505 = vld [vmem:[%s1474 + $0x1e7] sm:$0xff]
        %v1506 = vld [vmem:[%s1474 + $0x1ef] sm:$0xff]
        %v1507 = vpack.c.bf16 %v1476, %v1475
        %v1508 = vpack.c.bf16 %v1478, %v1477
        %v1509 = vpack.c.bf16 %v1480, %v1479
        %v1510 = vpack.c.bf16 %v1482, %v1481
        %v1511 = vpack.c.bf16 %v1484, %v1483
        %v1512 = vpack.c.bf16 %v1486, %v1485
        %v1513 = vpack.c.bf16 %v1488, %v1487
        %v1514 = vpack.c.bf16 %v1490, %v1489
        %v1515 = vpack.c.bf16 %v1492, %v1491
        %v1516 = vpack.c.bf16 %v1494, %v1493
        %v1517 = vpack.c.bf16 %v1496, %v1495
        %v1518 = vpack.c.bf16 %v1498, %v1497
        %v1519 = vpack.c.bf16 %v1500, %v1499
        %v1520 = vpack.c.bf16 %v1502, %v1501
        %v1521 = vpack.c.bf16 %v1504, %v1503
        %v1522 = vpack.c.bf16 %v1506, %v1505
        %1539 = vrot.lane.b32.xlu0 %v1507, 24
        %v1540 = vpop.permute.xlu0 %1539
        %1541 = vrot.lane.b32.xlu0 %v1508, 24
        %v1542 = vpop.permute.xlu0 %1541
        %1543 = vrot.lane.b32.xlu0 %v1509, 24
        %v1544 = vpop.permute.xlu0 %1543
        %1545 = vrot.lane.b32.xlu0 %v1510, 24
        %v1546 = vpop.permute.xlu0 %1545
        %1547 = vrot.lane.b32.xlu0 %v1511, 24
        %v1548 = vpop.permute.xlu0 %1547
        %1549 = vrot.lane.b32.xlu0 %v1512, 24
        %v1550 = vpop.permute.xlu0 %1549
        %1551 = vrot.lane.b32.xlu0 %v1513, 24
        %v1552 = vpop.permute.xlu0 %1551
        %1553 = vrot.lane.b32.xlu0 %v1514, 24
        %v1554 = vpop.permute.xlu0 %1553
        %1555 = vrot.lane.b32.xlu0 %v1515, 24
        %v1556 = vpop.permute.xlu0 %1555
        %1557 = vrot.lane.b32.xlu0 %v1516, 24
        %v1558 = vpop.permute.xlu0 %1557
        %1559 = vrot.lane.b32.xlu0 %v1517, 24
        %v1560 = vpop.permute.xlu0 %1559
        %1561 = vrot.lane.b32.xlu0 %v1518, 24
        %v1562 = vpop.permute.xlu0 %1561
        %1563 = vrot.lane.b32.xlu0 %v1519, 24
        %v1564 = vpop.permute.xlu0 %1563
        %1565 = vrot.lane.b32.xlu0 %v1520, 24
        %v1566 = vpop.permute.xlu0 %1565
        %1567 = vrot.lane.b32.xlu0 %v1521, 24
        %v1568 = vpop.permute.xlu0 %1567
        %1569 = vrot.lane.b32.xlu0 %v1522, 24
        %v1570 = vpop.permute.xlu0 %1569
        %vm1587 = vcmask 228544
        %1588 = vst.msk [vmem:[#allocation3] sm:$0xff] %vm1587, %v1540
        %1589 = vst.msk [vmem:[#allocation3 + $0x8] sm:$0xff] %vm1587, %v1542
        %1590 = vst.msk [vmem:[#allocation3 + $0x10] sm:$0xff] %vm1587, %v1544
        %1591 = vst.msk [vmem:[#allocation3 + $0x18] sm:$0xff] %vm1587, %v1546
        %1592 = vst.msk [vmem:[#allocation3 + $0x20] sm:$0xff] %vm1587, %v1548
        %1593 = vst.msk [vmem:[#allocation3 + $0x28] sm:$0xff] %vm1587, %v1550
        %1594 = vst.msk [vmem:[#allocation3 + $0x30] sm:$0xff] %vm1587, %v1552
        %1595 = vst.msk [vmem:[#allocation3 + $0x38] sm:$0xff] %vm1587, %v1554
        %1596 = vst.msk [vmem:[#allocation3 + $0x40] sm:$0xff] %vm1587, %v1556
        %1597 = vst.msk [vmem:[#allocation3 + $0x48] sm:$0xff] %vm1587, %v1558
        %1598 = vst.msk [vmem:[#allocation3 + $0x50] sm:$0xff] %vm1587, %v1560
        %1599 = vst.msk [vmem:[#allocation3 + $0x58] sm:$0xff] %vm1587, %v1562
        %1600 = vst.msk [vmem:[#allocation3 + $0x60] sm:$0xff] %vm1587, %v1564
        %1601 = vst.msk [vmem:[#allocation3 + $0x68] sm:$0xff] %vm1587, %v1566
        %1602 = vst.msk [vmem:[#allocation3 + $0x70] sm:$0xff] %vm1587, %v1568
        %1603 = vst.msk [vmem:[#allocation3 + $0x78] sm:$0xff] %vm1587, %v1570
        %v1604 = vld [vmem:[%s1474 + $0x8] sm:$0xff]
        %v1605 = vld [vmem:[%s1474 + $0x10] sm:$0xff]
        %v1606 = vld [vmem:[%s1474 + $0x28] sm:$0xff]
        %v1607 = vld [vmem:[%s1474 + $0x30] sm:$0xff]
        %v1608 = vld [vmem:[%s1474 + $0x48] sm:$0xff]
        %v1609 = vld [vmem:[%s1474 + $0x50] sm:$0xff]
        %v1610 = vld [vmem:[%s1474 + $0x68] sm:$0xff]
        %v1611 = vld [vmem:[%s1474 + $0x70] sm:$0xff]
        %v1612 = vld [vmem:[%s1474 + $0x88] sm:$0xff]
        %v1613 = vld [vmem:[%s1474 + $0x90] sm:$0xff]
        %v1614 = vld [vmem:[%s1474 + $0xa8] sm:$0xff]
        %v1615 = vld [vmem:[%s1474 + $0xb0] sm:$0xff]
        %v1616 = vld [vmem:[%s1474 + $0xc8] sm:$0xff]
        %v1617 = vld [vmem:[%s1474 + $0xd0] sm:$0xff]
        %v1618 = vld [vmem:[%s1474 + $0xe8] sm:$0xff]
        %v1619 = vld [vmem:[%s1474 + $0xf0] sm:$0xff]
        %v1620 = vld [vmem:[%s1474 + $0x108] sm:$0xff]
        %v1621 = vld [vmem:[%s1474 + $0x110] sm:$0xff]
        %v1622 = vld [vmem:[%s1474 + $0x128] sm:$0xff]
        %v1623 = vld [vmem:[%s1474 + $0x130] sm:$0xff]
        %v1624 = vld [vmem:[%s1474 + $0x148] sm:$0xff]
        %v1625 = vld [vmem:[%s1474 + $0x150] sm:$0xff]
        %v1626 = vld [vmem:[%s1474 + $0x168] sm:$0xff]
        %v1627 = vld [vmem:[%s1474 + $0x170] sm:$0xff]
        %v1628 = vld [vmem:[%s1474 + $0x188] sm:$0xff]
        %v1629 = vld [vmem:[%s1474 + $0x190] sm:$0xff]
        %v1630 = vld [vmem:[%s1474 + $0x1a8] sm:$0xff]
        %v1631 = vld [vmem:[%s1474 + $0x1b0] sm:$0xff]
        %v1632 = vld [vmem:[%s1474 + $0x1c8] sm:$0xff]
        %v1633 = vld [vmem:[%s1474 + $0x1d0] sm:$0xff]
        %v1634 = vld [vmem:[%s1474 + $0x1e8] sm:$0xff]
        %v1635 = vld [vmem:[%s1474 + $0x1f0] sm:$0xff]
        %v1636 = vpack.c.bf16 %v1605, %v1604
        %v1637 = vpack.c.bf16 %v1607, %v1606
        %v1638 = vpack.c.bf16 %v1609, %v1608
        %v1639 = vpack.c.bf16 %v1611, %v1610
        %v1640 = vpack.c.bf16 %v1613, %v1612
        %v1641 = vpack.c.bf16 %v1615, %v1614
        %v1642 = vpack.c.bf16 %v1617, %v1616
        %v1643 = vpack.c.bf16 %v1619, %v1618
        %v1644 = vpack.c.bf16 %v1621, %v1620
        %v1645 = vpack.c.bf16 %v1623, %v1622
        %v1646 = vpack.c.bf16 %v1625, %v1624
        %v1647 = vpack.c.bf16 %v1627, %v1626
        %v1648 = vpack.c.bf16 %v1629, %v1628
        %v1649 = vpack.c.bf16 %v1631, %v1630
        %v1650 = vpack.c.bf16 %v1633, %v1632
        %v1651 = vpack.c.bf16 %v1635, %v1634
        %1668 = vrot.lane.b32.xlu0 %v1636, 28
        %v1669 = vpop.permute.xlu0 %1668
        %1670 = vrot.lane.b32.xlu0 %v1637, 28
        %v1671 = vpop.permute.xlu0 %1670
        %1672 = vrot.lane.b32.xlu0 %v1638, 28
        %v1673 = vpop.permute.xlu0 %1672
        %1674 = vrot.lane.b32.xlu0 %v1639, 28
        %v1675 = vpop.permute.xlu0 %1674
        %1676 = vrot.lane.b32.xlu0 %v1640, 28
        %v1677 = vpop.permute.xlu0 %1676
        %1678 = vrot.lane.b32.xlu0 %v1641, 28
        %v1679 = vpop.permute.xlu0 %1678
        %1680 = vrot.lane.b32.xlu0 %v1642, 28
        %v1681 = vpop.permute.xlu0 %1680
        %1682 = vrot.lane.b32.xlu0 %v1643, 28
        %v1683 = vpop.permute.xlu0 %1682
        %1684 = vrot.lane.b32.xlu0 %v1644, 28
        %v1685 = vpop.permute.xlu0 %1684
        %1686 = vrot.lane.b32.xlu0 %v1645, 28
        %v1687 = vpop.permute.xlu0 %1686
        %1688 = vrot.lane.b32.xlu0 %v1646, 28
        %v1689 = vpop.permute.xlu0 %1688
        %1690 = vrot.lane.b32.xlu0 %v1647, 28
        %v1691 = vpop.permute.xlu0 %1690
        %1692 = vrot.lane.b32.xlu0 %v1648, 28
        %v1693 = vpop.permute.xlu0 %1692
        %1694 = vrot.lane.b32.xlu0 %v1649, 28
        %v1695 = vpop.permute.xlu0 %1694
        %1696 = vrot.lane.b32.xlu0 %v1650, 28
        %v1697 = vpop.permute.xlu0 %1696
        %1698 = vrot.lane.b32.xlu0 %v1651, 28
        %v1699 = vpop.permute.xlu0 %1698
        %vm1716 = vcmask 261344
        %1717 = vst.msk [vmem:[#allocation3] sm:$0xff] %vm1716, %v1669
        %1718 = vst.msk [vmem:[#allocation3 + $0x8] sm:$0xff] %vm1716, %v1671
        %1719 = vst.msk [vmem:[#allocation3 + $0x10] sm:$0xff] %vm1716, %v1673
        %1720 = vst.msk [vmem:[#allocation3 + $0x18] sm:$0xff] %vm1716, %v1675
        %1721 = vst.msk [vmem:[#allocation3 + $0x20] sm:$0xff] %vm1716, %v1677
        %1722 = vst.msk [vmem:[#allocation3 + $0x28] sm:$0xff] %vm1716, %v1679
        %1723 = vst.msk [vmem:[#allocation3 + $0x30] sm:$0xff] %vm1716, %v1681
        %1724 = vst.msk [vmem:[#allocation3 + $0x38] sm:$0xff] %vm1716, %v1683
        %1725 = vst.msk [vmem:[#allocation3 + $0x40] sm:$0xff] %vm1716, %v1685
        %1726 = vst.msk [vmem:[#allocation3 + $0x48] sm:$0xff] %vm1716, %v1687
        %1727 = vst.msk [vmem:[#allocation3 + $0x50] sm:$0xff] %vm1716, %v1689
        %1728 = vst.msk [vmem:[#allocation3 + $0x58] sm:$0xff] %vm1716, %v1691
        %1729 = vst.msk [vmem:[#allocation3 + $0x60] sm:$0xff] %vm1716, %v1693
        %1730 = vst.msk [vmem:[#allocation3 + $0x68] sm:$0xff] %vm1716, %v1695
        %1731 = vst.msk [vmem:[#allocation3 + $0x70] sm:$0xff] %vm1716, %v1697
        %1732 = vst.msk [vmem:[#allocation3 + $0x78] sm:$0xff] %vm1716, %v1699
        %v1733 = vld [vmem:[%s1474 + $0x9] sm:$0xff]
        %v1734 = vld [vmem:[%s1474 + $0x11] sm:$0xff]
        %v1735 = vld [vmem:[%s1474 + $0x29] sm:$0xff]
        %v1736 = vld [vmem:[%s1474 + $0x31] sm:$0xff]
        %v1737 = vld [vmem:[%s1474 + $0x49] sm:$0xff]
        %v1738 = vld [vmem:[%s1474 + $0x51] sm:$0xff]
        %v1739 = vld [vmem:[%s1474 + $0x69] sm:$0xff]
        %v1740 = vld [vmem:[%s1474 + $0x71] sm:$0xff]
        %v1741 = vld [vmem:[%s1474 + $0x89] sm:$0xff]
        %v1742 = vld [vmem:[%s1474 + $0x91] sm:$0xff]
        %v1743 = vld [vmem:[%s1474 + $0xa9] sm:$0xff]
        %v1744 = vld [vmem:[%s1474 + $0xb1] sm:$0xff]
        %v1745 = vld [vmem:[%s1474 + $0xc9] sm:$0xff]
        %v1746 = vld [vmem:[%s1474 + $0xd1] sm:$0xff]
        %v1747 = vld [vmem:[%s1474 + $0xe9] sm:$0xff]
        %v1748 = vld [vmem:[%s1474 + $0xf1] sm:$0xff]
        %v1749 = vld [vmem:[%s1474 + $0x109] sm:$0xff]
        %v1750 = vld [vmem:[%s1474 + $0x111] sm:$0xff]
        %v1751 = vld [vmem:[%s1474 + $0x129] sm:$0xff]
        %v1752 = vld [vmem:[%s1474 + $0x131] sm:$0xff]
        %v1753 = vld [vmem:[%s1474 + $0x149] sm:$0xff]
        %v1754 = vld [vmem:[%s1474 + $0x151] sm:$0xff]
        %v1755 = vld [vmem:[%s1474 + $0x169] sm:$0xff]
        %v1756 = vld [vmem:[%s1474 + $0x171] sm:$0xff]
        %v1757 = vld [vmem:[%s1474 + $0x189] sm:$0xff]
        %v1758 = vld [vmem:[%s1474 + $0x191] sm:$0xff]
        %v1759 = vld [vmem:[%s1474 + $0x1a9] sm:$0xff]
        %v1760 = vld [vmem:[%s1474 + $0x1b1] sm:$0xff]
        %v1761 = vld [vmem:[%s1474 + $0x1c9] sm:$0xff]
        %v1762 = vld [vmem:[%s1474 + $0x1d1] sm:$0xff]
        %v1763 = vld [vmem:[%s1474 + $0x1e9] sm:$0xff]
        %v1764 = vld [vmem:[%s1474 + $0x1f1] sm:$0xff]
        %v1765 = vpack.c.bf16 %v1734, %v1733
        %v1766 = vpack.c.bf16 %v1736, %v1735
        %v1767 = vpack.c.bf16 %v1738, %v1737
        %v1768 = vpack.c.bf16 %v1740, %v1739
        %v1769 = vpack.c.bf16 %v1742, %v1741
        %v1770 = vpack.c.bf16 %v1744, %v1743
        %v1771 = vpack.c.bf16 %v1746, %v1745
        %v1772 = vpack.c.bf16 %v1748, %v1747
        %v1773 = vpack.c.bf16 %v1750, %v1749
        %v1774 = vpack.c.bf16 %v1752, %v1751
        %v1775 = vpack.c.bf16 %v1754, %v1753
        %v1776 = vpack.c.bf16 %v1756, %v1755
        %v1777 = vpack.c.bf16 %v1758, %v1757
        %v1778 = vpack.c.bf16 %v1760, %v1759
        %v1779 = vpack.c.bf16 %v1762, %v1761
        %v1780 = vpack.c.bf16 %v1764, %v1763
        %1797 = vrot.lane.b32.xlu0 %v1765, 32
        %v1798 = vpop.permute.xlu0 %1797
        %1799 = vrot.lane.b32.xlu0 %v1766, 32
        %v1800 = vpop.permute.xlu0 %1799
        %1801 = vrot.lane.b32.xlu0 %v1767, 32
        %v1802 = vpop.permute.xlu0 %1801
        %1803 = vrot.lane.b32.xlu0 %v1768, 32
        %v1804 = vpop.permute.xlu0 %1803
        %1805 = vrot.lane.b32.xlu0 %v1769, 32
        %v1806 = vpop.permute.xlu0 %1805
        %1807 = vrot.lane.b32.xlu0 %v1770, 32
        %v1808 = vpop.permute.xlu0 %1807
        %1809 = vrot.lane.b32.xlu0 %v1771, 32
        %v1810 = vpop.permute.xlu0 %1809
        %1811 = vrot.lane.b32.xlu0 %v1772, 32
        %v1812 = vpop.permute.xlu0 %1811
        %1813 = vrot.lane.b32.xlu0 %v1773, 32
        %v1814 = vpop.permute.xlu0 %1813
        %1815 = vrot.lane.b32.xlu0 %v1774, 32
        %v1816 = vpop.permute.xlu0 %1815
        %1817 = vrot.lane.b32.xlu0 %v1775, 32
        %v1818 = vpop.permute.xlu0 %1817
        %1819 = vrot.lane.b32.xlu0 %v1776, 32
        %v1820 = vpop.permute.xlu0 %1819
        %1821 = vrot.lane.b32.xlu0 %v1777, 32
        %v1822 = vpop.permute.xlu0 %1821
        %1823 = vrot.lane.b32.xlu0 %v1778, 32
        %v1824 = vpop.permute.xlu0 %1823
        %1825 = vrot.lane.b32.xlu0 %v1779, 32
        %v1826 = vpop.permute.xlu0 %1825
        %1827 = vrot.lane.b32.xlu0 %v1780, 32
        %v1828 = vpop.permute.xlu0 %1827
        %vm1845 = vcmask 294144
        %1846 = vst.msk [vmem:[#allocation3] sm:$0xff] %vm1845, %v1798
        %1847 = vst.msk [vmem:[#allocation3 + $0x8] sm:$0xff] %vm1845, %v1800
        %1848 = vst.msk [vmem:[#allocation3 + $0x10] sm:$0xff] %vm1845, %v1802
        %1849 = vst.msk [vmem:[#allocation3 + $0x18] sm:$0xff] %vm1845, %v1804
        %1850 = vst.msk [vmem:[#allocation3 + $0x20] sm:$0xff] %vm1845, %v1806
        %1851 = vst.msk [vmem:[#allocation3 + $0x28] sm:$0xff] %vm1845, %v1808
        %1852 = vst.msk [vmem:[#allocation3 + $0x30] sm:$0xff] %vm1845, %v1810
        %1853 = vst.msk [vmem:[#allocation3 + $0x38] sm:$0xff] %vm1845, %v1812
        %1854 = vst.msk [vmem:[#allocation3 + $0x40] sm:$0xff] %vm1845, %v1814
        %1855 = vst.msk [vmem:[#allocation3 + $0x48] sm:$0xff] %vm1845, %v1816
        %1856 = vst.msk [vmem:[#allocation3 + $0x50] sm:$0xff] %vm1845, %v1818
        %1857 = vst.msk [vmem:[#allocation3 + $0x58] sm:$0xff] %vm1845, %v1820
        %1858 = vst.msk [vmem:[#allocation3 + $0x60] sm:$0xff] %vm1845, %v1822
        %1859 = vst.msk [vmem:[#allocation3 + $0x68] sm:$0xff] %vm1845, %v1824
        %1860 = vst.msk [vmem:[#allocation3 + $0x70] sm:$0xff] %vm1845, %v1826
        %1861 = vst.msk [vmem:[#allocation3 + $0x78] sm:$0xff] %vm1845, %v1828
        %v1862 = vld [vmem:[#allocation3] sm:$0xff]
        %v1863 = vld [vmem:[#allocation3 + $0x8] sm:$0xff]
        %v1864 = vld [vmem:[#allocation3 + $0x10] sm:$0xff]
        %v1865 = vld [vmem:[#allocation3 + $0x18] sm:$0xff]
        %v1866 = vld [vmem:[#allocation3 + $0x20] sm:$0xff]
        %v1867 = vld [vmem:[#allocation3 + $0x28] sm:$0xff]
        %v1868 = vld [vmem:[#allocation3 + $0x30] sm:$0xff]
        %v1869 = vld [vmem:[#allocation3 + $0x38] sm:$0xff]
        %v1870 = vld [vmem:[#allocation3 + $0x40] sm:$0xff]
        %v1871 = vld [vmem:[#allocation3 + $0x48] sm:$0xff]
        %v1872 = vld [vmem:[#allocation3 + $0x50] sm:$0xff]
        %v1873 = vld [vmem:[#allocation3 + $0x58] sm:$0xff]
        %v1874 = vld [vmem:[#allocation3 + $0x60] sm:$0xff]
        %v1875 = vld [vmem:[#allocation3 + $0x68] sm:$0xff]
        %v1876 = vld [vmem:[#allocation3 + $0x70] sm:$0xff]
        %v1877 = vld [vmem:[#allocation3 + $0x78] sm:$0xff]
        %v1878 = vld [vmem:[#allocation12] sm:$0xf]
        %v1879 = vld [vmem:[#allocation12 + $0x4] sm:$0xf]
        %v1880 = vld [vmem:[#allocation12 + $0x8] sm:$0xf]
        %v1881 = vld [vmem:[#allocation12 + $0xc] sm:$0xf]
        %v1882 = vld [vmem:[#allocation12 + $0x10] sm:$0x3]
        %v1888 = vunpack.c.l.b16 %v1878
        %v1889 = vunpack.c.l.b16 %v1879
        %v1890 = vunpack.c.l.b16 %v1880
        %v1891 = vunpack.c.l.b16 %v1881
        %v1892 = vunpack.c.l.b16 %v1882
        %v1893 = vpack.c.b16 %v1889, %v1888
        %v1894 = vpack.c.b16 %v1891, %v1890
        %v1895 = vpack.c.b16 %v1892, %v1892
        %vm1898 = vcmask 293888
        %v1900 = vsel %vm1898, %v1862, 0
        %v1903 = vsel %vm1898, %v1863, 0
        %v1906 = vsel %vm1898, %v1864, 0
        %v1909 = vsel %vm1898, %v1865, 0
        %v1912 = vsel %vm1898, %v1866, 0
        %v1915 = vsel %vm1898, %v1867, 0
        %v1918 = vsel %vm1898, %v1868, 0
        %v1921 = vsel %vm1898, %v1869, 0
        %v1924 = vsel %vm1898, %v1870, 0
        %v1927 = vsel %vm1898, %v1871, 0
        %v1930 = vsel %vm1898, %v1872, 0
        %v1933 = vsel %vm1898, %v1873, 0
        %v1936 = vsel %vm1898, %v1874, 0
        %v1939 = vsel %vm1898, %v1875, 0
        %v1942 = vsel %vm1898, %v1876, 0
        %v1945 = vsel %vm1898, %v1877, 0
        %vm1947 = vcmask 1041408
        %v1949 = vsel %vm1947, %v1895, 0
        %1951 = vmatprep.subr.bf16.mxu0 0
        %1952 = vmatpush1.bf16.msra.mxu0 %v1893
        %1953 = vmatprep.subr.bf16.mxu0 0
        %1954 = vmatpush1.bf16.msra.mxu0 %v1894
        %1955 = vmatprep.subr.bf16.mxu0 0
        %1956 = vmatpush1.bf16.msra.mxu0 %v1949
        %1957 = vmatprep.subr.bf16.mxu0 0
        %1958 = vmatpush1.bf16.msra.mxu0 0
        %1959 = vmatprep.subr.bf16.mxu0 0
        %1960 = vmatpush1.bf16.msra.mxu0 0
        %1961 = vmatprep.subr.bf16.mxu0 0
        %1962 = vmatpush1.bf16.msra.mxu0 0
        %1963 = vmatprep.subr.bf16.mxu0 0
        %1964 = vmatpush1.bf16.msra.mxu0 0
        %1965 = vmatprep.subr.bf16.mxu0 0
        %1966 = vmatpush1.bf16.msra.mxu0 0
        %1967 = vmatprep.subr.bf16.mxu0 0
        %1968 = vmatpush1.bf16.msra.mxu0 0
        %1969 = vmatprep.subr.bf16.mxu0 0
        %1970 = vmatpush1.bf16.msra.mxu0 0
        %1971 = vmatprep.subr.bf16.mxu0 0
        %1972 = vmatpush1.bf16.msra.mxu0 0
        %1973 = vmatprep.subr.bf16.mxu0 0
        %1974 = vmatpush1.bf16.msra.mxu0 0
        %1975 = vmatprep.subr.bf16.mxu0 0
        %1976 = vmatpush1.bf16.msra.mxu0 0
        %1977 = vmatprep.subr.bf16.mxu0 0
        %1978 = vmatpush1.bf16.msra.mxu0 0
        %1979 = vmatprep.subr.bf16.mxu0 0
        %1980 = vmatpush1.bf16.msra.mxu0 0
        %1981 = vmatprep.subr.bf16.mxu0 0
        %1982 = vmatpush1.bf16.msra.mxu0 0
        %1983 = vmatprep.mubr.bf16.mxu0 0
        %1984 = vmatmul.mubr.bf16.gmra.mrb[0].mxu0 %v1900
        %v1985 = vpop.f32.mrb[0].mxu0
        %v1986 = vadd.f32 0.0, %v1985
        %v1987 = vpop.f32.mrb[0].mxu0
        %v1988 = vpop.f32.mrb[0].mxu0
        %v1989 = vadd.f32 0.0, %v1988
        %v1990 = vpop.f32.mrb[0].mxu0
        %1991 = vmatprep.mubr.bf16.mxu0 0
        %1992 = vmatmul.mubr.bf16.gmra.mrb[0].mxu0 %v1903
        %v1993 = vpop.f32.mrb[0].mxu0
        %v1994 = vadd.f32 0.0, %v1993
        %v1995 = vpop.f32.mrb[0].mxu0
        %v1996 = vpop.f32.mrb[0].mxu0
        %v1997 = vadd.f32 0.0, %v1996
        %v1998 = vpop.f32.mrb[0].mxu0
        %1999 = vmatprep.mubr.bf16.mxu0 0
        %2000 = vmatmul.mubr.bf16.gmra.mrb[0].mxu0 %v1906
        %v2001 = vpop.f32.mrb[0].mxu0
        %v2002 = vadd.f32 0.0, %v2001
        %v2003 = vpop.f32.mrb[0].mxu0
        %v2004 = vpop.f32.mrb[0].mxu0
        %v2005 = vadd.f32 0.0, %v2004
        %v2006 = vpop.f32.mrb[0].mxu0
        %2007 = vmatprep.mubr.bf16.mxu0 0
        %2008 = vmatmul.mubr.bf16.gmra.mrb[0].mxu0 %v1909
        %v2009 = vpop.f32.mrb[0].mxu0
        %v2010 = vadd.f32 0.0, %v2009
        %v2011 = vpop.f32.mrb[0].mxu0
        %v2012 = vpop.f32.mrb[0].mxu0
        %v2013 = vadd.f32 0.0, %v2012
        %v2014 = vpop.f32.mrb[0].mxu0
        %2015 = vmatprep.mubr.bf16.mxu0 0
        %2016 = vmatmul.mubr.bf16.gmra.mrb[0].mxu0 %v1912
        %v2017 = vpop.f32.mrb[0].mxu0
        %v2018 = vadd.f32 0.0, %v2017
        %v2019 = vpop.f32.mrb[0].mxu0
        %v2020 = vpop.f32.mrb[0].mxu0
        %v2021 = vadd.f32 0.0, %v2020
        %v2022 = vpop.f32.mrb[0].mxu0
        %2023 = vmatprep.mubr.bf16.mxu0 0
        %2024 = vmatmul.mubr.bf16.gmra.mrb[0].mxu0 %v1915
        %v2025 = vpop.f32.mrb[0].mxu0
        %v2026 = vadd.f32 0.0, %v2025
        %v2027 = vpop.f32.mrb[0].mxu0
        %v2028 = vpop.f32.mrb[0].mxu0
        %v2029 = vadd.f32 0.0, %v2028
        %v2030 = vpop.f32.mrb[0].mxu0
        %2031 = vmatprep.mubr.bf16.mxu0 0
        %2032 = vmatmul.mubr.bf16.gmra.mrb[0].mxu0 %v1918
        %v2033 = vpop.f32.mrb[0].mxu0
        %v2034 = vadd.f32 0.0, %v2033
        %v2035 = vpop.f32.mrb[0].mxu0
        %v2036 = vpop.f32.mrb[0].mxu0
        %v2037 = vadd.f32 0.0, %v2036
        %v2038 = vpop.f32.mrb[0].mxu0
        %2039 = vmatprep.mubr.bf16.mxu0 0
        %2040 = vmatmul.mubr.bf16.gmra.mrb[0].mxu0 %v1921
        %v2041 = vpop.f32.mrb[0].mxu0
        %v2042 = vadd.f32 0.0, %v2041
        %v2043 = vpop.f32.mrb[0].mxu0
        %v2044 = vpop.f32.mrb[0].mxu0
        %v2045 = vadd.f32 0.0, %v2044
        %v2046 = vpop.f32.mrb[0].mxu0
        %2047 = vmatprep.mubr.bf16.mxu0 0
        %2048 = vmatmul.mubr.bf16.gmra.mrb[0].mxu0 %v1924
        %v2049 = vpop.f32.mrb[0].mxu0
        %v2050 = vadd.f32 0.0, %v2049
        %v2051 = vpop.f32.mrb[0].mxu0
        %v2052 = vpop.f32.mrb[0].mxu0
        %v2053 = vadd.f32 0.0, %v2052
        %v2054 = vpop.f32.mrb[0].mxu0
        %2055 = vmatprep.mubr.bf16.mxu0 0
        %2056 = vmatmul.mubr.bf16.gmra.mrb[0].mxu0 %v1927
        %v2057 = vpop.f32.mrb[0].mxu0
        %v2058 = vadd.f32 0.0, %v2057
        %v2059 = vpop.f32.mrb[0].mxu0
        %v2060 = vpop.f32.mrb[0].mxu0
        %v2061 = vadd.f32 0.0, %v2060
        %v2062 = vpop.f32.mrb[0].mxu0
        %2063 = vmatprep.mubr.bf16.mxu0 0
        %2064 = vmatmul.mubr.bf16.gmra.mrb[0].mxu0 %v1930
        %v2065 = vpop.f32.mrb[0].mxu0
        %v2066 = vadd.f32 0.0, %v2065
        %v2067 = vpop.f32.mrb[0].mxu0
        %v2068 = vpop.f32.mrb[0].mxu0
        %v2069 = vadd.f32 0.0, %v2068
        %v2070 = vpop.f32.mrb[0].mxu0
        %2071 = vmatprep.mubr.bf16.mxu0 0
        %2072 = vmatmul.mubr.bf16.gmra.mrb[0].mxu0 %v1933
        %v2073 = vpop.f32.mrb[0].mxu0
        %v2074 = vadd.f32 0.0, %v2073
        %v2075 = vpop.f32.mrb[0].mxu0
        %v2076 = vpop.f32.mrb[0].mxu0
        %v2077 = vadd.f32 0.0, %v2076
        %v2078 = vpop.f32.mrb[0].mxu0
        %2079 = vmatprep.mubr.bf16.mxu0 0
        %2080 = vmatmul.mubr.bf16.gmra.mrb[0].mxu0 %v1936
        %v2081 = vpop.f32.mrb[0].mxu0
        %v2082 = vadd.f32 0.0, %v2081
        %v2083 = vpop.f32.mrb[0].mxu0
        %v2084 = vpop.f32.mrb[0].mxu0
        %v2085 = vadd.f32 0.0, %v2084
        %v2086 = vpop.f32.mrb[0].mxu0
        %2087 = vmatprep.mubr.bf16.mxu0 0
        %2088 = vmatmul.mubr.bf16.gmra.mrb[0].mxu0 %v1939
        %v2089 = vpop.f32.mrb[0].mxu0
        %v2090 = vadd.f32 0.0, %v2089
        %v2091 = vpop.f32.mrb[0].mxu0
        %v2092 = vpop.f32.mrb[0].mxu0
        %v2093 = vadd.f32 0.0, %v2092
        %v2094 = vpop.f32.mrb[0].mxu0
        %2095 = vmatprep.mubr.bf16.mxu0 0
        %2096 = vmatmul.mubr.bf16.gmra.mrb[0].mxu0 %v1942
        %v2097 = vpop.f32.mrb[0].mxu0
        %v2098 = vadd.f32 0.0, %v2097
        %v2099 = vpop.f32.mrb[0].mxu0
        %v2100 = vpop.f32.mrb[0].mxu0
        %v2101 = vadd.f32 0.0, %v2100
        %v2102 = vpop.f32.mrb[0].mxu0
        %2103 = vmatprep.mubr.bf16.mxu0 0
        %2104 = vmatmul.mubr.bf16.gmra.mrb[0].mxu0 %v1945
        %v2105 = vpop.f32.mrb[0].mxu0
        %v2106 = vadd.f32 0.0, %v2105
        %v2107 = vpop.f32.mrb[0].mxu0
        %v2108 = vpop.f32.mrb[0].mxu0
        %v2109 = vadd.f32 0.0, %v2108
        %v2110 = vpop.f32.mrb[0].mxu0
        %2111 = vdwg.mxu0
        %2112 = vxpose.xlu0.b32.start [1/16] %v1986, 128
        %2113 = vxpose.xlu0.b32.cont [2/16] %v1989, 128
        %2114 = vxpose.xlu0.b32.cont [3/16] %v1994, 128
        %2115 = vxpose.xlu0.b32.cont [4/16] %v1997, 128
        %2116 = vxpose.xlu0.b32.cont [5/16] %v2002, 128
        %2117 = vxpose.xlu0.b32.cont [6/16] %v2005, 128
        %2118 = vxpose.xlu0.b32.cont [7/16] %v2010, 128
        %2119 = vxpose.xlu0.b32.cont [8/16] %v2013, 128
        %2120 = vxpose.xlu0.b32.cont [9/16] %v2018, 128
        %2121 = vxpose.xlu0.b32.cont [10/16] %v2021, 128
        %2122 = vxpose.xlu0.b32.cont [11/16] %v2026, 128
        %2123 = vxpose.xlu0.b32.cont [12/16] %v2029, 128
        %2124 = vxpose.xlu0.b32.cont [13/16] %v2034, 128
        %2125 = vxpose.xlu0.b32.cont [14/16] %v2037, 128
        %2126 = vxpose.xlu0.b32.cont [15/16] %v2042, 128
        %2127 = vxpose.xlu0.b32.end [16/16] %v2045, 128
        %v2128 = vpop.trf.xlu0
        %v2129 = vpop.trf.xlu0
        %v2130 = vpop.trf.xlu0
        %v2131 = vpop.trf.xlu0
        %v2132 = vpop.trf.xlu0
        %v2133 = vpop.trf.xlu0
        %v2134 = vpop.trf.xlu0
        %v2135 = vpop.trf.xlu0
        %v2136 = vpop.trf.xlu0
        %v2137 = vpop.trf.xlu0
        %v2138 = vpop.trf.xlu0
        %v2139 = vpop.trf.xlu0
        %v2140 = vpop.trf.xlu0
        %v2141 = vpop.trf.xlu0
        %v2142 = vpop.trf.xlu0
        %v2143 = vpop.trf.xlu0
        %2144 = vxpose.xlu0.b32.start [1/16] %v2050, 128
        %2145 = vxpose.xlu0.b32.cont [2/16] %v2053, 128
        %2146 = vxpose.xlu0.b32.cont [3/16] %v2058, 128
        %2147 = vxpose.xlu0.b32.cont [4/16] %v2061, 128
        %2148 = vxpose.xlu0.b32.cont [5/16] %v2066, 128
        %2149 = vxpose.xlu0.b32.cont [6/16] %v2069, 128
        %2150 = vxpose.xlu0.b32.cont [7/16] %v2074, 128
        %2151 = vxpose.xlu0.b32.cont [8/16] %v2077, 128
        %2152 = vxpose.xlu0.b32.cont [9/16] %v2082, 128
        %2153 = vxpose.xlu0.b32.cont [10/16] %v2085, 128
        %2154 = vxpose.xlu0.b32.cont [11/16] %v2090, 128
        %2155 = vxpose.xlu0.b32.cont [12/16] %v2093, 128
        %2156 = vxpose.xlu0.b32.cont [13/16] %v2098, 128
        %2157 = vxpose.xlu0.b32.cont [14/16] %v2101, 128
        %2158 = vxpose.xlu0.b32.cont [15/16] %v2106, 128
        %2159 = vxpose.xlu0.b32.end [16/16] %v2109, 128
        %v2160 = vpop.trf.xlu0
        %v2161 = vpop.trf.xlu0
        %v2162 = vpop.trf.xlu0
        %v2163 = vpop.trf.xlu0
        %v2164 = vpop.trf.xlu0
        %v2165 = vpop.trf.xlu0
        %v2166 = vpop.trf.xlu0
        %v2167 = vpop.trf.xlu0
        %v2168 = vpop.trf.xlu0
        %v2169 = vpop.trf.xlu0
        %v2170 = vpop.trf.xlu0
        %v2171 = vpop.trf.xlu0
        %v2172 = vpop.trf.xlu0
        %v2173 = vpop.trf.xlu0
        %v2174 = vpop.trf.xlu0
        %v2175 = vpop.trf.xlu0
        %v2176 = vld [vmem:[%s274] sm:$0xff]
        %v2178 = vcombine.high %v2176, %v2176
        %v2180 = vadd.f32 %v2128, %v2176
        %v2181 = vadd.f32 %v2160, %v2178
        %v2184 = vcombine.low %v2180, %v2181
        %2186 = vst [vmem:[%s317] sm:$0xff] %v2184
        %s2187 = sand.u32 %s149, 1
        %s2188 = scalar_lea.sflag [#allocation6], %s2187
        %s2189 = sand.u32 %s149, 1
        %s2190 = smul.addr %s2189, 8
        %s2191 = scalar_lea.vmem [#allocation13], %s2190
        // Predicated region
        $region61: #{residual_block.3} parent=39 // pred_check
          %p2192 = pneg %p159
        $region62: #{residual_block.3} parent=39 // pred_check_branch
          %2194 = sbr.rel (%p2192) target = $region64
        $region63: #{residual_block.3} parent=39 // pred_region
          %s2196 = ssub.s32 128, 128
          %2197 = vsyncadd %s2188, %s2196
          %s2198 = smul.addr %s26, 2
          %s2199 = smul.addr %s2198, 64
          %s2200 = scalar_lea.hbm %s5, %s2199
          %s2202 = sshll.u32 %s2191, 4
          %s2203 = int_to_ptr.vmem [resolvable:$true] %s2202
          %2205 = dma.vmem_to_hbm [thread:$0]  %s2203, 128, %s2200, %s2188
        $region64: #{residual_block.3} parent=39 // pred_fallthru
          _
      $region40: #{residual_block.3} parent=5 // pred_fallthru
        _
      %p2206 = scmp.le.s32.totalorder 2, %s21
      // Predicated region
      $region65: #{residual_block.3} parent=5 // pred_check
        %p2207 = pneg %p2206
      $region66: #{residual_block.3} parent=5 // pred_check_branch
        %2209 = sbr.rel (%p2207) target = $region68
      $region67: #{residual_block.3} parent=5 // pred_region
        %s2210 = ssub.s32 %s21, 2
        // Predicated region
        $region69: #{residual_block.3} parent=67 // pred_check
          %p2211 = pneg %p165
        $region70: #{residual_block.3} parent=67 // pred_check_branch
          %2213 = sbr.rel (%p2211) target = $region72
        $region71: #{residual_block.3} parent=67 // pred_region
          %s2214 = sand.u32 %s150, 1
          %s2215 = scalar_lea.sflag [#allocation6], %s2214
          %s2216 = sand.u32 %s150, 1
          %s2217 = smul.addr %s2216, 8
          %s2218 = scalar_lea.vmem [#allocation13], %s2217
          %2219 = dma.done %s2215, 128
        $region72: #{residual_block.3} parent=67 // pred_fallthru
          _
      $region68: #{residual_block.3} parent=5 // pred_fallthru
        _
    $region6: #{residual_block.3} parent=1 // loop_footer
      %s25 = sadd.s32 1, %s21
    $region7: #{residual_block.3} parent=1 // loop_footer_branch
      %20 = sbr.rel target = $region3
    $region8: #{residual_block.3} parent=1 // loop_exit
      _
    %2220 = vsyncpa [#allocation5], 1
    %s2221 = scalar_lea.sflag [#allocation5], 1
    %2222 = vsyncpa %s2221, 1
    %2223 = vsyncpa [#allocation8], 1
    %s2224 = scalar_lea.sflag [#allocation8], 1
    %2225 = vsyncpa %s2224, 1
    %2226 = vsyncpa [#allocation11], 1
    %2227 = vsyncpa [#allocation6], 1
    %s2228 = scalar_lea.sflag [#allocation6], 1
    %2229 = vsyncpa %s2228, 1

// kernel: residual_block.2
$region0: #{residual_block.2}
  #allocation0 [shape = 'u32[]', space=smem, size = 0x4, offset = 0x4, fixed_abs, tag = 'smem constant byte address 0x4 - core index']
  #allocation1 [shape = 'u32[144,128]{1,0:T(1,128)}', space=vmem, size = 0x12000, scoped, tag = 'internal scratch']
  #allocation2 [shape = 'f32[18,32,4]{2,1,0:T(8,128)}', space=vmem, size = 0x48000, scoped, tag = 'scratch operand']
  #allocation3 [shape = 'bf16[256,36]{1,0:T(16,128)(2,1)}', space=vmem, size = 0x10000, scoped, tag = 'scratch operand']
  %s0 = inlined_call_operand.hbm [shape: f32[2,4,256], index: 0, kind: input, shape index: {}]
  %s1 = inlined_call_operand.hbm [shape: f32[1,4], index: 1, kind: input, shape index: {}]
  %s2 = inlined_call_operand.hbm [shape: f32[1,4], index: 2, kind: input, shape index: {}]
  %s3 = inlined_call_operand.hbm [shape: bf16[36,128], index: 3, kind: input, shape index: {}]
  %s4 = inlined_call_operand.hbm [shape: f32[256,4], index: 4, kind: input, shape index: {}]
  %s5 = inlined_call_operand.hbm [shape: bf16[2,4,256], index: 5, kind: output, shape index: {0}]
  %s6 = inlined_call_operand.hbm [shape: f32[2,1,4], index: 6, kind: output, shape index: {1}]
  %s7 = inlined_call_operand.hbm [shape: f32[2,1,4], index: 7, kind: output, shape index: {2}]
  %8 = xla_tuple %s5, %s6, %s7
  %s9 = sld [smem:[#allocation0]]
  $region89: #{residual_block.2} parent=0
    _
  %s11 = ssub.s32 1, %s9
  %s12 = scalar_select 0, %s11, %s9
  $region1: #{residual_block.2} parent=0
    #allocation4 [shape = 'u8[8192]{0}', space=vmem, size = 0x2000, scoped, tag = 'input window, operand 0']
    #allocation5 [shape = 's32[2]{0}', space=sflag, size = 0x8, scoped, tag = 'scoped memory for residual_block.2']
    #allocation6 [shape = 's32[2]{0}', space=sflag, size = 0x8, scoped, tag = 'scoped memory for residual_block.2']
    #allocation7 [shape = 'u8[512]{0}', space=vmem, size = 0x400, scoped, tag = 'input window, operand 1, single buffered']
    #allocation8 [shape = 's32[1]{0}', space=sflag, size = 0x4, scoped, tag = 'scoped memory for residual_block.2']
    #allocation9 [shape = 'u8[512]{0}', space=vmem, size = 0x400, scoped, tag = 'input window, operand 2, single buffered']
    #allocation10 [shape = 'u8[10240]{0}', space=vmem, size = 0x2800, scoped, tag = 'input window, operand 3, single buffered']
    #allocation11 [shape = 's32[1]{0}', space=sflag, size = 0x4, scoped, tag = 'scoped memory for residual_block.2']
    #allocation12 [shape = 'u8[131072]{0}', space=vmem, size = 0x20000, scoped, tag = 'input window, operand 4, single buffered']
    #allocation13 [shape = 'u8[4096]{0}', space=vmem, size = 0x1000, scoped, tag = 'output window, operand 0']
    #allocation14 [shape = 'u8[1024]{0}', space=vmem, size = 0x400, scoped, tag = 'output window, operand 1']
    #allocation15 [shape = 's32[2]{0}', space=sflag, size = 0x8, scoped, tag = 'scoped memory for residual_block.2']
    #allocation16 [shape = 'u8[1024]{0}', space=vmem, size = 0x400, scoped, tag = 'output window, operand 2']
    %13 = vsyncpa [#allocation5], 0
    %s14 = scalar_lea.sflag [#allocation5], 1
    %15 = vsyncpa %s14, 0
    %16 = vsyncpa [#allocation8], 0
    %17 = vsyncpa [#allocation11], 0
    %18 = vsyncpa [#allocation6], 0
    %s19 = scalar_lea.sflag [#allocation6], 1
    %20 = vsyncpa %s19, 0
    %21 = vsyncpa [#allocation15], 0
    %s22 = scalar_lea.sflag [#allocation15], 1
    %23 = vsyncpa %s22, 0
    loop: start=0, step=1, limit=4
    $region2: #{residual_block.2} parent=1 // loop_pre_header
      _
    $region3: #{residual_block.2} parent=1 // loop_header
      %s25 = sphi 0, %s29
      %p26 = scmp.ge.s32.totalorder %s25, 4
      %s35 = sphi 0, %s37
      %s38 = sphi 0, %s35
      %s39 = sphi 0, %s38
      %s55 = sphi 0, %s39
      %s59 = sphi 0, %s59
      %s61 = sphi 0, %s59
      %s62 = sphi 0, %s61
      %s76 = sphi 0, %s62
      %s80 = sphi 0, %s80
      %s82 = sphi 0, %s80
      %s83 = sphi 0, %s82
      %s97 = sphi 0, %s83
      %s101 = sphi 0, %s101
      %s103 = sphi 0, %s101
      %s104 = sphi 0, %s103
      %s118 = sphi 0, %s104
      %s122 = sphi 0, %s122
      %s124 = sphi 0, %s122
      %s125 = sphi 0, %s124
      %s139 = sphi 0, %s125
      %s145 = sphi 0, %s147
      %s148 = sphi 0, %s145
      %s149 = sphi 0, %s148
      %s165 = sphi 0, %s149
      %s171 = sphi 0, %s173
      %s174 = sphi 0, %s171
      %s175 = sphi 0, %s174
      %s191 = sphi 0, %s175
      %s197 = sphi 0, %s199
      %s200 = sphi 0, %s197
      %s201 = sphi 0, %s200
      %s217 = sphi 0, %s201
    $region4: #{residual_block.2} parent=1 // loop_header_branch
      %28 = sbr.rel (%p26) target = $region8
    $region5: #{residual_block.2} parent=1 // loop_body
      %s30 = ssub.s32 %s25, 1
      %s31 = ssub.s32 %s25, 2
      %s32 = sadd.s32 %s25, 1
      %s33 = ssub.s32 %s25, %s32
      %p34 = scmp.eq.s32.totalorder %s33, 0
      %s36 = sadd.s32 %s35, 1
      %s37 = scalar_select %p34, %s35, %s36
      %p40 = pneg %p34
      %p41 = scmp.eq.s32.totalorder %s25, 1
      %p42 = por %p40, %p41
      %p43 = scmp.ne.s32.totalorder %s35, %s38
      %p44 = scmp.eq.s32.totalorder %s25, 0
      %p45 = por %p43, %p44
      %p46 = scmp.ne.s32.totalorder %s35, %s38
      %p47 = scmp.eq.s32.totalorder %s30, 1
      %p48 = por %p46, %p47
      %p49 = scmp.ne.s32.totalorder %s38, %s39
      %p50 = scmp.eq.s32.totalorder %s30, 0
      %p51 = por %p49, %p50
      %p52 = scmp.ne.s32.totalorder %s38, %s39
      %p53 = scmp.eq.s32.totalorder %s31, 1
      %p54 = por %p52, %p53
      %p56 = scmp.ne.s32.totalorder %s39, %s55
      %p57 = scmp.eq.s32.totalorder %s31, 0
      %p58 = por %p56, %p57
      %s60 = sadd.s32 %s59, 1
      %p63 = scmp.eq.s32.totalorder %s25, 1
      %p64 = scmp.ne.s32.totalorder %s59, %s61
      %p65 = scmp.eq.s32.totalorder %s25, 0
      %p66 = por %p64, %p65
      %p67 = scmp.ne.s32.totalorder %s59, %s61
      %p68 = scmp.eq.s32.totalorder %s30, 1
      %p69 = por %p67, %p68
      %p70 = scmp.ne.s32.totalorder %s61, %s62
      %p71 = scmp.eq.s32.totalorder %s30, 0
      %p72 = por %p70, %p71
      %p73 = scmp.ne.s32.totalorder %s61, %s62
      %p74 = scmp.eq.s32.totalorder %s31, 1
      %p75 = por %p73, %p74
      %p77 = scmp.ne.s32.totalorder %s62, %s76
      %p78 = scmp.eq.s32.totalorder %s31, 0
      %p79 = por %p77, %p78
      %s81 = sadd.s32 %s80, 1
      %p84 = scmp.eq.s32.totalorder %s25, 1
      %p85 = scmp.ne.s32.totalorder %s80, %s82
      %p86 = scmp.eq.s32.totalorder %s25, 0
      %p87 = por %p85, %p86
      %p88 = scmp.ne.s32.totalorder %s80, %s82
      %p89 = scmp.eq.s32.totalorder %s30, 1
      %p90 = por %p88, %p89
      %p91 = scmp.ne.s32.totalorder %s82, %s83
      %p92 = scmp.eq.s32.totalorder %s30, 0
      %p93 = por %p91, %p92
      %p94 = scmp.ne.s32.totalorder %s82, %s83
      %p95 = scmp.eq.s32.totalorder %s31, 1
      %p96 = por %p94, %p95
      %p98 = scmp.ne.s32.totalorder %s83, %s97
      %p99 = scmp.eq.s32.totalorder %s31, 0
      %p100 = por %p98, %p99
      %s102 = sadd.s32 %s101, 1
      %p105 = scmp.eq.s32.totalorder %s25, 1
      %p106 = scmp.ne.s32.totalorder %s101, %s103
      %p107 = scmp.eq.s32.totalorder %s25, 0
      %p108 = por %p106, %p107
      %p109 = scmp.ne.s32.totalorder %s101, %s103
      %p110 = scmp.eq.s32.totalorder %s30, 1
      %p111 = por %p109, %p110
      %p112 = scmp.ne.s32.totalorder %s103, %s104
      %p113 = scmp.eq.s32.totalorder %s30, 0
      %p114 = por %p112, %p113
      %p115 = scmp.ne.s32.totalorder %s103, %s104
      %p116 = scmp.eq.s32.totalorder %s31, 1
      %p117 = por %p115, %p116
      %p119 = scmp.ne.s32.totalorder %s104, %s118
      %p120 = scmp.eq.s32.totalorder %s31, 0
      %p121 = por %p119, %p120
      %s123 = sadd.s32 %s122, 1
      %p126 = scmp.eq.s32.totalorder %s25, 1
      %p127 = scmp.ne.s32.totalorder %s122, %s124
      %p128 = scmp.eq.s32.totalorder %s25, 0
      %p129 = por %p127, %p128
      %p130 = scmp.ne.s32.totalorder %s122, %s124
      %p131 = scmp.eq.s32.totalorder %s30, 1
      %p132 = por %p130, %p131
      %p133 = scmp.ne.s32.totalorder %s124, %s125
      %p134 = scmp.eq.s32.totalorder %s30, 0
      %p135 = por %p133, %p134
      %p136 = scmp.ne.s32.totalorder %s124, %s125
      %p137 = scmp.eq.s32.totalorder %s31, 1
      %p138 = por %p136, %p137
      %p140 = scmp.ne.s32.totalorder %s125, %s139
      %p141 = scmp.eq.s32.totalorder %s31, 0
      %p142 = por %p140, %p141
      %s143 = ssub.s32 %s25, %s32
      %p144 = scmp.eq.s32.totalorder %s143, 0
      %s146 = sadd.s32 %s145, 1
      %s147 = scalar_select %p144, %s145, %s146
      %p150 = pneg %p144
      %p151 = scmp.eq.s32.totalorder %s25, 1
      %p152 = por %p150, %p151
      %p153 = scmp.ne.s32.totalorder %s145, %s148
      %p154 = scmp.eq.s32.totalorder %s25, 0
      %p155 = por %p153, %p154
      %p156 = scmp.ne.s32.totalorder %s145, %s148
      %p157 = scmp.eq.s32.totalorder %s30, 1
      %p158 = por %p156, %p157
      %p159 = scmp.ne.s32.totalorder %s148, %s149
      %p160 = scmp.eq.s32.totalorder %s30, 0
      %p161 = por %p159, %p160
      %p162 = scmp.ne.s32.totalorder %s148, %s149
      %p163 = scmp.eq.s32.totalorder %s31, 1
      %p164 = por %p162, %p163
      %p166 = scmp.ne.s32.totalorder %s149, %s165
      %p167 = scmp.eq.s32.totalorder %s31, 0
      %p168 = por %p166, %p167
      %s169 = ssub.s32 %s25, %s32
      %p170 = scmp.eq.s32.totalorder %s169, 0
      %s172 = sadd.s32 %s171, 1
      %s173 = scalar_select %p170, %s171, %s172
      %p176 = pneg %p170
      %p177 = scmp.eq.s32.totalorder %s25, 1
      %p178 = por %p176, %p177
      %p179 = scmp.ne.s32.totalorder %s171, %s174
      %p180 = scmp.eq.s32.totalorder %s25, 0
      %p181 = por %p179, %p180
      %p182 = scmp.ne.s32.totalorder %s171, %s174
      %p183 = scmp.eq.s32.totalorder %s30, 1
      %p184 = por %p182, %p183
      %p185 = scmp.ne.s32.totalorder %s174, %s175
      %p186 = scmp.eq.s32.totalorder %s30, 0
      %p187 = por %p185, %p186
      %p188 = scmp.ne.s32.totalorder %s174, %s175
      %p189 = scmp.eq.s32.totalorder %s31, 1
      %p190 = por %p188, %p189
      %p192 = scmp.ne.s32.totalorder %s175, %s191
      %p193 = scmp.eq.s32.totalorder %s31, 0
      %p194 = por %p192, %p193
      %s195 = ssub.s32 %s25, %s32
      %p196 = scmp.eq.s32.totalorder %s195, 0
      %s198 = sadd.s32 %s197, 1
      %s199 = scalar_select %p196, %s197, %s198
      %p202 = pneg %p196
      %p203 = scmp.eq.s32.totalorder %s25, 1
      %p204 = por %p202, %p203
      %p205 = scmp.ne.s32.totalorder %s197, %s200
      %p206 = scmp.eq.s32.totalorder %s25, 0
      %p207 = por %p205, %p206
      %p208 = scmp.ne.s32.totalorder %s197, %s200
      %p209 = scmp.eq.s32.totalorder %s30, 1
      %p210 = por %p208, %p209
      %p211 = scmp.ne.s32.totalorder %s200, %s201
      %p212 = scmp.eq.s32.totalorder %s30, 0
      %p213 = por %p211, %p212
      %p214 = scmp.ne.s32.totalorder %s200, %s201
      %p215 = scmp.eq.s32.totalorder %s31, 1
      %p216 = por %p214, %p215
      %p218 = scmp.ne.s32.totalorder %s201, %s217
      %p219 = scmp.eq.s32.totalorder %s31, 0
      %p220 = por %p218, %p219
      %p221 = scmp.le.s32.totalorder 1, %s25
      %p222 = scmp.lt.s32.totalorder %s25, 3
      %p223 = pnand %p221, %p222
      %p224 = pneg %p223
      // Predicated region
      $region9: #{residual_block.2} parent=5 // pred_check
        _
      $region10: #{residual_block.2} parent=5 // pred_check_branch
        %226 = sbr.rel (%p223) target = $region12
      $region11: #{residual_block.2} parent=5 // pred_region
        %s227 = ssub.s32 %s25, 1
        // Predicated region
        $region13: #{residual_block.2} parent=11 // pred_check
          %p228 = pneg %p72
        $region14: #{residual_block.2} parent=11 // pred_check_branch
          %230 = sbr.rel (%p228) target = $region16
        $region15: #{residual_block.2} parent=11 // pred_region
          %s232 = ssub.s32 16, 16
          %233 = vsyncadd [#allocation8], %s232
          %s235 = sshll.u32 [#allocation7], 4
          %s236 = int_to_ptr.vmem [resolvable:$true] %s235
          %238 = dma.hbm_to_vmem [thread:$0]  %s1, 16, %s236, [#allocation8]
        $region16: #{residual_block.2} parent=11 // pred_fallthru
          _
        // Predicated region
        $region17: #{residual_block.2} parent=11 // pred_check
          %p239 = pneg %p93
        $region18: #{residual_block.2} parent=11 // pred_check_branch
          %241 = sbr.rel (%p239) target = $region20
        $region19: #{residual_block.2} parent=11 // pred_region
          %s243 = ssub.s32 16, 16
          %244 = vsyncadd [#allocation8], %s243
          %s246 = sshll.u32 [#allocation9], 4
          %s247 = int_to_ptr.vmem [resolvable:$true] %s246
          %249 = dma.hbm_to_vmem [thread:$0]  %s2, 16, %s247, [#allocation8]
        $region20: #{residual_block.2} parent=11 // pred_fallthru
          _
        // Predicated region
        $region21: #{residual_block.2} parent=11 // pred_check
          %p250 = pneg %p114
        $region22: #{residual_block.2} parent=11 // pred_check_branch
          %252 = sbr.rel (%p250) target = $region24
        $region23: #{residual_block.2} parent=11 // pred_region
          %s254 = ssub.s32 320, 320
          %255 = vsyncadd [#allocation11], %s254
          %s256 = sshll.u32 [#allocation10], 4
          %s257 = int_to_ptr.vmem [resolvable:$true] %s256
          %262 = dma.hbm_to_vmem [thread:$0]  %s3, 320, %s257, [#allocation11], 64, 64, 4
        $region24: #{residual_block.2} parent=11 // pred_fallthru
          _
        // Predicated region
        $region25: #{residual_block.2} parent=11 // pred_check
          %p263 = pneg %p135
        $region26: #{residual_block.2} parent=11 // pred_check_branch
          %265 = sbr.rel (%p263) target = $region28
        $region27: #{residual_block.2} parent=11 // pred_region
          %s267 = ssub.s32 4096, 4096
          %268 = vsyncadd [#allocation11], %s267
          %s269 = sshll.u32 [#allocation12], 4
          %s270 = int_to_ptr.vmem [resolvable:$true] %s269
          %275 = dma.hbm_to_vmem [thread:$0]  %s4, 4096, %s270, [#allocation11], 128, 128, 8
        $region28: #{residual_block.2} parent=11 // pred_fallthru
          _
      $region12: #{residual_block.2} parent=5 // pred_fallthru
        _
      %p276 = scmp.lt.s32.totalorder %s25, 2
      // Predicated region
      $region29: #{residual_block.2} parent=5 // pred_check
        %p277 = pneg %p276
      $region30: #{residual_block.2} parent=5 // pred_check_branch
        %279 = sbr.rel (%p277) target = $region32
      $region31: #{residual_block.2} parent=5 // pred_region
        // Predicated region
        $region33: #{residual_block.2} parent=31 // pred_check
          %p280 = pneg %p45
        $region34: #{residual_block.2} parent=31 // pred_check_branch
          %282 = sbr.rel (%p280) target = $region36
        $region35: #{residual_block.2} parent=31 // pred_region
          %s283 = sand.u32 %s35, 1
          %s284 = scalar_lea.sflag [#allocation5], %s283
          %s285 = sand.u32 %s35, 1
          %s286 = smul.addr %s285, 8
          %s287 = scalar_lea.vmem [#allocation4], %s286
          %s289 = ssub.s32 128, 128
          %290 = vsyncadd %s284, %s289
          %s291 = smul.addr %s25, 2
          %s292 = smul.addr %s291, 64
          %s293 = scalar_lea.hbm %s0, %s292
          %s295 = sshll.u32 %s287, 4
          %s296 = int_to_ptr.vmem [resolvable:$true] %s295
          %298 = dma.hbm_to_vmem [thread:$0]  %s293, 128, %s296, %s284
        $region36: #{residual_block.2} parent=31 // pred_fallthru
          _
      $region32: #{residual_block.2} parent=5 // pred_fallthru
        _
      %p299 = scmp.le.s32.totalorder 1, %s25
      %p300 = scmp.lt.s32.totalorder %s25, 3
      %p301 = pnand %p299, %p300
      %p302 = pneg %p301
      // Predicated region
      $region37: #{residual_block.2} parent=5 // pred_check
        _
      $region38: #{residual_block.2} parent=5 // pred_check_branch
        %304 = sbr.rel (%p301) target = $region40
      $region39: #{residual_block.2} parent=5 // pred_region
        %s305 = ssub.s32 %s25, 1
        %s306 = sand.u32 %s38, 1
        %s307 = scalar_lea.sflag [#allocation5], %s306
        %s308 = sand.u32 %s38, 1
        %s309 = smul.addr %s308, 8
        %s310 = scalar_lea.vmem [#allocation4], %s309
        // Predicated region
        $region41: #{residual_block.2} parent=39 // pred_check
          %p311 = pneg %p51
        $region42: #{residual_block.2} parent=39 // pred_check_branch
          %313 = sbr.rel (%p311) target = $region44
        $region43: #{residual_block.2} parent=39 // pred_region
          %314 = dma.done %s307, 128
        $region44: #{residual_block.2} parent=39 // pred_fallthru
          _
        // Predicated region
        $region45: #{residual_block.2} parent=39 // pred_check
          %p315 = pneg %p72
        $region46: #{residual_block.2} parent=39 // pred_check_branch
          %317 = sbr.rel (%p315) target = $region48
        $region47: #{residual_block.2} parent=39 // pred_region
          %318 = dma.done [#allocation8], 16
        $region48: #{residual_block.2} parent=39 // pred_fallthru
          _
        // Predicated region
        $region49: #{residual_block.2} parent=39 // pred_check
          %p319 = pneg %p93
        $region50: #{residual_block.2} parent=39 // pred_check_branch
          %321 = sbr.rel (%p319) target = $region52
        $region51: #{residual_block.2} parent=39 // pred_region
          %322 = dma.done [#allocation8], 16
        $region52: #{residual_block.2} parent=39 // pred_fallthru
          _
        // Predicated region
        $region53: #{residual_block.2} parent=39 // pred_check
          %p323 = pneg %p114
        $region54: #{residual_block.2} parent=39 // pred_check_branch
          %325 = sbr.rel (%p323) target = $region56
        $region55: #{residual_block.2} parent=39 // pred_region
          %326 = dma.done [#allocation11], 320
        $region56: #{residual_block.2} parent=39 // pred_fallthru
          _
        // Predicated region
        $region57: #{residual_block.2} parent=39 // pred_check
          %p327 = pneg %p135
        $region58: #{residual_block.2} parent=39 // pred_check_branch
          %329 = sbr.rel (%p327) target = $region60
        $region59: #{residual_block.2} parent=39 // pred_region
          %330 = dma.done [#allocation11], 4096
        $region60: #{residual_block.2} parent=39 // pred_fallthru
          _
        %s331 = sand.u32 %s38, 1
        %s332 = scalar_lea.sflag [#allocation5], %s331
        %s333 = sand.u32 %s38, 1
        %s334 = smul.addr %s333, 8
        %s335 = scalar_lea.vmem [#allocation4], %s334
        %p336 = pneg %p51
        %p337 = pneg %p48
        %p338 = pneg %p72
        %p339 = pneg %p69
        %p340 = pneg %p93
        %p341 = pneg %p90
        %p342 = pneg %p114
        %p343 = pneg %p111
        %p344 = pneg %p135
        %p345 = pneg %p132
        %p346 = pneg %p161
        %p347 = pneg %p158
        %s348 = sand.u32 %s148, 1
        %s349 = scalar_lea.sflag [#allocation6], %s348
        %s350 = sand.u32 %s148, 1
        %s351 = smul.addr %s350, 4
        %s352 = scalar_lea.vmem [#allocation13], %s351
        %p353 = pneg %p187
        %p354 = pneg %p184
        %s355 = sand.u32 %s30, 1
        %s356 = scalar_lea.sflag [#allocation15], %s355
        %s357 = sand.u32 %s174, 1
        %s358 = scalar_lea.vmem [#allocation14], %s357
        %p359 = pneg %p213
        %p360 = pneg %p210
        %s361 = sand.u32 %s30, 1
        %s362 = scalar_lea.sflag [#allocation15], %s361
        %s363 = sand.u32 %s200, 1
        %s364 = scalar_lea.vmem [#allocation16], %s363
        %vm366 = vcmask 31744
        %367 = vst.msk [vmem:[#allocation2] sm:$0xff] %vm366, 0.0
        %368 = vst.msk [vmem:[#allocation2 + $0x8] sm:$0xff] %vm366, 0.0
        %369 = vst.msk [vmem:[#allocation2 + $0x10] sm:$0xff] %vm366, 0.0
        %370 = vst.msk [vmem:[#allocation2 + $0x18] sm:$0xff] %vm366, 0.0
        %s371 = scalar_lea.vmem [#allocation2], 544
        %372 = vst.msk [vmem:[%s371] sm:$0xff] %vm366, 0.0
        %373 = vst.msk [vmem:[%s371 + $0x8] sm:$0xff] %vm366, 0.0
        %374 = vst.msk [vmem:[%s371 + $0x10] sm:$0xff] %vm366, 0.0
        %375 = vst.msk [vmem:[%s371 + $0x18] sm:$0xff] %vm366, 0.0
        %s376 = scalar_lea.vmem [#allocation2], 32
        %377 = vst.msk [vmem:[%s376] sm:$0xff] %vm366, 0.0
        %378 = vst.msk [vmem:[%s376 + $0x20] sm:$0xff] %vm366, 0.0
        %379 = vst.msk [vmem:[%s376 + $0x40] sm:$0xff] %vm366, 0.0
        %380 = vst.msk [vmem:[%s376 + $0x60] sm:$0xff] %vm366, 0.0
        %381 = vst.msk [vmem:[%s376 + $0x80] sm:$0xff] %vm366, 0.0
        %382 = vst.msk [vmem:[%s376 + $0xa0] sm:$0xff] %vm366, 0.0
        %383 = vst.msk [vmem:[%s376 + $0xc0] sm:$0xff] %vm366, 0.0
        %384 = vst.msk [vmem:[%s376 + $0xe0] sm:$0xff] %vm366, 0.0
        %385 = vst.msk [vmem:[%s376 + $0x100] sm:$0xff] %vm366, 0.0
        %386 = vst.msk [vmem:[%s376 + $0x120] sm:$0xff] %vm366, 0.0
        %387 = vst.msk [vmem:[%s376 + $0x140] sm:$0xff] %vm366, 0.0
        %388 = vst.msk [vmem:[%s376 + $0x160] sm:$0xff] %vm366, 0.0
        %389 = vst.msk [vmem:[%s376 + $0x180] sm:$0xff] %vm366, 0.0
        %390 = vst.msk [vmem:[%s376 + $0x1a0] sm:$0xff] %vm366, 0.0
        %391 = vst.msk [vmem:[%s376 + $0x1c0] sm:$0xff] %vm366, 0.0
        %392 = vst.msk [vmem:[%s376 + $0x1e0] sm:$0xff] %vm366, 0.0
        %393 = vst.msk [vmem:[%s376 + $0x18] sm:$0xff] %vm366, 0.0
        %394 = vst.msk [vmem:[%s376 + $0x38] sm:$0xff] %vm366, 0.0
        %395 = vst.msk [vmem:[%s376 + $0x58] sm:$0xff] %vm366, 0.0
        %396 = vst.msk [vmem:[%s376 + $0x78] sm:$0xff] %vm366, 0.0
        %397 = vst.msk [vmem:[%s376 + $0x98] sm:$0xff] %vm366, 0.0
        %398 = vst.msk [vmem:[%s376 + $0xb8] sm:$0xff] %vm366, 0.0
        %399 = vst.msk [vmem:[%s376 + $0xd8] sm:$0xff] %vm366, 0.0
        %400 = vst.msk [vmem:[%s376 + $0xf8] sm:$0xff] %vm366, 0.0
        %401 = vst.msk [vmem:[%s376 + $0x118] sm:$0xff] %vm366, 0.0
        %402 = vst.msk [vmem:[%s376 + $0x138] sm:$0xff] %vm366, 0.0
        %403 = vst.msk [vmem:[%s376 + $0x158] sm:$0xff] %vm366, 0.0
        %404 = vst.msk [vmem:[%s376 + $0x178] sm:$0xff] %vm366, 0.0
        %405 = vst.msk [vmem:[%s376 + $0x198] sm:$0xff] %vm366, 0.0
        %406 = vst.msk [vmem:[%s376 + $0x1b8] sm:$0xff] %vm366, 0.0
        %407 = vst.msk [vmem:[%s376 + $0x1d8] sm:$0xff] %vm366, 0.0
        %408 = vst.msk [vmem:[%s376 + $0x1f8] sm:$0xff] %vm366, 0.0
        %v409 = vld [vmem:[#allocation7] sm:$0x1]
        %v410 = vld [vmem:[#allocation9] sm:$0x1]
        %v411 = vld [vmem:[%s310] sm:$0xff]
        %v413 = vcombine.high %v411, %v411
        %415 = vxpose.xlu0.b32.start [1/16] %v411, 128
        %416 = vxpose.xlu0.b32.cont [2/16] 0.0, 128
        %417 = vxpose.xlu0.b32.cont [3/16] 0.0, 128
        %418 = vxpose.xlu0.b32.cont [4/16] 0.0, 128
        %419 = vxpose.xlu0.b32.cont [5/16] 0.0, 128
        %420 = vxpose.xlu0.b32.cont [6/16] 0.0, 128
        %421 = vxpose.xlu0.b32.cont [7/16] 0.0, 128
        %422 = vxpose.xlu0.b32.cont [8/16] 0.0, 128
        %423 = vxpose.xlu0.b32.cont [9/16] 0.0, 128
        %424 = vxpose.xlu0.b32.cont [10/16] 0.0, 128
        %425 = vxpose.xlu0.b32.cont [11/16] 0.0, 128
        %426 = vxpose.xlu0.b32.cont [12/16] 0.0, 128
        %427 = vxpose.xlu0.b32.cont [13/16] 0.0, 128
        %428 = vxpose.xlu0.b32.cont [14/16] 0.0, 128
        %429 = vxpose.xlu0.b32.cont [15/16] 0.0, 128
        %430 = vxpose.xlu0.b32.end [16/16] 0.0, 128
        %v431 = vpop.trf.xlu0
        %v432 = vpop.trf.xlu0
        %v433 = vpop.trf.xlu0
        %v434 = vpop.trf.xlu0
        %v435 = vpop.trf.xlu0
        %v436 = vpop.trf.xlu0
        %v437 = vpop.trf.xlu0
        %v438 = vpop.trf.xlu0
        %v439 = vpop.trf.xlu0
        %v440 = vpop.trf.xlu0
        %v441 = vpop.trf.xlu0
        %v442 = vpop.trf.xlu0
        %v443 = vpop.trf.xlu0
        %v444 = vpop.trf.xlu0
        %v445 = vpop.trf.xlu0
        %v446 = vpop.trf.xlu0
        %447 = vxpose.xlu0.b32.start [1/16] %v413, 128
        %448 = vxpose.xlu0.b32.cont [2/16] 0.0, 128
        %449 = vxpose.xlu0.b32.cont [3/16] 0.0, 128
        %450 = vxpose.xlu0.b32.cont [4/16] 0.0, 128
        %451 = vxpose.xlu0.b32.cont [5/16] 0.0, 128
        %452 = vxpose.xlu0.b32.cont [6/16] 0.0, 128
        %453 = vxpose.xlu0.b32.cont [7/16] 0.0, 128
        %454 = vxpose.xlu0.b32.cont [8/16] 0.0, 128
        %455 = vxpose.xlu0.b32.cont [9/16] 0.0, 128
        %456 = vxpose.xlu0.b32.cont [10/16] 0.0, 128
        %457 = vxpose.xlu0.b32.cont [11/16] 0.0, 128
        %458 = vxpose.xlu0.b32.cont [12/16] 0.0, 128
        %459 = vxpose.xlu0.b32.cont [13/16] 0.0, 128
        %460 = vxpose.xlu0.b32.cont [14/16] 0.0, 128
        %461 = vxpose.xlu0.b32.cont [15/16] 0.0, 128
        %462 = vxpose.xlu0.b32.end [16/16] 0.0, 128
        %v463 = vpop.trf.xlu0
        %v464 = vpop.trf.xlu0
        %v465 = vpop.trf.xlu0
        %v466 = vpop.trf.xlu0
        %v467 = vpop.trf.xlu0
        %v468 = vpop.trf.xlu0
        %v469 = vpop.trf.xlu0
        %v470 = vpop.trf.xlu0
        %v471 = vpop.trf.xlu0
        %v472 = vpop.trf.xlu0
        %v473 = vpop.trf.xlu0
        %v474 = vpop.trf.xlu0
        %v475 = vpop.trf.xlu0
        %v476 = vpop.trf.xlu0
        %v477 = vpop.trf.xlu0
        %v478 = vpop.trf.xlu0
        %v480 = vlaneseq
        %v481 = vshrl.u32 %v480, 7
        %v482 = vsub.s32 0, %v481
        %v483 = vrot.slane %v409, %v482
        %v485 = vmul.f32 %v431, %v483
        %v486 = vmul.f32 %v432, %v483
        %v487 = vmul.f32 %v433, %v483
        %v488 = vmul.f32 %v434, %v483
        %v489 = vmul.f32 %v435, %v483
        %v490 = vmul.f32 %v436, %v483
        %v491 = vmul.f32 %v437, %v483
        %v492 = vmul.f32 %v438, %v483
        %v493 = vmul.f32 %v439, %v483
        %v494 = vmul.f32 %v440, %v483
        %v495 = vmul.f32 %v441, %v483
        %v496 = vmul.f32 %v442, %v483
        %v497 = vmul.f32 %v443, %v483
        %v498 = vmul.f32 %v444, %v483
        %v499 = vmul.f32 %v445, %v483
        %v500 = vmul.f32 %v446, %v483
        %v501 = vmul.f32 %v463, %v483
        %v502 = vmul.f32 %v464, %v483
        %v503 = vmul.f32 %v465, %v483
        %v504 = vmul.f32 %v466, %v483
        %v505 = vmul.f32 %v467, %v483
        %v506 = vmul.f32 %v468, %v483
        %v507 = vmul.f32 %v469, %v483
        %v508 = vmul.f32 %v470, %v483
        %v509 = vmul.f32 %v471, %v483
        %v510 = vmul.f32 %v472, %v483
        %v511 = vmul.f32 %v473, %v483
        %v512 = vmul.f32 %v474, %v483
        %v513 = vmul.f32 %v475, %v483
        %v514 = vmul.f32 %v476, %v483
        %v515 = vmul.f32 %v477, %v483
        %v516 = vmul.f32 %v478, %v483
        %v518 = vlaneseq
        %v519 = vshrl.u32 %v518, 7
        %v520 = vsub.s32 0, %v519
        %v521 = vrot.slane %v410, %v520
        %v523 = vadd.f32 %v485, %v521
        %v524 = vadd.f32 %v486, %v521
        %v525 = vadd.f32 %v487, %v521
        %v526 = vadd.f32 %v488, %v521
        %v527 = vadd.f32 %v489, %v521
        %v528 = vadd.f32 %v490, %v521
        %v529 = vadd.f32 %v491, %v521
        %v530 = vadd.f32 %v492, %v521
        %v531 = vadd.f32 %v493, %v521
        %v532 = vadd.f32 %v494, %v521
        %v533 = vadd.f32 %v495, %v521
        %v534 = vadd.f32 %v496, %v521
        %v535 = vadd.f32 %v497, %v521
        %v536 = vadd.f32 %v498, %v521
        %v537 = vadd.f32 %v499, %v521
        %v538 = vadd.f32 %v500, %v521
        %v539 = vadd.f32 %v501, %v521
        %v540 = vadd.f32 %v502, %v521
        %v541 = vadd.f32 %v503, %v521
        %v542 = vadd.f32 %v504, %v521
        %v543 = vadd.f32 %v505, %v521
        %v544 = vadd.f32 %v506, %v521
        %v545 = vadd.f32 %v507, %v521
        %v546 = vadd.f32 %v508, %v521
        %v547 = vadd.f32 %v509, %v521
        %v548 = vadd.f32 %v510, %v521
        %v549 = vadd.f32 %v511, %v521
        %v550 = vadd.f32 %v512, %v521
        %v551 = vadd.f32 %v513, %v521
        %v552 = vadd.f32 %v514, %v521
        %v553 = vadd.f32 %v515, %v521
        %v554 = vadd.f32 %v516, %v521
        %v555 = vxor.u32 %v523, 2147483648
        %v556 = vxor.u32 %v524, 2147483648
        %v557 = vxor.u32 %v525, 2147483648
        %v558 = vxor.u32 %v526, 2147483648
        %v559 = vxor.u32 %v527, 2147483648
        %v560 = vxor.u32 %v528, 2147483648
        %v561 = vxor.u32 %v529, 2147483648
        %v562 = vxor.u32 %v530, 2147483648
        %v563 = vxor.u32 %v531, 2147483648
        %v564 = vxor.u32 %v532, 2147483648
        %v565 = vxor.u32 %v533, 2147483648
        %v566 = vxor.u32 %v534, 2147483648
        %v567 = vxor.u32 %v535, 2147483648
        %v568 = vxor.u32 %v536, 2147483648
        %v569 = vxor.u32 %v537, 2147483648
        %v570 = vxor.u32 %v538, 2147483648
        %v571 = vxor.u32 %v539, 2147483648
        %v572 = vxor.u32 %v540, 2147483648
        %v573 = vxor.u32 %v541, 2147483648
        %v574 = vxor.u32 %v542, 2147483648
        %v575 = vxor.u32 %v543, 2147483648
        %v576 = vxor.u32 %v544, 2147483648
        %v577 = vxor.u32 %v545, 2147483648
        %v578 = vxor.u32 %v546, 2147483648
        %v579 = vxor.u32 %v547, 2147483648
        %v580 = vxor.u32 %v548, 2147483648
        %v581 = vxor.u32 %v549, 2147483648
        %v582 = vxor.u32 %v550, 2147483648
        %v583 = vxor.u32 %v551, 2147483648
        %v584 = vxor.u32 %v552, 2147483648
        %v585 = vxor.u32 %v553, 2147483648
        %v586 = vxor.u32 %v554, 2147483648
        %v587 = vmul.f32 %v555, 1.442695
        %v588 = vpow.pop %v587
        %v589 = vmul.f32 %v556, 1.442695
        %v590 = vpow.pop %v589
        %v591 = vmul.f32 %v557, 1.442695
        %v592 = vpow.pop %v591
        %v593 = vmul.f32 %v558, 1.442695
        %v594 = vpow.pop %v593
        %v595 = vmul.f32 %v559, 1.442695
        %v596 = vpow.pop %v595
        %v597 = vmul.f32 %v560, 1.442695
        %v598 = vpow.pop %v597
        %v599 = vmul.f32 %v561, 1.442695
        %v600 = vpow.pop %v599
        %v601 = vmul.f32 %v562, 1.442695
        %v602 = vpow.pop %v601
        %v603 = vmul.f32 %v563, 1.442695
        %v604 = vpow.pop %v603
        %v605 = vmul.f32 %v564, 1.442695
        %v606 = vpow.pop %v605
        %v607 = vmul.f32 %v565, 1.442695
        %v608 = vpow.pop %v607
        %v609 = vmul.f32 %v566, 1.442695
        %v610 = vpow.pop %v609
        %v611 = vmul.f32 %v567, 1.442695
        %v612 = vpow.pop %v611
        %v613 = vmul.f32 %v568, 1.442695
        %v614 = vpow.pop %v613
        %v615 = vmul.f32 %v569, 1.442695
        %v616 = vpow.pop %v615
        %v617 = vmul.f32 %v570, 1.442695
        %v618 = vpow.pop %v617
        %v619 = vmul.f32 %v571, 1.442695
        %v620 = vpow.pop %v619
        %v621 = vmul.f32 %v572, 1.442695
        %v622 = vpow.pop %v621
        %v623 = vmul.f32 %v573, 1.442695
        %v624 = vpow.pop %v623
        %v625 = vmul.f32 %v574, 1.442695
        %v626 = vpow.pop %v625
        %v627 = vmul.f32 %v575, 1.442695
        %v628 = vpow.pop %v627
        %v629 = vmul.f32 %v576, 1.442695
        %v630 = vpow.pop %v629
        %v631 = vmul.f32 %v577, 1.442695
        %v632 = vpow.pop %v631
        %v633 = vmul.f32 %v578, 1.442695
        %v634 = vpow.pop %v633
        %v635 = vmul.f32 %v579, 1.442695
        %v636 = vpow.pop %v635
        %v637 = vmul.f32 %v580, 1.442695
        %v638 = vpow.pop %v637
        %v639 = vmul.f32 %v581, 1.442695
        %v640 = vpow.pop %v639
        %v641 = vmul.f32 %v582, 1.442695
        %v642 = vpow.pop %v641
        %v643 = vmul.f32 %v583, 1.442695
        %v644 = vpow.pop %v643
        %v645 = vmul.f32 %v584, 1.442695
        %v646 = vpow.pop %v645
        %v647 = vmul.f32 %v585, 1.442695
        %v648 = vpow.pop %v647
        %v649 = vmul.f32 %v586, 1.442695
        %v650 = vpow.pop %v649
        %v651 = vadd.f32 %v588, 1.0
        %v652 = vadd.f32 %v590, 1.0
        %v653 = vadd.f32 %v592, 1.0
        %v654 = vadd.f32 %v594, 1.0
        %v655 = vadd.f32 %v596, 1.0
        %v656 = vadd.f32 %v598, 1.0
        %v657 = vadd.f32 %v600, 1.0
        %v658 = vadd.f32 %v602, 1.0
        %v659 = vadd.f32 %v604, 1.0
        %v660 = vadd.f32 %v606, 1.0
        %v661 = vadd.f32 %v608, 1.0
        %v662 = vadd.f32 %v610, 1.0
        %v663 = vadd.f32 %v612, 1.0
        %v664 = vadd.f32 %v614, 1.0
        %v665 = vadd.f32 %v616, 1.0
        %v666 = vadd.f32 %v618, 1.0
        %v667 = vadd.f32 %v620, 1.0
        %v668 = vadd.f32 %v622, 1.0
        %v669 = vadd.f32 %v624, 1.0
        %v670 = vadd.f32 %v626, 1.0
        %v671 = vadd.f32 %v628, 1.0
        %v672 = vadd.f32 %v630, 1.0
        %v673 = vadd.f32 %v632, 1.0
        %v674 = vadd.f32 %v634, 1.0
        %v675 = vadd.f32 %v636, 1.0
        %v676 = vadd.f32 %v638, 1.0
        %v677 = vadd.f32 %v640, 1.0
        %v678 = vadd.f32 %v642, 1.0
        %v679 = vadd.f32 %v644, 1.0
        %v680 = vadd.f32 %v646, 1.0
        %v681 = vadd.f32 %v648, 1.0
        %v682 = vadd.f32 %v650, 1.0
        %v683 = vrcp.pop %v651
        %v684 = vmul.f32 1.0, %v683
        %v685 = vrcp.pop %v652
        %v686 = vmul.f32 1.0, %v685
        %v687 = vrcp.pop %v653
        %v688 = vmul.f32 1.0, %v687
        %v689 = vrcp.pop %v654
        %v690 = vmul.f32 1.0, %v689
        %v691 = vrcp.pop %v655
        %v692 = vmul.f32 1.0, %v691
        %v693 = vrcp.pop %v656
        %v694 = vmul.f32 1.0, %v693
        %v695 = vrcp.pop %v657
        %v696 = vmul.f32 1.0, %v695
        %v697 = vrcp.pop %v658
        %v698 = vmul.f32 1.0, %v697
        %v699 = vrcp.pop %v659
        %v700 = vmul.f32 1.0, %v699
        %v701 = vrcp.pop %v660
        %v702 = vmul.f32 1.0, %v701
        %v703 = vrcp.pop %v661
        %v704 = vmul.f32 1.0, %v703
        %v705 = vrcp.pop %v662
        %v706 = vmul.f32 1.0, %v705
        %v707 = vrcp.pop %v663
        %v708 = vmul.f32 1.0, %v707
        %v709 = vrcp.pop %v664
        %v710 = vmul.f32 1.0, %v709
        %v711 = vrcp.pop %v665
        %v712 = vmul.f32 1.0, %v711
        %v713 = vrcp.pop %v666
        %v714 = vmul.f32 1.0, %v713
        %v715 = vrcp.pop %v667
        %v716 = vmul.f32 1.0, %v715
        %v717 = vrcp.pop %v668
        %v718 = vmul.f32 1.0, %v717
        %v719 = vrcp.pop %v669
        %v720 = vmul.f32 1.0, %v719
        %v721 = vrcp.pop %v670
        %v722 = vmul.f32 1.0, %v721
        %v723 = vrcp.pop %v671
        %v724 = vmul.f32 1.0, %v723
        %v725 = vrcp.pop %v672
        %v726 = vmul.f32 1.0, %v725
        %v727 = vrcp.pop %v673
        %v728 = vmul.f32 1.0, %v727
        %v729 = vrcp.pop %v674
        %v730 = vmul.f32 1.0, %v729
        %v731 = vrcp.pop %v675
        %v732 = vmul.f32 1.0, %v731
        %v733 = vrcp.pop %v676
        %v734 = vmul.f32 1.0, %v733
        %v735 = vrcp.pop %v677
        %v736 = vmul.f32 1.0, %v735
        %v737 = vrcp.pop %v678
        %v738 = vmul.f32 1.0, %v737
        %v739 = vrcp.pop %v679
        %v740 = vmul.f32 1.0, %v739
        %v741 = vrcp.pop %v680
        %v742 = vmul.f32 1.0, %v741
        %v743 = vrcp.pop %v681
        %v744 = vmul.f32 1.0, %v743
        %v745 = vrcp.pop %v682
        %v746 = vmul.f32 1.0, %v745
        %v747 = vmul.f32 %v523, %v684
        %v748 = vmul.f32 %v524, %v686
        %v749 = vmul.f32 %v525, %v688
        %v750 = vmul.f32 %v526, %v690
        %v751 = vmul.f32 %v527, %v692
        %v752 = vmul.f32 %v528, %v694
        %v753 = vmul.f32 %v529, %v696
        %v754 = vmul.f32 %v530, %v698
        %v755 = vmul.f32 %v531, %v700
        %v756 = vmul.f32 %v532, %v702
        %v757 = vmul.f32 %v533, %v704
        %v758 = vmul.f32 %v534, %v706
        %v759 = vmul.f32 %v535, %v708
        %v760 = vmul.f32 %v536, %v710
        %v761 = vmul.f32 %v537, %v712
        %v762 = vmul.f32 %v538, %v714
        %v763 = vmul.f32 %v539, %v716
        %v764 = vmul.f32 %v540, %v718
        %v765 = vmul.f32 %v541, %v720
        %v766 = vmul.f32 %v542, %v722
        %v767 = vmul.f32 %v543, %v724
        %v768 = vmul.f32 %v544, %v726
        %v769 = vmul.f32 %v545, %v728
        %v770 = vmul.f32 %v546, %v730
        %v771 = vmul.f32 %v547, %v732
        %v772 = vmul.f32 %v548, %v734
        %v773 = vmul.f32 %v549, %v736
        %v774 = vmul.f32 %v550, %v738
        %v775 = vmul.f32 %v551, %v740
        %v776 = vmul.f32 %v552, %v742
        %v777 = vmul.f32 %v553, %v744
        %v778 = vmul.f32 %v554, %v746
        %779 = vst.msk [vmem:[%s376 + $0x8] sm:$0xff] %vm366, %v747
        %780 = vst.msk [vmem:[%s376 + $0x10] sm:$0xff] %vm366, %v748
        %781 = vst.msk [vmem:[%s376 + $0x28] sm:$0xff] %vm366, %v749
        %782 = vst.msk [vmem:[%s376 + $0x30] sm:$0xff] %vm366, %v750
        %783 = vst.msk [vmem:[%s376 + $0x48] sm:$0xff] %vm366, %v751
        %784 = vst.msk [vmem:[%s376 + $0x50] sm:$0xff] %vm366, %v752
        %785 = vst.msk [vmem:[%s376 + $0x68] sm:$0xff] %vm366, %v753
        %786 = vst.msk [vmem:[%s376 + $0x70] sm:$0xff] %vm366, %v754
        %787 = vst.msk [vmem:[%s376 + $0x88] sm:$0xff] %vm366, %v755
        %788 = vst.msk [vmem:[%s376 + $0x90] sm:$0xff] %vm366, %v756
        %789 = vst.msk [vmem:[%s376 + $0xa8] sm:$0xff] %vm366, %v757
        %790 = vst.msk [vmem:[%s376 + $0xb0] sm:$0xff] %vm366, %v758
        %791 = vst.msk [vmem:[%s376 + $0xc8] sm:$0xff] %vm366, %v759
        %792 = vst.msk [vmem:[%s376 + $0xd0] sm:$0xff] %vm366, %v760
        %793 = vst.msk [vmem:[%s376 + $0xe8] sm:$0xff] %vm366, %v761
        %794 = vst.msk [vmem:[%s376 + $0xf0] sm:$0xff] %vm366, %v762
        %795 = vst.msk [vmem:[%s376 + $0x108] sm:$0xff] %vm366, %v763
        %796 = vst.msk [vmem:[%s376 + $0x110] sm:$0xff] %vm366, %v764
        %797 = vst.msk [vmem:[%s376 + $0x128] sm:$0xff] %vm366, %v765
        %798 = vst.msk [vmem:[%s376 + $0x130] sm:$0xff] %vm366, %v766
        %799 = vst.msk [vmem:[%s376 + $0x148] sm:$0xff] %vm366, %v767
        %800 = vst.msk [vmem:[%s376 + $0x150] sm:$0xff] %vm366, %v768
        %801 = vst.msk [vmem:[%s376 + $0x168] sm:$0xff] %vm366, %v769
        %802 = vst.msk [vmem:[%s376 + $0x170] sm:$0xff] %vm366, %v770
        %803 = vst.msk [vmem:[%s376 + $0x188] sm:$0xff] %vm366, %v771
        %804 = vst.msk [vmem:[%s376 + $0x190] sm:$0xff] %vm366, %v772
        %805 = vst.msk [vmem:[%s376 + $0x1a8] sm:$0xff] %vm366, %v773
        %806 = vst.msk [vmem:[%s376 + $0x1b0] sm:$0xff] %vm366, %v774
        %807 = vst.msk [vmem:[%s376 + $0x1c8] sm:$0xff] %vm366, %v775
        %808 = vst.msk [vmem:[%s376 + $0x1d0] sm:$0xff] %vm366, %v776
        %809 = vst.msk [vmem:[%s376 + $0x1e8] sm:$0xff] %vm366, %v777
        %810 = vst.msk [vmem:[%s376 + $0x1f0] sm:$0xff] %vm366, %v778
        %v811 = vld [vmem:[#allocation2 + $0x7] sm:$0xff]
        %v812 = vld [vmem:[#allocation2 + $0xf] sm:$0xff]
        %v813 = vld [vmem:[#allocation2 + $0x27] sm:$0xff]
        %v814 = vld [vmem:[#allocation2 + $0x2f] sm:$0xff]
        %v815 = vld [vmem:[#allocation2 + $0x47] sm:$0xff]
        %v816 = vld [vmem:[#allocation2 + $0x4f] sm:$0xff]
        %v817 = vld [vmem:[#allocation2 + $0x67] sm:$0xff]
        %v818 = vld [vmem:[#allocation2 + $0x6f] sm:$0xff]
        %v819 = vld [vmem:[#allocation2 + $0x87] sm:$0xff]
        %v820 = vld [vmem:[#allocation2 + $0x8f] sm:$0xff]
        %v821 = vld [vmem:[#allocation2 + $0xa7] sm:$0xff]
        %v822 = vld [vmem:[#allocation2 + $0xaf] sm:$0xff]
        %v823 = vld [vmem:[#allocation2 + $0xc7] sm:$0xff]
        %v824 = vld [vmem:[#allocation2 + $0xcf] sm:$0xff]
        %v825 = vld [vmem:[#allocation2 + $0xe7] sm:$0xff]
        %v826 = vld [vmem:[#allocation2 + $0xef] sm:$0xff]
        %v827 = vld [vmem:[#allocation2 + $0x107] sm:$0xff]
        %v828 = vld [vmem:[#allocation2 + $0x10f] sm:$0xff]
        %v829 = vld [vmem:[#allocation2 + $0x127] sm:$0xff]
        %v830 = vld [vmem:[#allocation2 + $0x12f] sm:$0xff]
        %v831 = vld [vmem:[#allocation2 + $0x147] sm:$0xff]
        %v832 = vld [vmem:[#allocation2 + $0x14f] sm:$0xff]
        %v833 = vld [vmem:[#allocation2 + $0x167] sm:$0xff]
        %v834 = vld [vmem:[#allocation2 + $0x16f] sm:$0xff]
        %v835 = vld [vmem:[#allocation2 + $0x187] sm:$0xff]
        %v836 = vld [vmem:[#allocation2 + $0x18f] sm:$0xff]
        %v837 = vld [vmem:[#allocation2 + $0x1a7] sm:$0xff]
        %v838 = vld [vmem:[#allocation2 + $0x1af] sm:$0xff]
        %v839 = vld [vmem:[#allocation2 + $0x1c7] sm:$0xff]
        %v840 = vld [vmem:[#allocation2 + $0x1cf] sm:$0xff]
        %v841 = vld [vmem:[#allocation2 + $0x1e7] sm:$0xff]
        %v842 = vld [vmem:[#allocation2 + $0x1ef] sm:$0xff]
        %v843 = vpack.c.bf16 %v812, %v811
        %v844 = vpack.c.bf16 %v814, %v813
        %v845 = vpack.c.bf16 %v816, %v815
        %v846 = vpack.c.bf16 %v818, %v817
        %v847 = vpack.c.bf16 %v820, %v819
        %v848 = vpack.c.bf16 %v822, %v821
        %v849 = vpack.c.bf16 %v824, %v823
        %v850 = vpack.c.bf16 %v826, %v825
        %v851 = vpack.c.bf16 %v828, %v827
        %v852 = vpack.c.bf16 %v830, %v829
        %v853 = vpack.c.bf16 %v832, %v831
        %v854 = vpack.c.bf16 %v834, %v833
        %v855 = vpack.c.bf16 %v836, %v835
        %v856 = vpack.c.bf16 %v838, %v837
        %v857 = vpack.c.bf16 %v840, %v839
        %v858 = vpack.c.bf16 %v842, %v841
        %859 = vst.msk [vmem:[#allocation3] sm:$0xff] %vm366, %v843
        %860 = vst.msk [vmem:[#allocation3 + $0x8] sm:$0xff] %vm366, %v844
        %861 = vst.msk [vmem:[#allocation3 + $0x10] sm:$0xff] %vm366, %v845
        %862 = vst.msk [vmem:[#allocation3 + $0x18] sm:$0xff] %vm366, %v846
        %863 = vst.msk [vmem:[#allocation3 + $0x20] sm:$0xff] %vm366, %v847
        %864 = vst.msk [vmem:[#allocation3 + $0x28] sm:$0xff] %vm366, %v848
        %865 = vst.msk [vmem:[#allocation3 + $0x30] sm:$0xff] %vm366, %v849
        %866 = vst.msk [vmem:[#allocation3 + $0x38] sm:$0xff] %vm366, %v850
        %867 = vst.msk [vmem:[#allocation3 + $0x40] sm:$0xff] %vm366, %v851
        %868 = vst.msk [vmem:[#allocation3 + $0x48] sm:$0xff] %vm366, %v852
        %869 = vst.msk [vmem:[#allocation3 + $0x50] sm:$0xff] %vm366, %v853
        %870 = vst.msk [vmem:[#allocation3 + $0x58] sm:$0xff] %vm366, %v854
        %871 = vst.msk [vmem:[#allocation3 + $0x60] sm:$0xff] %vm366, %v855
        %872 = vst.msk [vmem:[#allocation3 + $0x68] sm:$0xff] %vm366, %v856
        %873 = vst.msk [vmem:[#allocation3 + $0x70] sm:$0xff] %vm366, %v857
        %874 = vst.msk [vmem:[#allocation3 + $0x78] sm:$0xff] %vm366, %v858
        %v875 = vld [vmem:[#allocation2 + $0x8] sm:$0xff]
        %v876 = vld [vmem:[#allocation2 + $0x10] sm:$0xff]
        %v877 = vld [vmem:[#allocation2 + $0x28] sm:$0xff]
        %v878 = vld [vmem:[#allocation2 + $0x30] sm:$0xff]
        %v879 = vld [vmem:[#allocation2 + $0x48] sm:$0xff]
        %v880 = vld [vmem:[#allocation2 + $0x50] sm:$0xff]
        %v881 = vld [vmem:[#allocation2 + $0x68] sm:$0xff]
        %v882 = vld [vmem:[#allocation2 + $0x70] sm:$0xff]
        %v883 = vld [vmem:[#allocation2 + $0x88] sm:$0xff]
        %v884 = vld [vmem:[#allocation2 + $0x90] sm:$0xff]
        %v885 = vld [vmem:[#allocation2 + $0xa8] sm:$0xff]
        %v886 = vld [vmem:[#allocation2 + $0xb0] sm:$0xff]
        %v887 = vld [vmem:[#allocation2 + $0xc8] sm:$0xff]
        %v888 = vld [vmem:[#allocation2 + $0xd0] sm:$0xff]
        %v889 = vld [vmem:[#allocation2 + $0xe8] sm:$0xff]
        %v890 = vld [vmem:[#allocation2 + $0xf0] sm:$0xff]
        %v891 = vld [vmem:[#allocation2 + $0x108] sm:$0xff]
        %v892 = vld [vmem:[#allocation2 + $0x110] sm:$0xff]
        %v893 = vld [vmem:[#allocation2 + $0x128] sm:$0xff]
        %v894 = vld [vmem:[#allocation2 + $0x130] sm:$0xff]
        %v895 = vld [vmem:[#allocation2 + $0x148] sm:$0xff]
        %v896 = vld [vmem:[#allocation2 + $0x150] sm:$0xff]
        %v897 = vld [vmem:[#allocation2 + $0x168] sm:$0xff]
        %v898 = vld [vmem:[#allocation2 + $0x170] sm:$0xff]
        %v899 = vld [vmem:[#allocation2 + $0x188] sm:$0xff]
        %v900 = vld [vmem:[#allocation2 + $0x190] sm:$0xff]
        %v901 = vld [vmem:[#allocation2 + $0x1a8] sm:$0xff]
        %v902 = vld [vmem:[#allocation2 + $0x1b0] sm:$0xff]
        %v903 = vld [vmem:[#allocation2 + $0x1c8] sm:$0xff]
        %v904 = vld [vmem:[#allocation2 + $0x1d0] sm:$0xff]
        %v905 = vld [vmem:[#allocation2 + $0x1e8] sm:$0xff]
        %v906 = vld [vmem:[#allocation2 + $0x1f0] sm:$0xff]
        %v907 = vpack.c.bf16 %v876, %v875
        %v908 = vpack.c.bf16 %v878, %v877
        %v909 = vpack.c.bf16 %v880, %v879
        %v910 = vpack.c.bf16 %v882, %v881
        %v911 = vpack.c.bf16 %v884, %v883
        %v912 = vpack.c.bf16 %v886, %v885
        %v913 = vpack.c.bf16 %v888, %v887
        %v914 = vpack.c.bf16 %v890, %v889
        %v915 = vpack.c.bf16 %v892, %v891
        %v916 = vpack.c.bf16 %v894, %v893
        %v917 = vpack.c.bf16 %v896, %v895
        %v918 = vpack.c.bf16 %v898, %v897
        %v919 = vpack.c.bf16 %v900, %v899
        %v920 = vpack.c.bf16 %v902, %v901
        %v921 = vpack.c.bf16 %v904, %v903
        %v922 = vpack.c.bf16 %v906, %v905
        %939 = vrot.lane.b32.xlu0 %v907, 4
        %v940 = vpop.permute.xlu0 %939
        %941 = vrot.lane.b32.xlu0 %v908, 4
        %v942 = vpop.permute.xlu0 %941
        %943 = vrot.lane.b32.xlu0 %v909, 4
        %v944 = vpop.permute.xlu0 %943
        %945 = vrot.lane.b32.xlu0 %v910, 4
        %v946 = vpop.permute.xlu0 %945
        %947 = vrot.lane.b32.xlu0 %v911, 4
        %v948 = vpop.permute.xlu0 %947
        %949 = vrot.lane.b32.xlu0 %v912, 4
        %v950 = vpop.permute.xlu0 %949
        %951 = vrot.lane.b32.xlu0 %v913, 4
        %v952 = vpop.permute.xlu0 %951
        %953 = vrot.lane.b32.xlu0 %v914, 4
        %v954 = vpop.permute.xlu0 %953
        %955 = vrot.lane.b32.xlu0 %v915, 4
        %v956 = vpop.permute.xlu0 %955
        %957 = vrot.lane.b32.xlu0 %v916, 4
        %v958 = vpop.permute.xlu0 %957
        %959 = vrot.lane.b32.xlu0 %v917, 4
        %v960 = vpop.permute.xlu0 %959
        %961 = vrot.lane.b32.xlu0 %v918, 4
        %v962 = vpop.permute.xlu0 %961
        %963 = vrot.lane.b32.xlu0 %v919, 4
        %v964 = vpop.permute.xlu0 %963
        %965 = vrot.lane.b32.xlu0 %v920, 4
        %v966 = vpop.permute.xlu0 %965
        %967 = vrot.lane.b32.xlu0 %v921, 4
        %v968 = vpop.permute.xlu0 %967
        %969 = vrot.lane.b32.xlu0 %v922, 4
        %v970 = vpop.permute.xlu0 %969
        %vm987 = vcmask 64544
        %988 = vst.msk [vmem:[#allocation3] sm:$0xff] %vm987, %v940
        %989 = vst.msk [vmem:[#allocation3 + $0x8] sm:$0xff] %vm987, %v942
        %990 = vst.msk [vmem:[#allocation3 + $0x10] sm:$0xff] %vm987, %v944
        %991 = vst.msk [vmem:[#allocation3 + $0x18] sm:$0xff] %vm987, %v946
        %992 = vst.msk [vmem:[#allocation3 + $0x20] sm:$0xff] %vm987, %v948
        %993 = vst.msk [vmem:[#allocation3 + $0x28] sm:$0xff] %vm987, %v950
        %994 = vst.msk [vmem:[#allocation3 + $0x30] sm:$0xff] %vm987, %v952
        %995 = vst.msk [vmem:[#allocation3 + $0x38] sm:$0xff] %vm987, %v954
        %996 = vst.msk [vmem:[#allocation3 + $0x40] sm:$0xff] %vm987, %v956
        %997 = vst.msk [vmem:[#allocation3 + $0x48] sm:$0xff] %vm987, %v958
        %998 = vst.msk [vmem:[#allocation3 + $0x50] sm:$0xff] %vm987, %v960
        %999 = vst.msk [vmem:[#allocation3 + $0x58] sm:$0xff] %vm987, %v962
        %1000 = vst.msk [vmem:[#allocation3 + $0x60] sm:$0xff] %vm987, %v964
        %1001 = vst.msk [vmem:[#allocation3 + $0x68] sm:$0xff] %vm987, %v966
        %1002 = vst.msk [vmem:[#allocation3 + $0x70] sm:$0xff] %vm987, %v968
        %1003 = vst.msk [vmem:[#allocation3 + $0x78] sm:$0xff] %vm987, %v970
        %v1004 = vld [vmem:[#allocation2 + $0x9] sm:$0xff]
        %v1005 = vld [vmem:[#allocation2 + $0x11] sm:$0xff]
        %v1006 = vld [vmem:[#allocation2 + $0x29] sm:$0xff]
        %v1007 = vld [vmem:[#allocation2 + $0x31] sm:$0xff]
        %v1008 = vld [vmem:[#allocation2 + $0x49] sm:$0xff]
        %v1009 = vld [vmem:[#allocation2 + $0x51] sm:$0xff]
        %v1010 = vld [vmem:[#allocation2 + $0x69] sm:$0xff]
        %v1011 = vld [vmem:[#allocation2 + $0x71] sm:$0xff]
        %v1012 = vld [vmem:[#allocation2 + $0x89] sm:$0xff]
        %v1013 = vld [vmem:[#allocation2 + $0x91] sm:$0xff]
        %v1014 = vld [vmem:[#allocation2 + $0xa9] sm:$0xff]
        %v1015 = vld [vmem:[#allocation2 + $0xb1] sm:$0xff]
        %v1016 = vld [vmem:[#allocation2 + $0xc9] sm:$0xff]
        %v1017 = vld [vmem:[#allocation2 + $0xd1] sm:$0xff]
        %v1018 = vld [vmem:[#allocation2 + $0xe9] sm:$0xff]
        %v1019 = vld [vmem:[#allocation2 + $0xf1] sm:$0xff]
        %v1020 = vld [vmem:[#allocation2 + $0x109] sm:$0xff]
        %v1021 = vld [vmem:[#allocation2 + $0x111] sm:$0xff]
        %v1022 = vld [vmem:[#allocation2 + $0x129] sm:$0xff]
        %v1023 = vld [vmem:[#allocation2 + $0x131] sm:$0xff]
        %v1024 = vld [vmem:[#allocation2 + $0x149] sm:$0xff]
        %v1025 = vld [vmem:[#allocation2 + $0x151] sm:$0xff]
        %v1026 = vld [vmem:[#allocation2 + $0x169] sm:$0xff]
        %v1027 = vld [vmem:[#allocation2 + $0x171] sm:$0xff]
        %v1028 = vld [vmem:[#allocation2 + $0x189] sm:$0xff]
        %v1029 = vld [vmem:[#allocation2 + $0x191] sm:$0xff]
        %v1030 = vld [vmem:[#allocation2 + $0x1a9] sm:$0xff]
        %v1031 = vld [vmem:[#allocation2 + $0x1b1] sm:$0xff]
        %v1032 = vld [vmem:[#allocation2 + $0x1c9] sm:$0xff]
        %v1033 = vld [vmem:[#allocation2 + $0x1d1] sm:$0xff]
        %v1034 = vld [vmem:[#allocation2 + $0x1e9] sm:$0xff]
        %v1035 = vld [vmem:[#allocation2 + $0x1f1] sm:$0xff]
        %v1036 = vpack.c.bf16 %v1005, %v1004
        %v1037 = vpack.c.bf16 %v1007, %v1006
        %v1038 = vpack.c.bf16 %v1009, %v1008
        %v1039 = vpack.c.bf16 %v1011, %v1010
        %v1040 = vpack.c.bf16 %v1013, %v1012
        %v1041 = vpack.c.bf16 %v1015, %v1014
        %v1042 = vpack.c.bf16 %v1017, %v1016
        %v1043 = vpack.c.bf16 %v1019, %v1018
        %v1044 = vpack.c.bf16 %v1021, %v1020
        %v1045 = vpack.c.bf16 %v1023, %v1022
        %v1046 = vpack.c.bf16 %v1025, %v1024
        %v1047 = vpack.c.bf16 %v1027, %v1026
        %v1048 = vpack.c.bf16 %v1029, %v1028
        %v1049 = vpack.c.bf16 %v1031, %v1030
        %v1050 = vpack.c.bf16 %v1033, %v1032
        %v1051 = vpack.c.bf16 %v1035, %v1034
        %1068 = vrot.lane.b32.xlu0 %v1036, 8
        %v1069 = vpop.permute.xlu0 %1068
        %1070 = vrot.lane.b32.xlu0 %v1037, 8
        %v1071 = vpop.permute.xlu0 %1070
        %1072 = vrot.lane.b32.xlu0 %v1038, 8
        %v1073 = vpop.permute.xlu0 %1072
        %1074 = vrot.lane.b32.xlu0 %v1039, 8
        %v1075 = vpop.permute.xlu0 %1074
        %1076 = vrot.lane.b32.xlu0 %v1040, 8
        %v1077 = vpop.permute.xlu0 %1076
        %1078 = vrot.lane.b32.xlu0 %v1041, 8
        %v1079 = vpop.permute.xlu0 %1078
        %1080 = vrot.lane.b32.xlu0 %v1042, 8
        %v1081 = vpop.permute.xlu0 %1080
        %1082 = vrot.lane.b32.xlu0 %v1043, 8
        %v1083 = vpop.permute.xlu0 %1082
        %1084 = vrot.lane.b32.xlu0 %v1044, 8
        %v1085 = vpop.permute.xlu0 %1084
        %1086 = vrot.lane.b32.xlu0 %v1045, 8
        %v1087 = vpop.permute.xlu0 %1086
        %1088 = vrot.lane.b32.xlu0 %v1046, 8
        %v1089 = vpop.permute.xlu0 %1088
        %1090 = vrot.lane.b32.xlu0 %v1047, 8
        %v1091 = vpop.permute.xlu0 %1090
        %1092 = vrot.lane.b32.xlu0 %v1048, 8
        %v1093 = vpop.permute.xlu0 %1092
        %1094 = vrot.lane.b32.xlu0 %v1049, 8
        %v1095 = vpop.permute.xlu0 %1094
        %1096 = vrot.lane.b32.xlu0 %v1050, 8
        %v1097 = vpop.permute.xlu0 %1096
        %1098 = vrot.lane.b32.xlu0 %v1051, 8
        %v1099 = vpop.permute.xlu0 %1098
        %vm1116 = vcmask 97344
        %1117 = vst.msk [vmem:[#allocation3] sm:$0xff] %vm1116, %v1069
        %1118 = vst.msk [vmem:[#allocation3 + $0x8] sm:$0xff] %vm1116, %v1071
        %1119 = vst.msk [vmem:[#allocation3 + $0x10] sm:$0xff] %vm1116, %v1073
        %1120 = vst.msk [vmem:[#allocation3 + $0x18] sm:$0xff] %vm1116, %v1075
        %1121 = vst.msk [vmem:[#allocation3 + $0x20] sm:$0xff] %vm1116, %v1077
        %1122 = vst.msk [vmem:[#allocation3 + $0x28] sm:$0xff] %vm1116, %v1079
        %1123 = vst.msk [vmem:[#allocation3 + $0x30] sm:$0xff] %vm1116, %v1081
        %1124 = vst.msk [vmem:[#allocation3 + $0x38] sm:$0xff] %vm1116, %v1083
        %1125 = vst.msk [vmem:[#allocation3 + $0x40] sm:$0xff] %vm1116, %v1085
        %1126 = vst.msk [vmem:[#allocation3 + $0x48] sm:$0xff] %vm1116, %v1087
        %1127 = vst.msk [vmem:[#allocation3 + $0x50] sm:$0xff] %vm1116, %v1089
        %1128 = vst.msk [vmem:[#allocation3 + $0x58] sm:$0xff] %vm1116, %v1091
        %1129 = vst.msk [vmem:[#allocation3 + $0x60] sm:$0xff] %vm1116, %v1093
        %1130 = vst.msk [vmem:[#allocation3 + $0x68] sm:$0xff] %vm1116, %v1095
        %1131 = vst.msk [vmem:[#allocation3 + $0x70] sm:$0xff] %vm1116, %v1097
        %1132 = vst.msk [vmem:[#allocation3 + $0x78] sm:$0xff] %vm1116, %v1099
        %v1133 = vld [vmem:[%s376 + $0x7] sm:$0xff]
        %v1134 = vld [vmem:[%s376 + $0xf] sm:$0xff]
        %v1135 = vld [vmem:[%s376 + $0x27] sm:$0xff]
        %v1136 = vld [vmem:[%s376 + $0x2f] sm:$0xff]
        %v1137 = vld [vmem:[%s376 + $0x47] sm:$0xff]
        %v1138 = vld [vmem:[%s376 + $0x4f] sm:$0xff]
        %v1139 = vld [vmem:[%s376 + $0x67] sm:$0xff]
        %v1140 = vld [vmem:[%s376 + $0x6f] sm:$0xff]
        %v1141 = vld [vmem:[%s376 + $0x87] sm:$0xff]
        %v1142 = vld [vmem:[%s376 + $0x8f] sm:$0xff]
        %v1143 = vld [vmem:[%s376 + $0xa7] sm:$0xff]
        %v1144 = vld [vmem:[%s376 + $0xaf] sm:$0xff]
        %v1145 = vld [vmem:[%s376 + $0xc7] sm:$0xff]
        %v1146 = vld [vmem:[%s376 + $0xcf] sm:$0xff]
        %v1147 = vld [vmem:[%s376 + $0xe7] sm:$0xff]
        %v1148 = vld [vmem:[%s376 + $0xef] sm:$0xff]
        %v1149 = vld [vmem:[%s376 + $0x107] sm:$0xff]
        %v1150 = vld [vmem:[%s376 + $0x10f] sm:$0xff]
        %v1151 = vld [vmem:[%s376 + $0x127] sm:$0xff]
        %v1152 = vld [vmem:[%s376 + $0x12f] sm:$0xff]
        %v1153 = vld [vmem:[%s376 + $0x147] sm:$0xff]
        %v1154 = vld [vmem:[%s376 + $0x14f] sm:$0xff]
        %v1155 = vld [vmem:[%s376 + $0x167] sm:$0xff]
        %v1156 = vld [vmem:[%s376 + $0x16f] sm:$0xff]
        %v1157 = vld [vmem:[%s376 + $0x187] sm:$0xff]
        %v1158 = vld [vmem:[%s376 + $0x18f] sm:$0xff]
        %v1159 = vld [vmem:[%s376 + $0x1a7] sm:$0xff]
        %v1160 = vld [vmem:[%s376 + $0x1af] sm:$0xff]
        %v1161 = vld [vmem:[%s376 + $0x1c7] sm:$0xff]
        %v1162 = vld [vmem:[%s376 + $0x1cf] sm:$0xff]
        %v1163 = vld [vmem:[%s376 + $0x1e7] sm:$0xff]
        %v1164 = vld [vmem:[%s376 + $0x1ef] sm:$0xff]
        %v1165 = vpack.c.bf16 %v1134, %v1133
        %v1166 = vpack.c.bf16 %v1136, %v1135
        %v1167 = vpack.c.bf16 %v1138, %v1137
        %v1168 = vpack.c.bf16 %v1140, %v1139
        %v1169 = vpack.c.bf16 %v1142, %v1141
        %v1170 = vpack.c.bf16 %v1144, %v1143
        %v1171 = vpack.c.bf16 %v1146, %v1145
        %v1172 = vpack.c.bf16 %v1148, %v1147
        %v1173 = vpack.c.bf16 %v1150, %v1149
        %v1174 = vpack.c.bf16 %v1152, %v1151
        %v1175 = vpack.c.bf16 %v1154, %v1153
        %v1176 = vpack.c.bf16 %v1156, %v1155
        %v1177 = vpack.c.bf16 %v1158, %v1157
        %v1178 = vpack.c.bf16 %v1160, %v1159
        %v1179 = vpack.c.bf16 %v1162, %v1161
        %v1180 = vpack.c.bf16 %v1164, %v1163
        %1197 = vrot.lane.b32.xlu0 %v1165, 12
        %v1198 = vpop.permute.xlu0 %1197
        %1199 = vrot.lane.b32.xlu0 %v1166, 12
        %v1200 = vpop.permute.xlu0 %1199
        %1201 = vrot.lane.b32.xlu0 %v1167, 12
        %v1202 = vpop.permute.xlu0 %1201
        %1203 = vrot.lane.b32.xlu0 %v1168, 12
        %v1204 = vpop.permute.xlu0 %1203
        %1205 = vrot.lane.b32.xlu0 %v1169, 12
        %v1206 = vpop.permute.xlu0 %1205
        %1207 = vrot.lane.b32.xlu0 %v1170, 12
        %v1208 = vpop.permute.xlu0 %1207
        %1209 = vrot.lane.b32.xlu0 %v1171, 12
        %v1210 = vpop.permute.xlu0 %1209
        %1211 = vrot.lane.b32.xlu0 %v1172, 12
        %v1212 = vpop.permute.xlu0 %1211
        %1213 = vrot.lane.b32.xlu0 %v1173, 12
        %v1214 = vpop.permute.xlu0 %1213
        %1215 = vrot.lane.b32.xlu0 %v1174, 12
        %v1216 = vpop.permute.xlu0 %1215
        %1217 = vrot.lane.b32.xlu0 %v1175, 12
        %v1218 = vpop.permute.xlu0 %1217
        %1219 = vrot.lane.b32.xlu0 %v1176, 12
        %v1220 = vpop.permute.xlu0 %1219
        %1221 = vrot.lane.b32.xlu0 %v1177, 12
        %v1222 = vpop.permute.xlu0 %1221
        %1223 = vrot.lane.b32.xlu0 %v1178, 12
        %v1224 = vpop.permute.xlu0 %1223
        %1225 = vrot.lane.b32.xlu0 %v1179, 12
        %v1226 = vpop.permute.xlu0 %1225
        %1227 = vrot.lane.b32.xlu0 %v1180, 12
        %v1228 = vpop.permute.xlu0 %1227
        %vm1245 = vcmask 130144
        %1246 = vst.msk [vmem:[#allocation3] sm:$0xff] %vm1245, %v1198
        %1247 = vst.msk [vmem:[#allocation3 + $0x8] sm:$0xff] %vm1245, %v1200
        %1248 = vst.msk [vmem:[#allocation3 + $0x10] sm:$0xff] %vm1245, %v1202
        %1249 = vst.msk [vmem:[#allocation3 + $0x18] sm:$0xff] %vm1245, %v1204
        %1250 = vst.msk [vmem:[#allocation3 + $0x20] sm:$0xff] %vm1245, %v1206
        %1251 = vst.msk [vmem:[#allocation3 + $0x28] sm:$0xff] %vm1245, %v1208
        %1252 = vst.msk [vmem:[#allocation3 + $0x30] sm:$0xff] %vm1245, %v1210
        %1253 = vst.msk [vmem:[#allocation3 + $0x38] sm:$0xff] %vm1245, %v1212
        %1254 = vst.msk [vmem:[#allocation3 + $0x40] sm:$0xff] %vm1245, %v1214
        %1255 = vst.msk [vmem:[#allocation3 + $0x48] sm:$0xff] %vm1245, %v1216
        %1256 = vst.msk [vmem:[#allocation3 + $0x50] sm:$0xff] %vm1245, %v1218
        %1257 = vst.msk [vmem:[#allocation3 + $0x58] sm:$0xff] %vm1245, %v1220
        %1258 = vst.msk [vmem:[#allocation3 + $0x60] sm:$0xff] %vm1245, %v1222
        %1259 = vst.msk [vmem:[#allocation3 + $0x68] sm:$0xff] %vm1245, %v1224
        %1260 = vst.msk [vmem:[#allocation3 + $0x70] sm:$0xff] %vm1245, %v1226
        %1261 = vst.msk [vmem:[#allocation3 + $0x78] sm:$0xff] %vm1245, %v1228
        %v1262 = vld [vmem:[%s376 + $0x8] sm:$0xff]
        %v1263 = vld [vmem:[%s376 + $0x10] sm:$0xff]
        %v1264 = vld [vmem:[%s376 + $0x28] sm:$0xff]
        %v1265 = vld [vmem:[%s376 + $0x30] sm:$0xff]
        %v1266 = vld [vmem:[%s376 + $0x48] sm:$0xff]
        %v1267 = vld [vmem:[%s376 + $0x50] sm:$0xff]
        %v1268 = vld [vmem:[%s376 + $0x68] sm:$0xff]
        %v1269 = vld [vmem:[%s376 + $0x70] sm:$0xff]
        %v1270 = vld [vmem:[%s376 + $0x88] sm:$0xff]
        %v1271 = vld [vmem:[%s376 + $0x90] sm:$0xff]
        %v1272 = vld [vmem:[%s376 + $0xa8] sm:$0xff]
        %v1273 = vld [vmem:[%s376 + $0xb0] sm:$0xff]
        %v1274 = vld [vmem:[%s376 + $0xc8] sm:$0xff]
        %v1275 = vld [vmem:[%s376 + $0xd0] sm:$0xff]
        %v1276 = vld [vmem:[%s376 + $0xe8] sm:$0xff]
        %v1277 = vld [vmem:[%s376 + $0xf0] sm:$0xff]
        %v1278 = vld [vmem:[%s376 + $0x108] sm:$0xff]
        %v1279 = vld [vmem:[%s376 + $0x110] sm:$0xff]
        %v1280 = vld [vmem:[%s376 + $0x128] sm:$0xff]
        %v1281 = vld [vmem:[%s376 + $0x130] sm:$0xff]
        %v1282 = vld [vmem:[%s376 + $0x148] sm:$0xff]
        %v1283 = vld [vmem:[%s376 + $0x150] sm:$0xff]
        %v1284 = vld [vmem:[%s376 + $0x168] sm:$0xff]
        %v1285 = vld [vmem:[%s376 + $0x170] sm:$0xff]
        %v1286 = vld [vmem:[%s376 + $0x188] sm:$0xff]
        %v1287 = vld [vmem:[%s376 + $0x190] sm:$0xff]
        %v1288 = vld [vmem:[%s376 + $0x1a8] sm:$0xff]
        %v1289 = vld [vmem:[%s376 + $0x1b0] sm:$0xff]
        %v1290 = vld [vmem:[%s376 + $0x1c8] sm:$0xff]
        %v1291 = vld [vmem:[%s376 + $0x1d0] sm:$0xff]
        %v1292 = vld [vmem:[%s376 + $0x1e8] sm:$0xff]
        %v1293 = vld [vmem:[%s376 + $0x1f0] sm:$0xff]
        %v1294 = vpack.c.bf16 %v1263, %v1262
        %v1295 = vpack.c.bf16 %v1265, %v1264
        %v1296 = vpack.c.bf16 %v1267, %v1266
        %v1297 = vpack.c.bf16 %v1269, %v1268
        %v1298 = vpack.c.bf16 %v1271, %v1270
        %v1299 = vpack.c.bf16 %v1273, %v1272
        %v1300 = vpack.c.bf16 %v1275, %v1274
        %v1301 = vpack.c.bf16 %v1277, %v1276
        %v1302 = vpack.c.bf16 %v1279, %v1278
        %v1303 = vpack.c.bf16 %v1281, %v1280
        %v1304 = vpack.c.bf16 %v1283, %v1282
        %v1305 = vpack.c.bf16 %v1285, %v1284
        %v1306 = vpack.c.bf16 %v1287, %v1286
        %v1307 = vpack.c.bf16 %v1289, %v1288
        %v1308 = vpack.c.bf16 %v1291, %v1290
        %v1309 = vpack.c.bf16 %v1293, %v1292
        %1326 = vrot.lane.b32.xlu0 %v1294, 16
        %v1327 = vpop.permute.xlu0 %1326
        %1328 = vrot.lane.b32.xlu0 %v1295, 16
        %v1329 = vpop.permute.xlu0 %1328
        %1330 = vrot.lane.b32.xlu0 %v1296, 16
        %v1331 = vpop.permute.xlu0 %1330
        %1332 = vrot.lane.b32.xlu0 %v1297, 16
        %v1333 = vpop.permute.xlu0 %1332
        %1334 = vrot.lane.b32.xlu0 %v1298, 16
        %v1335 = vpop.permute.xlu0 %1334
        %1336 = vrot.lane.b32.xlu0 %v1299, 16
        %v1337 = vpop.permute.xlu0 %1336
        %1338 = vrot.lane.b32.xlu0 %v1300, 16
        %v1339 = vpop.permute.xlu0 %1338
        %1340 = vrot.lane.b32.xlu0 %v1301, 16
        %v1341 = vpop.permute.xlu0 %1340
        %1342 = vrot.lane.b32.xlu0 %v1302, 16
        %v1343 = vpop.permute.xlu0 %1342
        %1344 = vrot.lane.b32.xlu0 %v1303, 16
        %v1345 = vpop.permute.xlu0 %1344
        %1346 = vrot.lane.b32.xlu0 %v1304, 16
        %v1347 = vpop.permute.xlu0 %1346
        %1348 = vrot.lane.b32.xlu0 %v1305, 16
        %v1349 = vpop.permute.xlu0 %1348
        %1350 = vrot.lane.b32.xlu0 %v1306, 16
        %v1351 = vpop.permute.xlu0 %1350
        %1352 = vrot.lane.b32.xlu0 %v1307, 16
        %v1353 = vpop.permute.xlu0 %1352
        %1354 = vrot.lane.b32.xlu0 %v1308, 16
        %v1355 = vpop.permute.xlu0 %1354
        %1356 = vrot.lane.b32.xlu0 %v1309, 16
        %v1357 = vpop.permute.xlu0 %1356
        %vm1374 = vcmask 162944
        %1375 = vst.msk [vmem:[#allocation3] sm:$0xff] %vm1374, %v1327
        %1376 = vst.msk [vmem:[#allocation3 + $0x8] sm:$0xff] %vm1374, %v1329
        %1377 = vst.msk [vmem:[#allocation3 + $0x10] sm:$0xff] %vm1374, %v1331
        %1378 = vst.msk [vmem:[#allocation3 + $0x18] sm:$0xff] %vm1374, %v1333
        %1379 = vst.msk [vmem:[#allocation3 + $0x20] sm:$0xff] %vm1374, %v1335
        %1380 = vst.msk [vmem:[#allocation3 + $0x28] sm:$0xff] %vm1374, %v1337
        %1381 = vst.msk [vmem:[#allocation3 + $0x30] sm:$0xff] %vm1374, %v1339
        %1382 = vst.msk [vmem:[#allocation3 + $0x38] sm:$0xff] %vm1374, %v1341
        %1383 = vst.msk [vmem:[#allocation3 + $0x40] sm:$0xff] %vm1374, %v1343
        %1384 = vst.msk [vmem:[#allocation3 + $0x48] sm:$0xff] %vm1374, %v1345
        %1385 = vst.msk [vmem:[#allocation3 + $0x50] sm:$0xff] %vm1374, %v1347
        %1386 = vst.msk [vmem:[#allocation3 + $0x58] sm:$0xff] %vm1374, %v1349
        %1387 = vst.msk [vmem:[#allocation3 + $0x60] sm:$0xff] %vm1374, %v1351
        %1388 = vst.msk [vmem:[#allocation3 + $0x68] sm:$0xff] %vm1374, %v1353
        %1389 = vst.msk [vmem:[#allocation3 + $0x70] sm:$0xff] %vm1374, %v1355
        %1390 = vst.msk [vmem:[#allocation3 + $0x78] sm:$0xff] %vm1374, %v1357
        %v1391 = vld [vmem:[%s376 + $0x9] sm:$0xff]
        %v1392 = vld [vmem:[%s376 + $0x11] sm:$0xff]
        %v1393 = vld [vmem:[%s376 + $0x29] sm:$0xff]
        %v1394 = vld [vmem:[%s376 + $0x31] sm:$0xff]
        %v1395 = vld [vmem:[%s376 + $0x49] sm:$0xff]
        %v1396 = vld [vmem:[%s376 + $0x51] sm:$0xff]
        %v1397 = vld [vmem:[%s376 + $0x69] sm:$0xff]
        %v1398 = vld [vmem:[%s376 + $0x71] sm:$0xff]
        %v1399 = vld [vmem:[%s376 + $0x89] sm:$0xff]
        %v1400 = vld [vmem:[%s376 + $0x91] sm:$0xff]
        %v1401 = vld [vmem:[%s376 + $0xa9] sm:$0xff]
        %v1402 = vld [vmem:[%s376 + $0xb1] sm:$0xff]
        %v1403 = vld [vmem:[%s376 + $0xc9] sm:$0xff]
        %v1404 = vld [vmem:[%s376 + $0xd1] sm:$0xff]
        %v1405 = vld [vmem:[%s376 + $0xe9] sm:$0xff]
        %v1406 = vld [vmem:[%s376 + $0xf1] sm:$0xff]
        %v1407 = vld [vmem:[%s376 + $0x109] sm:$0xff]
        %v1408 = vld [vmem:[%s376 + $0x111] sm:$0xff]
        %v1409 = vld [vmem:[%s376 + $0x129] sm:$0xff]
        %v1410 = vld [vmem:[%s376 + $0x131] sm:$0xff]
        %v1411 = vld [vmem:[%s376 + $0x149] sm:$0xff]
        %v1412 = vld [vmem:[%s376 + $0x151] sm:$0xff]
        %v1413 = vld [vmem:[%s376 + $0x169] sm:$0xff]
        %v1414 = vld [vmem:[%s376 + $0x171] sm:$0xff]
        %v1415 = vld [vmem:[%s376 + $0x189] sm:$0xff]
        %v1416 = vld [vmem:[%s376 + $0x191] sm:$0xff]
        %v1417 = vld [vmem:[%s376 + $0x1a9] sm:$0xff]
        %v1418 = vld [vmem:[%s376 + $0x1b1] sm:$0xff]
        %v1419 = vld [vmem:[%s376 + $0x1c9] sm:$0xff]
        %v1420 = vld [vmem:[%s376 + $0x1d1] sm:$0xff]
        %v1421 = vld [vmem:[%s376 + $0x1e9] sm:$0xff]
        %v1422 = vld [vmem:[%s376 + $0x1f1] sm:$0xff]
        %v1423 = vpack.c.bf16 %v1392, %v1391
        %v1424 = vpack.c.bf16 %v1394, %v1393
        %v1425 = vpack.c.bf16 %v1396, %v1395
        %v1426 = vpack.c.bf16 %v1398, %v1397
        %v1427 = vpack.c.bf16 %v1400, %v1399
        %v1428 = vpack.c.bf16 %v1402, %v1401
        %v1429 = vpack.c.bf16 %v1404, %v1403
        %v1430 = vpack.c.bf16 %v1406, %v1405
        %v1431 = vpack.c.bf16 %v1408, %v1407
        %v1432 = vpack.c.bf16 %v1410, %v1409
        %v1433 = vpack.c.bf16 %v1412, %v1411
        %v1434 = vpack.c.bf16 %v1414, %v1413
        %v1435 = vpack.c.bf16 %v1416, %v1415
        %v1436 = vpack.c.bf16 %v1418, %v1417
        %v1437 = vpack.c.bf16 %v1420, %v1419
        %v1438 = vpack.c.bf16 %v1422, %v1421
        %1455 = vrot.lane.b32.xlu0 %v1423, 20
        %v1456 = vpop.permute.xlu0 %1455
        %1457 = vrot.lane.b32.xlu0 %v1424, 20
        %v1458 = vpop.permute.xlu0 %1457
        %1459 = vrot.lane.b32.xlu0 %v1425, 20
        %v1460 = vpop.permute.xlu0 %1459
        %1461 = vrot.lane.b32.xlu0 %v1426, 20
        %v1462 = vpop.permute.xlu0 %1461
        %1463 = vrot.lane.b32.xlu0 %v1427, 20
        %v1464 = vpop.permute.xlu0 %1463
        %1465 = vrot.lane.b32.xlu0 %v1428, 20
        %v1466 = vpop.permute.xlu0 %1465
        %1467 = vrot.lane.b32.xlu0 %v1429, 20
        %v1468 = vpop.permute.xlu0 %1467
        %1469 = vrot.lane.b32.xlu0 %v1430, 20
        %v1470 = vpop.permute.xlu0 %1469
        %1471 = vrot.lane.b32.xlu0 %v1431, 20
        %v1472 = vpop.permute.xlu0 %1471
        %1473 = vrot.lane.b32.xlu0 %v1432, 20
        %v1474 = vpop.permute.xlu0 %1473
        %1475 = vrot.lane.b32.xlu0 %v1433, 20
        %v1476 = vpop.permute.xlu0 %1475
        %1477 = vrot.lane.b32.xlu0 %v1434, 20
        %v1478 = vpop.permute.xlu0 %1477
        %1479 = vrot.lane.b32.xlu0 %v1435, 20
        %v1480 = vpop.permute.xlu0 %1479
        %1481 = vrot.lane.b32.xlu0 %v1436, 20
        %v1482 = vpop.permute.xlu0 %1481
        %1483 = vrot.lane.b32.xlu0 %v1437, 20
        %v1484 = vpop.permute.xlu0 %1483
        %1485 = vrot.lane.b32.xlu0 %v1438, 20
        %v1486 = vpop.permute.xlu0 %1485
        %vm1503 = vcmask 195744
        %1504 = vst.msk [vmem:[#allocation3] sm:$0xff] %vm1503, %v1456
        %1505 = vst.msk [vmem:[#allocation3 + $0x8] sm:$0xff] %vm1503, %v1458
        %1506 = vst.msk [vmem:[#allocation3 + $0x10] sm:$0xff] %vm1503, %v1460
        %1507 = vst.msk [vmem:[#allocation3 + $0x18] sm:$0xff] %vm1503, %v1462
        %1508 = vst.msk [vmem:[#allocation3 + $0x20] sm:$0xff] %vm1503, %v1464
        %1509 = vst.msk [vmem:[#allocation3 + $0x28] sm:$0xff] %vm1503, %v1466
        %1510 = vst.msk [vmem:[#allocation3 + $0x30] sm:$0xff] %vm1503, %v1468
        %1511 = vst.msk [vmem:[#allocation3 + $0x38] sm:$0xff] %vm1503, %v1470
        %1512 = vst.msk [vmem:[#allocation3 + $0x40] sm:$0xff] %vm1503, %v1472
        %1513 = vst.msk [vmem:[#allocation3 + $0x48] sm:$0xff] %vm1503, %v1474
        %1514 = vst.msk [vmem:[#allocation3 + $0x50] sm:$0xff] %vm1503, %v1476
        %1515 = vst.msk [vmem:[#allocation3 + $0x58] sm:$0xff] %vm1503, %v1478
        %1516 = vst.msk [vmem:[#allocation3 + $0x60] sm:$0xff] %vm1503, %v1480
        %1517 = vst.msk [vmem:[#allocation3 + $0x68] sm:$0xff] %vm1503, %v1482
        %1518 = vst.msk [vmem:[#allocation3 + $0x70] sm:$0xff] %vm1503, %v1484
        %1519 = vst.msk [vmem:[#allocation3 + $0x78] sm:$0xff] %vm1503, %v1486
        %s1520 = scalar_lea.vmem [#allocation2], 64
        %v1521 = vld [vmem:[%s1520 + $0x7] sm:$0xff]
        %v1522 = vld [vmem:[%s1520 + $0xf] sm:$0xff]
        %v1523 = vld [vmem:[%s1520 + $0x27] sm:$0xff]
        %v1524 = vld [vmem:[%s1520 + $0x2f] sm:$0xff]
        %v1525 = vld [vmem:[%s1520 + $0x47] sm:$0xff]
        %v1526 = vld [vmem:[%s1520 + $0x4f] sm:$0xff]
        %v1527 = vld [vmem:[%s1520 + $0x67] sm:$0xff]
        %v1528 = vld [vmem:[%s1520 + $0x6f] sm:$0xff]
        %v1529 = vld [vmem:[%s1520 + $0x87] sm:$0xff]
        %v1530 = vld [vmem:[%s1520 + $0x8f] sm:$0xff]
        %v1531 = vld [vmem:[%s1520 + $0xa7] sm:$0xff]
        %v1532 = vld [vmem:[%s1520 + $0xaf] sm:$0xff]
        %v1533 = vld [vmem:[%s1520 + $0xc7] sm:$0xff]
        %v1534 = vld [vmem:[%s1520 + $0xcf] sm:$0xff]
        %v1535 = vld [vmem:[%s1520 + $0xe7] sm:$0xff]
        %v1536 = vld [vmem:[%s1520 + $0xef] sm:$0xff]
        %v1537 = vld [vmem:[%s1520 + $0x107] sm:$0xff]
        %v1538 = vld [vmem:[%s1520 + $0x10f] sm:$0xff]
        %v1539 = vld [vmem:[%s1520 + $0x127] sm:$0xff]
        %v1540 = vld [vmem:[%s1520 + $0x12f] sm:$0xff]
        %v1541 = vld [vmem:[%s1520 + $0x147] sm:$0xff]
        %v1542 = vld [vmem:[%s1520 + $0x14f] sm:$0xff]
        %v1543 = vld [vmem:[%s1520 + $0x167] sm:$0xff]
        %v1544 = vld [vmem:[%s1520 + $0x16f] sm:$0xff]
        %v1545 = vld [vmem:[%s1520 + $0x187] sm:$0xff]
        %v1546 = vld [vmem:[%s1520 + $0x18f] sm:$0xff]
        %v1547 = vld [vmem:[%s1520 + $0x1a7] sm:$0xff]
        %v1548 = vld [vmem:[%s1520 + $0x1af] sm:$0xff]
        %v1549 = vld [vmem:[%s1520 + $0x1c7] sm:$0xff]
        %v1550 = vld [vmem:[%s1520 + $0x1cf] sm:$0xff]
        %v1551 = vld [vmem:[%s1520 + $0x1e7] sm:$0xff]
        %v1552 = vld [vmem:[%s1520 + $0x1ef] sm:$0xff]
        %v1553 = vpack.c.bf16 %v1522, %v1521
        %v1554 = vpack.c.bf16 %v1524, %v1523
        %v1555 = vpack.c.bf16 %v1526, %v1525
        %v1556 = vpack.c.bf16 %v1528, %v1527
        %v1557 = vpack.c.bf16 %v1530, %v1529
        %v1558 = vpack.c.bf16 %v1532, %v1531
        %v1559 = vpack.c.bf16 %v1534, %v1533
        %v1560 = vpack.c.bf16 %v1536, %v1535
        %v1561 = vpack.c.bf16 %v1538, %v1537
        %v1562 = vpack.c.bf16 %v1540, %v1539
        %v1563 = vpack.c.bf16 %v1542, %v1541
        %v1564 = vpack.c.bf16 %v1544, %v1543
        %v1565 = vpack.c.bf16 %v1546, %v1545
        %v1566 = vpack.c.bf16 %v1548, %v1547
        %v1567 = vpack.c.bf16 %v1550, %v1549
        %v1568 = vpack.c.bf16 %v1552, %v1551
        %1585 = vrot.lane.b32.xlu0 %v1553, 24
        %v1586 = vpop.permute.xlu0 %1585
        %1587 = vrot.lane.b32.xlu0 %v1554, 24
        %v1588 = vpop.permute.xlu0 %1587
        %1589 = vrot.lane.b32.xlu0 %v1555, 24
        %v1590 = vpop.permute.xlu0 %1589
        %1591 = vrot.lane.b32.xlu0 %v1556, 24
        %v1592 = vpop.permute.xlu0 %1591
        %1593 = vrot.lane.b32.xlu0 %v1557, 24
        %v1594 = vpop.permute.xlu0 %1593
        %1595 = vrot.lane.b32.xlu0 %v1558, 24
        %v1596 = vpop.permute.xlu0 %1595
        %1597 = vrot.lane.b32.xlu0 %v1559, 24
        %v1598 = vpop.permute.xlu0 %1597
        %1599 = vrot.lane.b32.xlu0 %v1560, 24
        %v1600 = vpop.permute.xlu0 %1599
        %1601 = vrot.lane.b32.xlu0 %v1561, 24
        %v1602 = vpop.permute.xlu0 %1601
        %1603 = vrot.lane.b32.xlu0 %v1562, 24
        %v1604 = vpop.permute.xlu0 %1603
        %1605 = vrot.lane.b32.xlu0 %v1563, 24
        %v1606 = vpop.permute.xlu0 %1605
        %1607 = vrot.lane.b32.xlu0 %v1564, 24
        %v1608 = vpop.permute.xlu0 %1607
        %1609 = vrot.lane.b32.xlu0 %v1565, 24
        %v1610 = vpop.permute.xlu0 %1609
        %1611 = vrot.lane.b32.xlu0 %v1566, 24
        %v1612 = vpop.permute.xlu0 %1611
        %1613 = vrot.lane.b32.xlu0 %v1567, 24
        %v1614 = vpop.permute.xlu0 %1613
        %1615 = vrot.lane.b32.xlu0 %v1568, 24
        %v1616 = vpop.permute.xlu0 %1615
        %vm1633 = vcmask 228544
        %1634 = vst.msk [vmem:[#allocation3] sm:$0xff] %vm1633, %v1586
        %1635 = vst.msk [vmem:[#allocation3 + $0x8] sm:$0xff] %vm1633, %v1588
        %1636 = vst.msk [vmem:[#allocation3 + $0x10] sm:$0xff] %vm1633, %v1590
        %1637 = vst.msk [vmem:[#allocation3 + $0x18] sm:$0xff] %vm1633, %v1592
        %1638 = vst.msk [vmem:[#allocation3 + $0x20] sm:$0xff] %vm1633, %v1594
        %1639 = vst.msk [vmem:[#allocation3 + $0x28] sm:$0xff] %vm1633, %v1596
        %1640 = vst.msk [vmem:[#allocation3 + $0x30] sm:$0xff] %vm1633, %v1598
        %1641 = vst.msk [vmem:[#allocation3 + $0x38] sm:$0xff] %vm1633, %v1600
        %1642 = vst.msk [vmem:[#allocation3 + $0x40] sm:$0xff] %vm1633, %v1602
        %1643 = vst.msk [vmem:[#allocation3 + $0x48] sm:$0xff] %vm1633, %v1604
        %1644 = vst.msk [vmem:[#allocation3 + $0x50] sm:$0xff] %vm1633, %v1606
        %1645 = vst.msk [vmem:[#allocation3 + $0x58] sm:$0xff] %vm1633, %v1608
        %1646 = vst.msk [vmem:[#allocation3 + $0x60] sm:$0xff] %vm1633, %v1610
        %1647 = vst.msk [vmem:[#allocation3 + $0x68] sm:$0xff] %vm1633, %v1612
        %1648 = vst.msk [vmem:[#allocation3 + $0x70] sm:$0xff] %vm1633, %v1614
        %1649 = vst.msk [vmem:[#allocation3 + $0x78] sm:$0xff] %vm1633, %v1616
        %v1650 = vld [vmem:[%s1520 + $0x8] sm:$0xff]
        %v1651 = vld [vmem:[%s1520 + $0x10] sm:$0xff]
        %v1652 = vld [vmem:[%s1520 + $0x28] sm:$0xff]
        %v1653 = vld [vmem:[%s1520 + $0x30] sm:$0xff]
        %v1654 = vld [vmem:[%s1520 + $0x48] sm:$0xff]
        %v1655 = vld [vmem:[%s1520 + $0x50] sm:$0xff]
        %v1656 = vld [vmem:[%s1520 + $0x68] sm:$0xff]
        %v1657 = vld [vmem:[%s1520 + $0x70] sm:$0xff]
        %v1658 = vld [vmem:[%s1520 + $0x88] sm:$0xff]
        %v1659 = vld [vmem:[%s1520 + $0x90] sm:$0xff]
        %v1660 = vld [vmem:[%s1520 + $0xa8] sm:$0xff]
        %v1661 = vld [vmem:[%s1520 + $0xb0] sm:$0xff]
        %v1662 = vld [vmem:[%s1520 + $0xc8] sm:$0xff]
        %v1663 = vld [vmem:[%s1520 + $0xd0] sm:$0xff]
        %v1664 = vld [vmem:[%s1520 + $0xe8] sm:$0xff]
        %v1665 = vld [vmem:[%s1520 + $0xf0] sm:$0xff]
        %v1666 = vld [vmem:[%s1520 + $0x108] sm:$0xff]
        %v1667 = vld [vmem:[%s1520 + $0x110] sm:$0xff]
        %v1668 = vld [vmem:[%s1520 + $0x128] sm:$0xff]
        %v1669 = vld [vmem:[%s1520 + $0x130] sm:$0xff]
        %v1670 = vld [vmem:[%s1520 + $0x148] sm:$0xff]
        %v1671 = vld [vmem:[%s1520 + $0x150] sm:$0xff]
        %v1672 = vld [vmem:[%s1520 + $0x168] sm:$0xff]
        %v1673 = vld [vmem:[%s1520 + $0x170] sm:$0xff]
        %v1674 = vld [vmem:[%s1520 + $0x188] sm:$0xff]
        %v1675 = vld [vmem:[%s1520 + $0x190] sm:$0xff]
        %v1676 = vld [vmem:[%s1520 + $0x1a8] sm:$0xff]
        %v1677 = vld [vmem:[%s1520 + $0x1b0] sm:$0xff]
        %v1678 = vld [vmem:[%s1520 + $0x1c8] sm:$0xff]
        %v1679 = vld [vmem:[%s1520 + $0x1d0] sm:$0xff]
        %v1680 = vld [vmem:[%s1520 + $0x1e8] sm:$0xff]
        %v1681 = vld [vmem:[%s1520 + $0x1f0] sm:$0xff]
        %v1682 = vpack.c.bf16 %v1651, %v1650
        %v1683 = vpack.c.bf16 %v1653, %v1652
        %v1684 = vpack.c.bf16 %v1655, %v1654
        %v1685 = vpack.c.bf16 %v1657, %v1656
        %v1686 = vpack.c.bf16 %v1659, %v1658
        %v1687 = vpack.c.bf16 %v1661, %v1660
        %v1688 = vpack.c.bf16 %v1663, %v1662
        %v1689 = vpack.c.bf16 %v1665, %v1664
        %v1690 = vpack.c.bf16 %v1667, %v1666
        %v1691 = vpack.c.bf16 %v1669, %v1668
        %v1692 = vpack.c.bf16 %v1671, %v1670
        %v1693 = vpack.c.bf16 %v1673, %v1672
        %v1694 = vpack.c.bf16 %v1675, %v1674
        %v1695 = vpack.c.bf16 %v1677, %v1676
        %v1696 = vpack.c.bf16 %v1679, %v1678
        %v1697 = vpack.c.bf16 %v1681, %v1680
        %1714 = vrot.lane.b32.xlu0 %v1682, 28
        %v1715 = vpop.permute.xlu0 %1714
        %1716 = vrot.lane.b32.xlu0 %v1683, 28
        %v1717 = vpop.permute.xlu0 %1716
        %1718 = vrot.lane.b32.xlu0 %v1684, 28
        %v1719 = vpop.permute.xlu0 %1718
        %1720 = vrot.lane.b32.xlu0 %v1685, 28
        %v1721 = vpop.permute.xlu0 %1720
        %1722 = vrot.lane.b32.xlu0 %v1686, 28
        %v1723 = vpop.permute.xlu0 %1722
        %1724 = vrot.lane.b32.xlu0 %v1687, 28
        %v1725 = vpop.permute.xlu0 %1724
        %1726 = vrot.lane.b32.xlu0 %v1688, 28
        %v1727 = vpop.permute.xlu0 %1726
        %1728 = vrot.lane.b32.xlu0 %v1689, 28
        %v1729 = vpop.permute.xlu0 %1728
        %1730 = vrot.lane.b32.xlu0 %v1690, 28
        %v1731 = vpop.permute.xlu0 %1730
        %1732 = vrot.lane.b32.xlu0 %v1691, 28
        %v1733 = vpop.permute.xlu0 %1732
        %1734 = vrot.lane.b32.xlu0 %v1692, 28
        %v1735 = vpop.permute.xlu0 %1734
        %1736 = vrot.lane.b32.xlu0 %v1693, 28
        %v1737 = vpop.permute.xlu0 %1736
        %1738 = vrot.lane.b32.xlu0 %v1694, 28
        %v1739 = vpop.permute.xlu0 %1738
        %1740 = vrot.lane.b32.xlu0 %v1695, 28
        %v1741 = vpop.permute.xlu0 %1740
        %1742 = vrot.lane.b32.xlu0 %v1696, 28
        %v1743 = vpop.permute.xlu0 %1742
        %1744 = vrot.lane.b32.xlu0 %v1697, 28
        %v1745 = vpop.permute.xlu0 %1744
        %vm1762 = vcmask 261344
        %1763 = vst.msk [vmem:[#allocation3] sm:$0xff] %vm1762, %v1715
        %1764 = vst.msk [vmem:[#allocation3 + $0x8] sm:$0xff] %vm1762, %v1717
        %1765 = vst.msk [vmem:[#allocation3 + $0x10] sm:$0xff] %vm1762, %v1719
        %1766 = vst.msk [vmem:[#allocation3 + $0x18] sm:$0xff] %vm1762, %v1721
        %1767 = vst.msk [vmem:[#allocation3 + $0x20] sm:$0xff] %vm1762, %v1723
        %1768 = vst.msk [vmem:[#allocation3 + $0x28] sm:$0xff] %vm1762, %v1725
        %1769 = vst.msk [vmem:[#allocation3 + $0x30] sm:$0xff] %vm1762, %v1727
        %1770 = vst.msk [vmem:[#allocation3 + $0x38] sm:$0xff] %vm1762, %v1729
        %1771 = vst.msk [vmem:[#allocation3 + $0x40] sm:$0xff] %vm1762, %v1731
        %1772 = vst.msk [vmem:[#allocation3 + $0x48] sm:$0xff] %vm1762, %v1733
        %1773 = vst.msk [vmem:[#allocation3 + $0x50] sm:$0xff] %vm1762, %v1735
        %1774 = vst.msk [vmem:[#allocation3 + $0x58] sm:$0xff] %vm1762, %v1737
        %1775 = vst.msk [vmem:[#allocation3 + $0x60] sm:$0xff] %vm1762, %v1739
        %1776 = vst.msk [vmem:[#allocation3 + $0x68] sm:$0xff] %vm1762, %v1741
        %1777 = vst.msk [vmem:[#allocation3 + $0x70] sm:$0xff] %vm1762, %v1743
        %1778 = vst.msk [vmem:[#allocation3 + $0x78] sm:$0xff] %vm1762, %v1745
        %v1779 = vld [vmem:[%s1520 + $0x9] sm:$0xff]
        %v1780 = vld [vmem:[%s1520 + $0x11] sm:$0xff]
        %v1781 = vld [vmem:[%s1520 + $0x29] sm:$0xff]
        %v1782 = vld [vmem:[%s1520 + $0x31] sm:$0xff]
        %v1783 = vld [vmem:[%s1520 + $0x49] sm:$0xff]
        %v1784 = vld [vmem:[%s1520 + $0x51] sm:$0xff]
        %v1785 = vld [vmem:[%s1520 + $0x69] sm:$0xff]
        %v1786 = vld [vmem:[%s1520 + $0x71] sm:$0xff]
        %v1787 = vld [vmem:[%s1520 + $0x89] sm:$0xff]
        %v1788 = vld [vmem:[%s1520 + $0x91] sm:$0xff]
        %v1789 = vld [vmem:[%s1520 + $0xa9] sm:$0xff]
        %v1790 = vld [vmem:[%s1520 + $0xb1] sm:$0xff]
        %v1791 = vld [vmem:[%s1520 + $0xc9] sm:$0xff]
        %v1792 = vld [vmem:[%s1520 + $0xd1] sm:$0xff]
        %v1793 = vld [vmem:[%s1520 + $0xe9] sm:$0xff]
        %v1794 = vld [vmem:[%s1520 + $0xf1] sm:$0xff]
        %v1795 = vld [vmem:[%s1520 + $0x109] sm:$0xff]
        %v1796 = vld [vmem:[%s1520 + $0x111] sm:$0xff]
        %v1797 = vld [vmem:[%s1520 + $0x129] sm:$0xff]
        %v1798 = vld [vmem:[%s1520 + $0x131] sm:$0xff]
        %v1799 = vld [vmem:[%s1520 + $0x149] sm:$0xff]
        %v1800 = vld [vmem:[%s1520 + $0x151] sm:$0xff]
        %v1801 = vld [vmem:[%s1520 + $0x169] sm:$0xff]
        %v1802 = vld [vmem:[%s1520 + $0x171] sm:$0xff]
        %v1803 = vld [vmem:[%s1520 + $0x189] sm:$0xff]
        %v1804 = vld [vmem:[%s1520 + $0x191] sm:$0xff]
        %v1805 = vld [vmem:[%s1520 + $0x1a9] sm:$0xff]
        %v1806 = vld [vmem:[%s1520 + $0x1b1] sm:$0xff]
        %v1807 = vld [vmem:[%s1520 + $0x1c9] sm:$0xff]
        %v1808 = vld [vmem:[%s1520 + $0x1d1] sm:$0xff]
        %v1809 = vld [vmem:[%s1520 + $0x1e9] sm:$0xff]
        %v1810 = vld [vmem:[%s1520 + $0x1f1] sm:$0xff]
        %v1811 = vpack.c.bf16 %v1780, %v1779
        %v1812 = vpack.c.bf16 %v1782, %v1781
        %v1813 = vpack.c.bf16 %v1784, %v1783
        %v1814 = vpack.c.bf16 %v1786, %v1785
        %v1815 = vpack.c.bf16 %v1788, %v1787
        %v1816 = vpack.c.bf16 %v1790, %v1789
        %v1817 = vpack.c.bf16 %v1792, %v1791
        %v1818 = vpack.c.bf16 %v1794, %v1793
        %v1819 = vpack.c.bf16 %v1796, %v1795
        %v1820 = vpack.c.bf16 %v1798, %v1797
        %v1821 = vpack.c.bf16 %v1800, %v1799
        %v1822 = vpack.c.bf16 %v1802, %v1801
        %v1823 = vpack.c.bf16 %v1804, %v1803
        %v1824 = vpack.c.bf16 %v1806, %v1805
        %v1825 = vpack.c.bf16 %v1808, %v1807
        %v1826 = vpack.c.bf16 %v1810, %v1809
        %1843 = vrot.lane.b32.xlu0 %v1811, 32
        %v1844 = vpop.permute.xlu0 %1843
        %1845 = vrot.lane.b32.xlu0 %v1812, 32
        %v1846 = vpop.permute.xlu0 %1845
        %1847 = vrot.lane.b32.xlu0 %v1813, 32
        %v1848 = vpop.permute.xlu0 %1847
        %1849 = vrot.lane.b32.xlu0 %v1814, 32
        %v1850 = vpop.permute.xlu0 %1849
        %1851 = vrot.lane.b32.xlu0 %v1815, 32
        %v1852 = vpop.permute.xlu0 %1851
        %1853 = vrot.lane.b32.xlu0 %v1816, 32
        %v1854 = vpop.permute.xlu0 %1853
        %1855 = vrot.lane.b32.xlu0 %v1817, 32
        %v1856 = vpop.permute.xlu0 %1855
        %1857 = vrot.lane.b32.xlu0 %v1818, 32
        %v1858 = vpop.permute.xlu0 %1857
        %1859 = vrot.lane.b32.xlu0 %v1819, 32
        %v1860 = vpop.permute.xlu0 %1859
        %1861 = vrot.lane.b32.xlu0 %v1820, 32
        %v1862 = vpop.permute.xlu0 %1861
        %1863 = vrot.lane.b32.xlu0 %v1821, 32
        %v1864 = vpop.permute.xlu0 %1863
        %1865 = vrot.lane.b32.xlu0 %v1822, 32
        %v1866 = vpop.permute.xlu0 %1865
        %1867 = vrot.lane.b32.xlu0 %v1823, 32
        %v1868 = vpop.permute.xlu0 %1867
        %1869 = vrot.lane.b32.xlu0 %v1824, 32
        %v1870 = vpop.permute.xlu0 %1869
        %1871 = vrot.lane.b32.xlu0 %v1825, 32
        %v1872 = vpop.permute.xlu0 %1871
        %1873 = vrot.lane.b32.xlu0 %v1826, 32
        %v1874 = vpop.permute.xlu0 %1873
        %vm1891 = vcmask 294144
        %1892 = vst.msk [vmem:[#allocation3] sm:$0xff] %vm1891, %v1844
        %1893 = vst.msk [vmem:[#allocation3 + $0x8] sm:$0xff] %vm1891, %v1846
        %1894 = vst.msk [vmem:[#allocation3 + $0x10] sm:$0xff] %vm1891, %v1848
        %1895 = vst.msk [vmem:[#allocation3 + $0x18] sm:$0xff] %vm1891, %v1850
        %1896 = vst.msk [vmem:[#allocation3 + $0x20] sm:$0xff] %vm1891, %v1852
        %1897 = vst.msk [vmem:[#allocation3 + $0x28] sm:$0xff] %vm1891, %v1854
        %1898 = vst.msk [vmem:[#allocation3 + $0x30] sm:$0xff] %vm1891, %v1856
        %1899 = vst.msk [vmem:[#allocation3 + $0x38] sm:$0xff] %vm1891, %v1858
        %1900 = vst.msk [vmem:[#allocation3 + $0x40] sm:$0xff] %vm1891, %v1860
        %1901 = vst.msk [vmem:[#allocation3 + $0x48] sm:$0xff] %vm1891, %v1862
        %1902 = vst.msk [vmem:[#allocation3 + $0x50] sm:$0xff] %vm1891, %v1864
        %1903 = vst.msk [vmem:[#allocation3 + $0x58] sm:$0xff] %vm1891, %v1866
        %1904 = vst.msk [vmem:[#allocation3 + $0x60] sm:$0xff] %vm1891, %v1868
        %1905 = vst.msk [vmem:[#allocation3 + $0x68] sm:$0xff] %vm1891, %v1870
        %1906 = vst.msk [vmem:[#allocation3 + $0x70] sm:$0xff] %vm1891, %v1872
        %1907 = vst.msk [vmem:[#allocation3 + $0x78] sm:$0xff] %vm1891, %v1874
        %v1908 = vld [vmem:[#allocation3] sm:$0xff]
        %v1909 = vld [vmem:[#allocation3 + $0x8] sm:$0xff]
        %v1910 = vld [vmem:[#allocation3 + $0x10] sm:$0xff]
        %v1911 = vld [vmem:[#allocation3 + $0x18] sm:$0xff]
        %v1912 = vld [vmem:[#allocation3 + $0x20] sm:$0xff]
        %v1913 = vld [vmem:[#allocation3 + $0x28] sm:$0xff]
        %v1914 = vld [vmem:[#allocation3 + $0x30] sm:$0xff]
        %v1915 = vld [vmem:[#allocation3 + $0x38] sm:$0xff]
        %v1916 = vld [vmem:[#allocation3 + $0x40] sm:$0xff]
        %v1917 = vld [vmem:[#allocation3 + $0x48] sm:$0xff]
        %v1918 = vld [vmem:[#allocation3 + $0x50] sm:$0xff]
        %v1919 = vld [vmem:[#allocation3 + $0x58] sm:$0xff]
        %v1920 = vld [vmem:[#allocation3 + $0x60] sm:$0xff]
        %v1921 = vld [vmem:[#allocation3 + $0x68] sm:$0xff]
        %v1922 = vld [vmem:[#allocation3 + $0x70] sm:$0xff]
        %v1923 = vld [vmem:[#allocation3 + $0x78] sm:$0xff]
        %v1924 = vld [vmem:[#allocation10] sm:$0xf]
        %v1925 = vld [vmem:[#allocation10 + $0x4] sm:$0xf]
        %v1926 = vld [vmem:[#allocation10 + $0x8] sm:$0xf]
        %v1927 = vld [vmem:[#allocation10 + $0xc] sm:$0xf]
        %v1928 = vld [vmem:[#allocation10 + $0x10] sm:$0x3]
        %v1934 = vunpack.c.l.b16 %v1924
        %v1935 = vunpack.c.l.b16 %v1925
        %v1936 = vunpack.c.l.b16 %v1926
        %v1937 = vunpack.c.l.b16 %v1927
        %v1938 = vunpack.c.l.b16 %v1928
        %v1939 = vpack.c.b16 %v1935, %v1934
        %v1940 = vpack.c.b16 %v1937, %v1936
        %v1941 = vpack.c.b16 %v1938, %v1938
        %vm1944 = vcmask 293888
        %v1946 = vsel %vm1944, %v1908, 0
        %v1949 = vsel %vm1944, %v1909, 0
        %v1952 = vsel %vm1944, %v1910, 0
        %v1955 = vsel %vm1944, %v1911, 0
        %v1958 = vsel %vm1944, %v1912, 0
        %v1961 = vsel %vm1944, %v1913, 0
        %v1964 = vsel %vm1944, %v1914, 0
        %v1967 = vsel %vm1944, %v1915, 0
        %v1970 = vsel %vm1944, %v1916, 0
        %v1973 = vsel %vm1944, %v1917, 0
        %v1976 = vsel %vm1944, %v1918, 0
        %v1979 = vsel %vm1944, %v1919, 0
        %v1982 = vsel %vm1944, %v1920, 0
        %v1985 = vsel %vm1944, %v1921, 0
        %v1988 = vsel %vm1944, %v1922, 0
        %v1991 = vsel %vm1944, %v1923, 0
        %vm1993 = vcmask 1041408
        %v1995 = vsel %vm1993, %v1941, 0
        %1997 = vmatprep.subr.bf16.mxu0 0
        %1998 = vmatpush1.bf16.msra.mxu0 %v1939
        %1999 = vmatprep.subr.bf16.mxu0 0
        %2000 = vmatpush1.bf16.msra.mxu0 %v1940
        %2001 = vmatprep.subr.bf16.mxu0 0
        %2002 = vmatpush1.bf16.msra.mxu0 %v1995
        %2003 = vmatprep.subr.bf16.mxu0 0
        %2004 = vmatpush1.bf16.msra.mxu0 0
        %2005 = vmatprep.subr.bf16.mxu0 0
        %2006 = vmatpush1.bf16.msra.mxu0 0
        %2007 = vmatprep.subr.bf16.mxu0 0
        %2008 = vmatpush1.bf16.msra.mxu0 0
        %2009 = vmatprep.subr.bf16.mxu0 0
        %2010 = vmatpush1.bf16.msra.mxu0 0
        %2011 = vmatprep.subr.bf16.mxu0 0
        %2012 = vmatpush1.bf16.msra.mxu0 0
        %2013 = vmatprep.subr.bf16.mxu0 0
        %2014 = vmatpush1.bf16.msra.mxu0 0
        %2015 = vmatprep.subr.bf16.mxu0 0
        %2016 = vmatpush1.bf16.msra.mxu0 0
        %2017 = vmatprep.subr.bf16.mxu0 0
        %2018 = vmatpush1.bf16.msra.mxu0 0
        %2019 = vmatprep.subr.bf16.mxu0 0
        %2020 = vmatpush1.bf16.msra.mxu0 0
        %2021 = vmatprep.subr.bf16.mxu0 0
        %2022 = vmatpush1.bf16.msra.mxu0 0
        %2023 = vmatprep.subr.bf16.mxu0 0
        %2024 = vmatpush1.bf16.msra.mxu0 0
        %2025 = vmatprep.subr.bf16.mxu0 0
        %2026 = vmatpush1.bf16.msra.mxu0 0
        %2027 = vmatprep.subr.bf16.mxu0 0
        %2028 = vmatpush1.bf16.msra.mxu0 0
        %2029 = vmatprep.mubr.bf16.mxu0 0
        %2030 = vmatmul.mubr.bf16.gmra.mrb[0].mxu0 %v1946
        %v2031 = vpop.f32.mrb[0].mxu0
        %v2032 = vadd.f32 0.0, %v2031
        %v2033 = vpop.f32.mrb[0].mxu0
        %v2034 = vpop.f32.mrb[0].mxu0
        %v2035 = vadd.f32 0.0, %v2034
        %v2036 = vpop.f32.mrb[0].mxu0
        %2037 = vmatprep.mubr.bf16.mxu0 0
        %2038 = vmatmul.mubr.bf16.gmra.mrb[0].mxu0 %v1949
        %v2039 = vpop.f32.mrb[0].mxu0
        %v2040 = vadd.f32 0.0, %v2039
        %v2041 = vpop.f32.mrb[0].mxu0
        %v2042 = vpop.f32.mrb[0].mxu0
        %v2043 = vadd.f32 0.0, %v2042
        %v2044 = vpop.f32.mrb[0].mxu0
        %2045 = vmatprep.mubr.bf16.mxu0 0
        %2046 = vmatmul.mubr.bf16.gmra.mrb[0].mxu0 %v1952
        %v2047 = vpop.f32.mrb[0].mxu0
        %v2048 = vadd.f32 0.0, %v2047
        %v2049 = vpop.f32.mrb[0].mxu0
        %v2050 = vpop.f32.mrb[0].mxu0
        %v2051 = vadd.f32 0.0, %v2050
        %v2052 = vpop.f32.mrb[0].mxu0
        %2053 = vmatprep.mubr.bf16.mxu0 0
        %2054 = vmatmul.mubr.bf16.gmra.mrb[0].mxu0 %v1955
        %v2055 = vpop.f32.mrb[0].mxu0
        %v2056 = vadd.f32 0.0, %v2055
        %v2057 = vpop.f32.mrb[0].mxu0
        %v2058 = vpop.f32.mrb[0].mxu0
        %v2059 = vadd.f32 0.0, %v2058
        %v2060 = vpop.f32.mrb[0].mxu0
        %2061 = vmatprep.mubr.bf16.mxu0 0
        %2062 = vmatmul.mubr.bf16.gmra.mrb[0].mxu0 %v1958
        %v2063 = vpop.f32.mrb[0].mxu0
        %v2064 = vadd.f32 0.0, %v2063
        %v2065 = vpop.f32.mrb[0].mxu0
        %v2066 = vpop.f32.mrb[0].mxu0
        %v2067 = vadd.f32 0.0, %v2066
        %v2068 = vpop.f32.mrb[0].mxu0
        %2069 = vmatprep.mubr.bf16.mxu0 0
        %2070 = vmatmul.mubr.bf16.gmra.mrb[0].mxu0 %v1961
        %v2071 = vpop.f32.mrb[0].mxu0
        %v2072 = vadd.f32 0.0, %v2071
        %v2073 = vpop.f32.mrb[0].mxu0
        %v2074 = vpop.f32.mrb[0].mxu0
        %v2075 = vadd.f32 0.0, %v2074
        %v2076 = vpop.f32.mrb[0].mxu0
        %2077 = vmatprep.mubr.bf16.mxu0 0
        %2078 = vmatmul.mubr.bf16.gmra.mrb[0].mxu0 %v1964
        %v2079 = vpop.f32.mrb[0].mxu0
        %v2080 = vadd.f32 0.0, %v2079
        %v2081 = vpop.f32.mrb[0].mxu0
        %v2082 = vpop.f32.mrb[0].mxu0
        %v2083 = vadd.f32 0.0, %v2082
        %v2084 = vpop.f32.mrb[0].mxu0
        %2085 = vmatprep.mubr.bf16.mxu0 0
        %2086 = vmatmul.mubr.bf16.gmra.mrb[0].mxu0 %v1967
        %v2087 = vpop.f32.mrb[0].mxu0
        %v2088 = vadd.f32 0.0, %v2087
        %v2089 = vpop.f32.mrb[0].mxu0
        %v2090 = vpop.f32.mrb[0].mxu0
        %v2091 = vadd.f32 0.0, %v2090
        %v2092 = vpop.f32.mrb[0].mxu0
        %2093 = vmatprep.mubr.bf16.mxu0 0
        %2094 = vmatmul.mubr.bf16.gmra.mrb[0].mxu0 %v1970
        %v2095 = vpop.f32.mrb[0].mxu0
        %v2096 = vadd.f32 0.0, %v2095
        %v2097 = vpop.f32.mrb[0].mxu0
        %v2098 = vpop.f32.mrb[0].mxu0
        %v2099 = vadd.f32 0.0, %v2098
        %v2100 = vpop.f32.mrb[0].mxu0
        %2101 = vmatprep.mubr.bf16.mxu0 0
        %2102 = vmatmul.mubr.bf16.gmra.mrb[0].mxu0 %v1973
        %v2103 = vpop.f32.mrb[0].mxu0
        %v2104 = vadd.f32 0.0, %v2103
        %v2105 = vpop.f32.mrb[0].mxu0
        %v2106 = vpop.f32.mrb[0].mxu0
        %v2107 = vadd.f32 0.0, %v2106
        %v2108 = vpop.f32.mrb[0].mxu0
        %2109 = vmatprep.mubr.bf16.mxu0 0
        %2110 = vmatmul.mubr.bf16.gmra.mrb[0].mxu0 %v1976
        %v2111 = vpop.f32.mrb[0].mxu0
        %v2112 = vadd.f32 0.0, %v2111
        %v2113 = vpop.f32.mrb[0].mxu0
        %v2114 = vpop.f32.mrb[0].mxu0
        %v2115 = vadd.f32 0.0, %v2114
        %v2116 = vpop.f32.mrb[0].mxu0
        %2117 = vmatprep.mubr.bf16.mxu0 0
        %2118 = vmatmul.mubr.bf16.gmra.mrb[0].mxu0 %v1979
        %v2119 = vpop.f32.mrb[0].mxu0
        %v2120 = vadd.f32 0.0, %v2119
        %v2121 = vpop.f32.mrb[0].mxu0
        %v2122 = vpop.f32.mrb[0].mxu0
        %v2123 = vadd.f32 0.0, %v2122
        %v2124 = vpop.f32.mrb[0].mxu0
        %2125 = vmatprep.mubr.bf16.mxu0 0
        %2126 = vmatmul.mubr.bf16.gmra.mrb[0].mxu0 %v1982
        %v2127 = vpop.f32.mrb[0].mxu0
        %v2128 = vadd.f32 0.0, %v2127
        %v2129 = vpop.f32.mrb[0].mxu0
        %v2130 = vpop.f32.mrb[0].mxu0
        %v2131 = vadd.f32 0.0, %v2130
        %v2132 = vpop.f32.mrb[0].mxu0
        %2133 = vmatprep.mubr.bf16.mxu0 0
        %2134 = vmatmul.mubr.bf16.gmra.mrb[0].mxu0 %v1985
        %v2135 = vpop.f32.mrb[0].mxu0
        %v2136 = vadd.f32 0.0, %v2135
        %v2137 = vpop.f32.mrb[0].mxu0
        %v2138 = vpop.f32.mrb[0].mxu0
        %v2139 = vadd.f32 0.0, %v2138
        %v2140 = vpop.f32.mrb[0].mxu0
        %2141 = vmatprep.mubr.bf16.mxu0 0
        %2142 = vmatmul.mubr.bf16.gmra.mrb[0].mxu0 %v1988
        %v2143 = vpop.f32.mrb[0].mxu0
        %v2144 = vadd.f32 0.0, %v2143
        %v2145 = vpop.f32.mrb[0].mxu0
        %v2146 = vpop.f32.mrb[0].mxu0
        %v2147 = vadd.f32 0.0, %v2146
        %v2148 = vpop.f32.mrb[0].mxu0
        %2149 = vmatprep.mubr.bf16.mxu0 0
        %2150 = vmatmul.mubr.bf16.gmra.mrb[0].mxu0 %v1991
        %v2151 = vpop.f32.mrb[0].mxu0
        %v2152 = vadd.f32 0.0, %v2151
        %v2153 = vpop.f32.mrb[0].mxu0
        %v2154 = vpop.f32.mrb[0].mxu0
        %v2155 = vadd.f32 0.0, %v2154
        %v2156 = vpop.f32.mrb[0].mxu0
        %2157 = vdwg.mxu0
        %v2158 = vld [vmem:[#allocation12] sm:$0xff]
        %v2159 = vld [vmem:[#allocation12 + $0x8] sm:$0xff]
        %v2160 = vld [vmem:[#allocation12 + $0x10] sm:$0xff]
        %v2161 = vld [vmem:[#allocation12 + $0x18] sm:$0xff]
        %v2162 = vld [vmem:[#allocation12 + $0x20] sm:$0xff]
        %v2163 = vld [vmem:[#allocation12 + $0x28] sm:$0xff]
        %v2164 = vld [vmem:[#allocation12 + $0x30] sm:$0xff]
        %v2165 = vld [vmem:[#allocation12 + $0x38] sm:$0xff]
        %v2166 = vld [vmem:[#allocation12 + $0x40] sm:$0xff]
        %v2167 = vld [vmem:[#allocation12 + $0x48] sm:$0xff]
        %v2168 = vld [vmem:[#allocation12 + $0x50] sm:$0xff]
        %v2169 = vld [vmem:[#allocation12 + $0x58] sm:$0xff]
        %v2170 = vld [vmem:[#allocation12 + $0x60] sm:$0xff]
        %v2171 = vld [vmem:[#allocation12 + $0x68] sm:$0xff]
        %v2172 = vld [vmem:[#allocation12 + $0x70] sm:$0xff]
        %v2173 = vld [vmem:[#allocation12 + $0x78] sm:$0xff]
        %v2174 = vld [vmem:[#allocation12 + $0x80] sm:$0xff]
        %v2175 = vld [vmem:[#allocation12 + $0x88] sm:$0xff]
        %v2176 = vld [vmem:[#allocation12 + $0x90] sm:$0xff]
        %v2177 = vld [vmem:[#allocation12 + $0x98] sm:$0xff]
        %v2178 = vld [vmem:[#allocation12 + $0xa0] sm:$0xff]
        %v2179 = vld [vmem:[#allocation12 + $0xa8] sm:$0xff]
        %v2180 = vld [vmem:[#allocation12 + $0xb0] sm:$0xff]
        %v2181 = vld [vmem:[#allocation12 + $0xb8] sm:$0xff]
        %v2182 = vld [vmem:[#allocation12 + $0xc0] sm:$0xff]
        %v2183 = vld [vmem:[#allocation12 + $0xc8] sm:$0xff]
        %v2184 = vld [vmem:[#allocation12 + $0xd0] sm:$0xff]
        %v2185 = vld [vmem:[#allocation12 + $0xd8] sm:$0xff]
        %v2186 = vld [vmem:[#allocation12 + $0xe0] sm:$0xff]
        %v2187 = vld [vmem:[#allocation12 + $0xe8] sm:$0xff]
        %v2188 = vld [vmem:[#allocation12 + $0xf0] sm:$0xff]
        %v2189 = vld [vmem:[#allocation12 + $0xf8] sm:$0xff]
        %v2190 = vadd.f32 %v2032, %v2158
        %v2191 = vadd.f32 %v2035, %v2159
        %v2192 = vadd.f32 %v2040, %v2160
        %v2193 = vadd.f32 %v2043, %v2161
        %v2194 = vadd.f32 %v2048, %v2162
        %v2195 = vadd.f32 %v2051, %v2163
        %v2196 = vadd.f32 %v2056, %v2164
        %v2197 = vadd.f32 %v2059, %v2165
        %v2198 = vadd.f32 %v2064, %v2166
        %v2199 = vadd.f32 %v2067, %v2167
        %v2200 = vadd.f32 %v2072, %v2168
        %v2201 = vadd.f32 %v2075, %v2169
        %v2202 = vadd.f32 %v2080, %v2170
        %v2203 = vadd.f32 %v2083, %v2171
        %v2204 = vadd.f32 %v2088, %v2172
        %v2205 = vadd.f32 %v2091, %v2173
        %v2206 = vadd.f32 %v2096, %v2174
        %v2207 = vadd.f32 %v2099, %v2175
        %v2208 = vadd.f32 %v2104, %v2176
        %v2209 = vadd.f32 %v2107, %v2177
        %v2210 = vadd.f32 %v2112, %v2178
        %v2211 = vadd.f32 %v2115, %v2179
        %v2212 = vadd.f32 %v2120, %v2180
        %v2213 = vadd.f32 %v2123, %v2181
        %v2214 = vadd.f32 %v2128, %v2182
        %v2215 = vadd.f32 %v2131, %v2183
        %v2216 = vadd.f32 %v2136, %v2184
        %v2217 = vadd.f32 %v2139, %v2185
        %v2218 = vadd.f32 %v2144, %v2186
        %v2219 = vadd.f32 %v2147, %v2187
        %v2220 = vadd.f32 %v2152, %v2188
        %v2221 = vadd.f32 %v2155, %v2189
        %v2222 = vsel %vm366, %v2190, 0.0
        %v2223 = vsel %vm366, %v2191, 0.0
        %v2224 = vadd.f32 %v2222, %v2223
        %v2225 = vsel %vm366, %v2192, 0.0
        %v2226 = vadd.f32 %v2224, %v2225
        %v2227 = vsel %vm366, %v2193, 0.0
        %v2228 = vadd.f32 %v2226, %v2227
        %v2229 = vsel %vm366, %v2194, 0.0
        %v2230 = vadd.f32 %v2228, %v2229
        %v2231 = vsel %vm366, %v2195, 0.0
        %v2232 = vadd.f32 %v2230, %v2231
        %v2233 = vsel %vm366, %v2196, 0.0
        %v2234 = vadd.f32 %v2232, %v2233
        %v2235 = vsel %vm366, %v2197, 0.0
        %v2236 = vadd.f32 %v2234, %v2235
        %v2237 = vsel %vm366, %v2198, 0.0
        %v2238 = vadd.f32 %v2236, %v2237
        %v2239 = vsel %vm366, %v2199, 0.0
        %v2240 = vadd.f32 %v2238, %v2239
        %v2241 = vsel %vm366, %v2200, 0.0
        %v2242 = vadd.f32 %v2240, %v2241
        %v2243 = vsel %vm366, %v2201, 0.0
        %v2244 = vadd.f32 %v2242, %v2243
        %v2245 = vsel %vm366, %v2202, 0.0
        %v2246 = vadd.f32 %v2244, %v2245
        %v2247 = vsel %vm366, %v2203, 0.0
        %v2248 = vadd.f32 %v2246, %v2247
        %v2249 = vsel %vm366, %v2204, 0.0
        %v2250 = vadd.f32 %v2248, %v2249
        %v2251 = vsel %vm366, %v2205, 0.0
        %v2252 = vadd.f32 %v2250, %v2251
        %v2253 = vsel %vm366, %v2206, 0.0
        %v2254 = vadd.f32 %v2252, %v2253
        %v2255 = vsel %vm366, %v2207, 0.0
        %v2256 = vadd.f32 %v2254, %v2255
        %v2257 = vsel %vm366, %v2208, 0.0
        %v2258 = vadd.f32 %v2256, %v2257
        %v2259 = vsel %vm366, %v2209, 0.0
        %v2260 = vadd.f32 %v2258, %v2259
        %v2261 = vsel %vm366, %v2210, 0.0
        %v2262 = vadd.f32 %v2260, %v2261
        %v2263 = vsel %vm366, %v2211, 0.0
        %v2264 = vadd.f32 %v2262, %v2263
        %v2265 = vsel %vm366, %v2212, 0.0
        %v2266 = vadd.f32 %v2264, %v2265
        %v2267 = vsel %vm366, %v2213, 0.0
        %v2268 = vadd.f32 %v2266, %v2267
        %v2269 = vsel %vm366, %v2214, 0.0
        %v2270 = vadd.f32 %v2268, %v2269
        %v2271 = vsel %vm366, %v2215, 0.0
        %v2272 = vadd.f32 %v2270, %v2271
        %v2273 = vsel %vm366, %v2216, 0.0
        %v2274 = vadd.f32 %v2272, %v2273
        %v2275 = vsel %vm366, %v2217, 0.0
        %v2276 = vadd.f32 %v2274, %v2275
        %v2277 = vsel %vm366, %v2218, 0.0
        %v2278 = vadd.f32 %v2276, %v2277
        %v2279 = vsel %vm366, %v2219, 0.0
        %v2280 = vadd.f32 %v2278, %v2279
        %v2281 = vsel %vm366, %v2220, 0.0
        %v2282 = vadd.f32 %v2280, %v2281
        %v2283 = vsel %vm366, %v2221, 0.0
        %v2284 = vadd.f32 %v2282, %v2283
        %v2285 = vrot.slane %v2284, 4
        %v2286 = vadd.f32 %v2284, %v2285
        %v2287 = vrot.slane %v2286, 2
        %v2288 = vadd.f32 %v2286, %v2287
        %v2289 = vrot.slane %v2288, 1
        %v2290 = vadd.f32 %v2288, %v2289
        %v2291 = vadd.f32 %v2290, 0.0
        %v2292 = vmul.f32 %v2190, %v2190
        %v2293 = vmul.f32 %v2191, %v2191
        %v2294 = vmul.f32 %v2192, %v2192
        %v2295 = vmul.f32 %v2193, %v2193
        %v2296 = vmul.f32 %v2194, %v2194
        %v2297 = vmul.f32 %v2195, %v2195
        %v2298 = vmul.f32 %v2196, %v2196
        %v2299 = vmul.f32 %v2197, %v2197
        %v2300 = vmul.f32 %v2198, %v2198
        %v2301 = vmul.f32 %v2199, %v2199
        %v2302 = vmul.f32 %v2200, %v2200
        %v2303 = vmul.f32 %v2201, %v2201
        %v2304 = vmul.f32 %v2202, %v2202
        %v2305 = vmul.f32 %v2203, %v2203
        %v2306 = vmul.f32 %v2204, %v2204
        %v2307 = vmul.f32 %v2205, %v2205
        %v2308 = vmul.f32 %v2206, %v2206
        %v2309 = vmul.f32 %v2207, %v2207
        %v2310 = vmul.f32 %v2208, %v2208
        %v2311 = vmul.f32 %v2209, %v2209
        %v2312 = vmul.f32 %v2210, %v2210
        %v2313 = vmul.f32 %v2211, %v2211
        %v2314 = vmul.f32 %v2212, %v2212
        %v2315 = vmul.f32 %v2213, %v2213
        %v2316 = vmul.f32 %v2214, %v2214
        %v2317 = vmul.f32 %v2215, %v2215
        %v2318 = vmul.f32 %v2216, %v2216
        %v2319 = vmul.f32 %v2217, %v2217
        %v2320 = vmul.f32 %v2218, %v2218
        %v2321 = vmul.f32 %v2219, %v2219
        %v2322 = vmul.f32 %v2220, %v2220
        %v2323 = vmul.f32 %v2221, %v2221
        %v2324 = vsel %vm366, %v2292, 0.0
        %v2325 = vsel %vm366, %v2293, 0.0
        %v2326 = vadd.f32 %v2324, %v2325
        %v2327 = vsel %vm366, %v2294, 0.0
        %v2328 = vadd.f32 %v2326, %v2327
        %v2329 = vsel %vm366, %v2295, 0.0
        %v2330 = vadd.f32 %v2328, %v2329
        %v2331 = vsel %vm366, %v2296, 0.0
        %v2332 = vadd.f32 %v2330, %v2331
        %v2333 = vsel %vm366, %v2297, 0.0
        %v2334 = vadd.f32 %v2332, %v2333
        %v2335 = vsel %vm366, %v2298, 0.0
        %v2336 = vadd.f32 %v2334, %v2335
        %v2337 = vsel %vm366, %v2299, 0.0
        %v2338 = vadd.f32 %v2336, %v2337
        %v2339 = vsel %vm366, %v2300, 0.0
        %v2340 = vadd.f32 %v2338, %v2339
        %v2341 = vsel %vm366, %v2301, 0.0
        %v2342 = vadd.f32 %v2340, %v2341
        %v2343 = vsel %vm366, %v2302, 0.0
        %v2344 = vadd.f32 %v2342, %v2343
        %v2345 = vsel %vm366, %v2303, 0.0
        %v2346 = vadd.f32 %v2344, %v2345
        %v2347 = vsel %vm366, %v2304, 0.0
        %v2348 = vadd.f32 %v2346, %v2347
        %v2349 = vsel %vm366, %v2305, 0.0
        %v2350 = vadd.f32 %v2348, %v2349
        %v2351 = vsel %vm366, %v2306, 0.0
        %v2352 = vadd.f32 %v2350, %v2351
        %v2353 = vsel %vm366, %v2307, 0.0
        %v2354 = vadd.f32 %v2352, %v2353
        %v2355 = vsel %vm366, %v2308, 0.0
        %v2356 = vadd.f32 %v2354, %v2355
        %v2357 = vsel %vm366, %v2309, 0.0
        %v2358 = vadd.f32 %v2356, %v2357
        %v2359 = vsel %vm366, %v2310, 0.0
        %v2360 = vadd.f32 %v2358, %v2359
        %v2361 = vsel %vm366, %v2311, 0.0
        %v2362 = vadd.f32 %v2360, %v2361
        %v2363 = vsel %vm366, %v2312, 0.0
        %v2364 = vadd.f32 %v2362, %v2363
        %v2365 = vsel %vm366, %v2313, 0.0
        %v2366 = vadd.f32 %v2364, %v2365
        %v2367 = vsel %vm366, %v2314, 0.0
        %v2368 = vadd.f32 %v2366, %v2367
        %v2369 = vsel %vm366, %v2315, 0.0
        %v2370 = vadd.f32 %v2368, %v2369
        %v2371 = vsel %vm366, %v2316, 0.0
        %v2372 = vadd.f32 %v2370, %v2371
        %v2373 = vsel %vm366, %v2317, 0.0
        %v2374 = vadd.f32 %v2372, %v2373
        %v2375 = vsel %vm366, %v2318, 0.0
        %v2376 = vadd.f32 %v2374, %v2375
        %v2377 = vsel %vm366, %v2319, 0.0
        %v2378 = vadd.f32 %v2376, %v2377
        %v2379 = vsel %vm366, %v2320, 0.0
        %v2380 = vadd.f32 %v2378, %v2379
        %v2381 = vsel %vm366, %v2321, 0.0
        %v2382 = vadd.f32 %v2380, %v2381
        %v2383 = vsel %vm366, %v2322, 0.0
        %v2384 = vadd.f32 %v2382, %v2383
        %v2385 = vsel %vm366, %v2323, 0.0
        %v2386 = vadd.f32 %v2384, %v2385
        %v2387 = vrot.slane %v2386, 4
        %v2388 = vadd.f32 %v2386, %v2387
        %v2389 = vrot.slane %v2388, 2
        %v2390 = vadd.f32 %v2388, %v2389
        %v2391 = vrot.slane %v2390, 1
        %v2392 = vadd.f32 %v2390, %v2391
        %v2393 = vadd.f32 %v2392, 0.0
        %2394 = vxpose.xlu0.b32.start [1/16] %v2190, 128
        %2395 = vxpose.xlu0.b32.cont [2/16] %v2191, 128
        %2396 = vxpose.xlu0.b32.cont [3/16] %v2192, 128
        %2397 = vxpose.xlu0.b32.cont [4/16] %v2193, 128
        %2398 = vxpose.xlu0.b32.cont [5/16] %v2194, 128
        %2399 = vxpose.xlu0.b32.cont [6/16] %v2195, 128
        %2400 = vxpose.xlu0.b32.cont [7/16] %v2196, 128
        %2401 = vxpose.xlu0.b32.cont [8/16] %v2197, 128
        %2402 = vxpose.xlu0.b32.cont [9/16] %v2198, 128
        %2403 = vxpose.xlu0.b32.cont [10/16] %v2199, 128
        %2404 = vxpose.xlu0.b32.cont [11/16] %v2200, 128
        %2405 = vxpose.xlu0.b32.cont [12/16] %v2201, 128
        %2406 = vxpose.xlu0.b32.cont [13/16] %v2202, 128
        %2407 = vxpose.xlu0.b32.cont [14/16] %v2203, 128
        %2408 = vxpose.xlu0.b32.cont [15/16] %v2204, 128
        %2409 = vxpose.xlu0.b32.end [16/16] %v2205, 128
        %v2410 = vpop.trf.xlu0
        %v2411 = vpop.trf.xlu0
        %v2412 = vpop.trf.xlu0
        %v2413 = vpop.trf.xlu0
        %v2414 = vpop.trf.xlu0
        %v2415 = vpop.trf.xlu0
        %v2416 = vpop.trf.xlu0
        %v2417 = vpop.trf.xlu0
        %v2418 = vpop.trf.xlu0
        %v2419 = vpop.trf.xlu0
        %v2420 = vpop.trf.xlu0
        %v2421 = vpop.trf.xlu0
        %v2422 = vpop.trf.xlu0
        %v2423 = vpop.trf.xlu0
        %v2424 = vpop.trf.xlu0
        %v2425 = vpop.trf.xlu0
        %2426 = vxpose.xlu0.b32.start [1/16] %v2206, 128
        %2427 = vxpose.xlu0.b32.cont [2/16] %v2207, 128
        %2428 = vxpose.xlu0.b32.cont [3/16] %v2208, 128
        %2429 = vxpose.xlu0.b32.cont [4/16] %v2209, 128
        %2430 = vxpose.xlu0.b32.cont [5/16] %v2210, 128
        %2431 = vxpose.xlu0.b32.cont [6/16] %v2211, 128
        %2432 = vxpose.xlu0.b32.cont [7/16] %v2212, 128
        %2433 = vxpose.xlu0.b32.cont [8/16] %v2213, 128
        %2434 = vxpose.xlu0.b32.cont [9/16] %v2214, 128
        %2435 = vxpose.xlu0.b32.cont [10/16] %v2215, 128
        %2436 = vxpose.xlu0.b32.cont [11/16] %v2216, 128
        %2437 = vxpose.xlu0.b32.cont [12/16] %v2217, 128
        %2438 = vxpose.xlu0.b32.cont [13/16] %v2218, 128
        %2439 = vxpose.xlu0.b32.cont [14/16] %v2219, 128
        %2440 = vxpose.xlu0.b32.cont [15/16] %v2220, 128
        %2441 = vxpose.xlu0.b32.end [16/16] %v2221, 128
        %v2442 = vpop.trf.xlu0
        %v2443 = vpop.trf.xlu0
        %v2444 = vpop.trf.xlu0
        %v2445 = vpop.trf.xlu0
        %v2446 = vpop.trf.xlu0
        %v2447 = vpop.trf.xlu0
        %v2448 = vpop.trf.xlu0
        %v2449 = vpop.trf.xlu0
        %v2450 = vpop.trf.xlu0
        %v2451 = vpop.trf.xlu0
        %v2452 = vpop.trf.xlu0
        %v2453 = vpop.trf.xlu0
        %v2454 = vpop.trf.xlu0
        %v2455 = vpop.trf.xlu0
        %v2456 = vpop.trf.xlu0
        %v2457 = vpop.trf.xlu0
        %v2458 = vpack.c.bf16 %v2410, %v2410
        %v2459 = vpack.c.bf16 %v2442, %v2442
        %v2462 = vcombine.low %v2458, %v2459
        %v2464 = vunpack.c.l.s4 1983009808
        %v2465 = vunpack.c.0.s8 %v2464
        %v2466 = vlaneseq
        %v2467 = vshrl.u32 %v2466, 7
        %v2468 = vsub.s32 %v2465, %v2467
        %v2469 = vrot.slane %v2462, %v2468
        %2471 = vst [vmem:[%s352] sm:$0xf] %v2469
        %vm2472 = vcmask 24576
        %2473 = vst.msk [vmem:[%s358] sm:$0x1] %vm2472, %v2291
        %2474 = vst.msk [vmem:[%s364] sm:$0x1] %vm2472, %v2393
        %s2475 = sand.u32 %s148, 1
        %s2476 = scalar_lea.sflag [#allocation6], %s2475
        %s2477 = sand.u32 %s148, 1
        %s2478 = smul.addr %s2477, 4
        %s2479 = scalar_lea.vmem [#allocation13], %s2478
        %s2480 = sand.u32 %s30, 1
        %s2481 = scalar_lea.sflag [#allocation15], %s2480
        %s2482 = sand.u32 %s174, 1
        %s2483 = scalar_lea.vmem [#allocation14], %s2482
        %s2484 = sand.u32 %s30, 1
        %s2485 = scalar_lea.sflag [#allocation15], %s2484
        %s2486 = sand.u32 %s200, 1
        %s2487 = scalar_lea.vmem [#allocation16], %s2486
        // Predicated region
        $region61: #{residual_block.2} parent=39 // pred_check
          %p2488 = pneg %p158
        $region62: #{residual_block.2} parent=39 // pred_check_branch
          %2490 = sbr.rel (%p2488) target = $region64
        $region63: #{residual_block.2} parent=39 // pred_region
          %s2492 = ssub.s32 64, 64
          %2493 = vsyncadd %s2476, %s2492
          %s2494 = smul.addr %s30, 2
          %s2495 = smul.addr %s2494, 32
          %s2496 = scalar_lea.hbm %s5, %s2495
          %s2498 = sshll.u32 %s2479, 4
          %s2499 = int_to_ptr.vmem [resolvable:$true] %s2498
          %2501 = dma.vmem_to_hbm [thread:$0]  %s2499, 64, %s2496, %s2476
        $region64: #{residual_block.2} parent=39 // pred_fallthru
          _
        // Predicated region
        $region65: #{residual_block.2} parent=39 // pred_check
          %p2502 = pneg %p184
        $region66: #{residual_block.2} parent=39 // pred_check_branch
          %2504 = sbr.rel (%p2502) target = $region68
        $region67: #{residual_block.2} parent=39 // pred_region
          %s2506 = ssub.s32 16, 16
          %2507 = vsyncadd %s2481, %s2506
          %s2508 = smul.addr %s30, 16
          %s2509 = scalar_lea.hbm %s6, %s2508
          %s2511 = sshll.u32 %s2483, 4
          %s2512 = int_to_ptr.vmem [resolvable:$true] %s2511
          %2514 = dma.vmem_to_hbm [thread:$0]  %s2512, 16, %s2509, %s2481
        $region68: #{residual_block.2} parent=39 // pred_fallthru
          _
        // Predicated region
        $region69: #{residual_block.2} parent=39 // pred_check
          %p2515 = pneg %p210
        $region70: #{residual_block.2} parent=39 // pred_check_branch
          %2517 = sbr.rel (%p2515) target = $region72
        $region71: #{residual_block.2} parent=39 // pred_region
          %s2519 = ssub.s32 16, 16
          %2520 = vsyncadd %s2485, %s2519
          %s2521 = smul.addr %s30, 16
          %s2522 = scalar_lea.hbm %s7, %s2521
          %s2524 = sshll.u32 %s2487, 4
          %s2525 = int_to_ptr.vmem [resolvable:$true] %s2524
          %2527 = dma.vmem_to_hbm [thread:$0]  %s2525, 16, %s2522, %s2485
        $region72: #{residual_block.2} parent=39 // pred_fallthru
          _
      $region40: #{residual_block.2} parent=5 // pred_fallthru
        _
      %p2528 = scmp.le.s32.totalorder 2, %s25
      // Predicated region
      $region73: #{residual_block.2} parent=5 // pred_check
        %p2529 = pneg %p2528
      $region74: #{residual_block.2} parent=5 // pred_check_branch
        %2531 = sbr.rel (%p2529) target = $region76
      $region75: #{residual_block.2} parent=5 // pred_region
        %s2532 = ssub.s32 %s25, 2
        // Predicated region
        $region77: #{residual_block.2} parent=75 // pred_check
          %p2533 = pneg %p164
        $region78: #{residual_block.2} parent=75 // pred_check_branch
          %2535 = sbr.rel (%p2533) target = $region80
        $region79: #{residual_block.2} parent=75 // pred_region
          %s2536 = sand.u32 %s149, 1
          %s2537 = scalar_lea.sflag [#allocation6], %s2536
          %s2538 = sand.u32 %s149, 1
          %s2539 = smul.addr %s2538, 4
          %s2540 = scalar_lea.vmem [#allocation13], %s2539
          %2541 = dma.done %s2537, 64
        $region80: #{residual_block.2} parent=75 // pred_fallthru
          _
        // Predicated region
        $region81: #{residual_block.2} parent=75 // pred_check
          %p2542 = pneg %p190
        $region82: #{residual_block.2} parent=75 // pred_check_branch
          %2544 = sbr.rel (%p2542) target = $region84
        $region83: #{residual_block.2} parent=75 // pred_region
          %s2545 = sand.u32 %s31, 1
          %s2546 = scalar_lea.sflag [#allocation15], %s2545
          %s2547 = sand.u32 %s175, 1
          %s2548 = scalar_lea.vmem [#allocation14], %s2547
          %2549 = dma.done %s2546, 16
        $region84: #{residual_block.2} parent=75 // pred_fallthru
          _
        // Predicated region
        $region85: #{residual_block.2} parent=75 // pred_check
          %p2550 = pneg %p216
        $region86: #{residual_block.2} parent=75 // pred_check_branch
          %2552 = sbr.rel (%p2550) target = $region88
        $region87: #{residual_block.2} parent=75 // pred_region
          %s2553 = sand.u32 %s31, 1
          %s2554 = scalar_lea.sflag [#allocation15], %s2553
          %s2555 = sand.u32 %s201, 1
          %s2556 = scalar_lea.vmem [#allocation16], %s2555
          %2557 = dma.done %s2554, 16
        $region88: #{residual_block.2} parent=75 // pred_fallthru
          _
      $region76: #{residual_block.2} parent=5 // pred_fallthru
        _
    $region6: #{residual_block.2} parent=1 // loop_footer
      %s29 = sadd.s32 1, %s25
    $region7: #{residual_block.2} parent=1 // loop_footer_branch
      %24 = sbr.rel target = $region3
    $region8: #{residual_block.2} parent=1 // loop_exit
      _
    %2558 = vsyncpa [#allocation5], 1
    %s2559 = scalar_lea.sflag [#allocation5], 1
    %2560 = vsyncpa %s2559, 1
    %2561 = vsyncpa [#allocation8], 1
    %2562 = vsyncpa [#allocation11], 1
    %2563 = vsyncpa [#allocation6], 1
    %s2564 = scalar_lea.sflag [#allocation6], 1
    %2565 = vsyncpa %s2564, 1
    %2566 = vsyncpa [#allocation15], 1
    %s2567 = scalar_lea.sflag [#allocation15], 1
    %2568 = vsyncpa %s2567, 1

</llo_original>
